<compile_context>
chip_gen: v5e
topology: v5e:2x2
jax: 0.10.0
libtpu: 0.0.40
codegen_flags: <defaults>
</compile_context>

<pallas_src>
import functools

import jax
import jax.numpy as jnp
from jax import lax
from jax.experimental import pallas as pl
from jax.experimental.pallas import tpu as pltpu


def _round_up(v, m):
    return (v + m - 1) // m * m


def _pick_tile(dim, max_tile):
    """Largest K tile <= max_tile that divides `dim` (128-multiple when tiled)."""
    if dim <= max_tile:
        return dim
    best = None
    t = 128
    while t <= max_tile:
        if dim % t == 0:
            best = t
        t += 128
    assert best is not None, f"no 128-multiple tile of {dim} <= {max_tile}"
    return best


# ----------------------------------------------------------------------------
# RoI max-pooling kernel (channel-last, lane-dense).
# grid = (C_tiles, RoI); RoI axis innermost so consecutive RoIs with the same
# (sorted) batch index reuse the HBM->VMEM feature-slab DMA.  Bin bounds are
# scalar-prefetched into SMEM; masks AND per-bin validity are built in-kernel.
# ----------------------------------------------------------------------------
def _roi_pool_kernel(bidx_ref, hs_ref, he_ref, ws_ref, we_ref,
                     x_ref, out_ref, *, pooled_size, num_valid):
    del bidx_ref                      # only used inside the index_maps
    P = pooled_size
    r = pl.program_id(1)              # RoI index (inner grid axis)
    base = r * P

    @pl.when(r >= num_valid)          # padded RoI rows -> exact zeros
    def _():
        out_ref[...] = jnp.zeros_like(out_ref)

    @pl.when(r < num_valid)
    def _():
        x = x_ref[0].astype(jnp.float32)      # (H, W, Ct): channels on lanes
        H, W, _ = x.shape
        neg = jnp.finfo(jnp.float32).min

        w_iota = lax.broadcasted_iota(jnp.int32, (1, W, 1), 1)
        h_iota = lax.broadcasted_iota(jnp.int32, (H, 1, 1), 0)

        # Stage 1: masked max over W for each width-bin -> (H, P, Ct).
        cols = []
        for pw in range(P):
            w0 = ws_ref[base + pw]
            w1 = we_ref[base + pw]
            m = (w_iota >= w0) & (w_iota < w1)                    # (1, W, 1)
            cols.append(jnp.max(jnp.where(m, x, neg), axis=1, keepdims=True))
        s1 = jnp.concatenate(cols, axis=1)                        # (H, P, Ct)

        # Stage 2: masked max over H for each height-bin -> (P, P, Ct).
        rows = []
        for ph in range(P):
            h0 = hs_ref[base + ph]
            h1 = he_ref[base + ph]
            m = (h_iota >= h0) & (h_iota < h1)                    # (H, 1, 1)
            rows.append(jnp.max(jnp.where(m, s1, neg), axis=0, keepdims=True))
        pooled = jnp.concatenate(rows, axis=0)                    # (P, P, Ct)

        # Empty bins -> 0 via an in-kernel validity mask built purely from the
        # SMEM scalar bounds (no sentinel threshold on data, no mask DMA).
        ph_iota = lax.broadcasted_iota(jnp.int32, (P, 1, 1), 0)
        pw_iota = lax.broadcasted_iota(jnp.int32, (1, P, 1), 1)
        vh = jnp.zeros((P, 1, 1), jnp.bool_)
        vw = jnp.zeros((1, P, 1), jnp.bool_)
        for p in range(P):
            vh = vh | ((ph_iota == p) & (he_ref[base + p] > hs_ref[base + p]))
            vw = vw | ((pw_iota == p) & (we_ref[base + p] > ws_ref[base + p]))
        pooled = jnp.where(vh & vw, pooled, 0.0)
        out_ref[0] = pooled.astype(out_ref.dtype)


def roi_pool_pallas(x_nhwc, batch_idx, hs, he, ws, we, pooled_size, num_valid,
                    out_dtype=jnp.bfloat16):
    B, H, W, Cp = x_nhwc.shape
    Rp = batch_idx.shape[0]
    P = pooled_size
    Ct = Cp if Cp <= 256 else 256     # channel tile bounds VMEM at large C
    assert Cp % Ct == 0
    Cn = Cp // Ct

    grid_spec = pltpu.PrefetchScalarGridSpec(
        num_scalar_prefetch=5,
        grid=(Cn, Rp),                # RoI axis innermost -> slab-DMA reuse
        in_specs=[
            pl.BlockSpec((1, H, W, Ct),
                         lambda c, r, bi, h0, h1, w0, w1: (bi[r], 0, 0, c)),
        ],
        out_specs=pl.BlockSpec((1, P, P, Ct),
                               lambda c, r, bi, h0, h1, w0, w1: (r, 0, 0, c)),
    )
    return pl.pallas_call(
        functools.partial(_roi_pool_kernel, pooled_size=P, num_valid=num_valid),
        out_shape=jax.ShapeDtypeStruct((Rp, P, P, Cp), out_dtype),
        grid_spec=grid_spec,
        compiler_params=pltpu.CompilerParams(
            # channel-tile axis parallel only; splitting the RoI axis across
            # cores would duplicate the sorted-batch feature-slab DMAs.
            dimension_semantics=("parallel", "arbitrary"),
            vmem_limit_bytes=32 * 1024 * 1024,
        ),
    )(batch_idx, hs, he, ws, we, x_nhwc)


def _roi_bin_bounds(rois_xyxy, spatial_scale, P, H, W):
    """Integer bin bounds with RoIPooling2D semantics (round, +1 width, clamp)."""
    def rnd(v):  # round-half-away-from-zero for positive coords (CUDA round())
        return jnp.floor(v * spatial_scale + 0.5).astype(jnp.int32)

    x1 = rnd(rois_xyxy[:, 0]); y1 = rnd(rois_xyxy[:, 1])
    x2 = rnd(rois_xyxy[:, 2]); y2 = rnd(rois_xyxy[:, 3])
    roi_w = jnp.maximum(x2 - x1 + 1, 1).astype(jnp.float32)
    roi_h = jnp.maximum(y2 - y1 + 1, 1).astype(jnp.float32)
    bin_w = roi_w / P
    bin_h = roi_h / P
    p = jnp.arange(P, dtype=jnp.float32)

    hs = jnp.clip(jnp.floor(p[None] * bin_h[:, None]).astype(jnp.int32) + y1[:, None], 0, H)
    he = jnp.clip(jnp.ceil((p[None] + 1.0) * bin_h[:, None]).astype(jnp.int32) + y1[:, None], 0, H)
    ws = jnp.clip(jnp.floor(p[None] * bin_w[:, None]).astype(jnp.int32) + x1[:, None], 0, W)
    we = jnp.clip(jnp.ceil((p[None] + 1.0) * bin_w[:, None]).astype(jnp.int32) + x1[:, None], 0, W)
    return hs, he, ws, we


# ----------------------------------------------------------------------------
# Tiled linear layer: y = act(x @ W + b), bf16 streaming, f32 VMEM accumulation.
# Grid leads with the N-tile axis (non-degenerate parallel axis for v7x's 2 TCs).
# All operands arrive pre-padded / pre-cast (weights prepared once at init).
# ----------------------------------------------------------------------------
def _linear_kernel(x_ref, w_ref, b_ref, o_ref, acc_ref, *, relu):
    @pl.when(pl.program_id(2) == 0)
    def _():
        acc_ref[...] = jnp.zeros_like(acc_ref)

    acc_ref[...] += jnp.dot(x_ref[...], w_ref[...],
                            preferred_element_type=jnp.float32)

    @pl.when(pl.program_id(2) == pl.num_programs(2) - 1)
    def _():
        out = acc_ref[...] + b_ref[...]
        if relu:
            out = jnp.maximum(out, 0.0)
        o_ref[...] = out.astype(o_ref.dtype)


def linear_pallas(x, w, b, *, relu=False, out_dtype=jnp.bfloat16,
                  tm=128, tn=2048, tk=1024):
    M, K = x.shape
    Kw, N = w.shape
    assert K == Kw and M % tm == 0 and K % tk == 0 and N % tn == 0
    grid = (N // tn, M // tm, K // tk)          # N-tile axis first (see above)
    return pl.pallas_call(
        functools.partial(_linear_kernel, relu=relu),
        out_shape=jax.ShapeDtypeStruct((M, N), out_dtype),
        grid_spec=pltpu.PrefetchScalarGridSpec(
            num_scalar_prefetch=0,
            grid=grid,
            in_specs=[
                pl.BlockSpec((tm, tk), lambda j, i, k: (i, k)),
                pl.BlockSpec((tk, tn), lambda j, i, k: (k, j)),
                pl.BlockSpec((1, tn), lambda j, i, k: (0, j)),
            ],
            out_specs=pl.BlockSpec((tm, tn), lambda j, i, k: (i, j)),
            scratch_shapes=[pltpu.VMEM((tm, tn), jnp.float32)],
        ),
        compiler_params=pltpu.CompilerParams(
            dimension_semantics=("parallel", "parallel", "arbitrary"),
            vmem_limit_bytes=32 * 1024 * 1024,   # fits v5e default<16MiB raise, v7x 64MiB
        ),
    )(x, w, b)


# ----------------------------------------------------------------------------
# Head (Faster R-CNN VGG16 head)
# ----------------------------------------------------------------------------
class HeadPallas:
    HIDDEN = 4096

    def __init__(self, n_class, roi_size, spatial_scale, in_channels, key,
                 tm=128, tn=2048, tk_max=1024):
        self.n_class = n_class
        self.roi_size = roi_size
        self.spatial_scale = spatial_scale
        self.tm, self.tn, self.tk_max = tm, tn, tk_max

        hidden = self.HIDDEN
        P = roi_size
        C = in_channels
        self.in_channels = C
        self.c_pad = _round_up(C, 128)          # pooled channels on the lane axis
        self.kp6 = P * P * self.c_pad           # fc6 K in channel-last flatten order
        self.n_head = n_class * 5               # [cls_loc | score] fused along N
        self.np_head = _round_up(self.n_head, 128)

        k = jax.random.split(key, 4)
        # classifier = Linear(C*P*P,4096)+ReLU+Linear(4096,4096)+ReLU
        # TODO(synk): pretrained VGG16 classifier weights would be loaded here;
        # fc6 rows must get the same channel-last permutation applied below.
        w_fc6 = jax.random.normal(k[0], (C * P * P, hidden), jnp.float32) * 0.01
        w_fc7 = jax.random.normal(k[1], (hidden, hidden), jnp.float32) * 0.01
        # cls_loc: normal(0,0.001); score: normal(0,0.01); biases 0 (normalizer)
        w_loc = jax.random.normal(k[2], (hidden, n_class * 4), jnp.float32) * 0.001
        w_score = jax.random.normal(k[3], (hidden, n_class), jnp.float32) * 0.01

        # fc6: permute rows from PyTorch's (C,P,P) flatten order to the pooled
        # channel-last (P,P,Cpad) order, pad channels, pre-cast to bf16 ONCE.
        w6 = jnp.transpose(w_fc6.reshape(C, P, P, hidden), (1, 2, 0, 3))
        w6 = jnp.pad(w6, ((0, 0), (0, 0), (0, self.c_pad - C), (0, 0)))
        self.w_fc6 = w6.reshape(self.kp6, hidden).astype(jnp.bfloat16)
        self.b_fc6 = jnp.zeros((1, hidden), jnp.float32)
        self.w_fc7 = w_fc7.astype(jnp.bfloat16)
        self.b_fc7 = jnp.zeros((1, hidden), jnp.float32)
        w_head = jnp.concatenate([w_loc, w_score], axis=1)
        self.w_head = jnp.pad(
            w_head, ((0, 0), (0, self.np_head - self.n_head))).astype(jnp.bfloat16)
        self.b_head = jnp.zeros((1, self.np_head), jnp.float32)
        # TODO(synk): int8 (v5e/v6e) / fp8 (v7x) fc6/fc7 weight compression would
        # halve weight HBM traffic; omitted to keep near-f32-reference numerics.

    def __call__(self, x, rois, roi_indices):
        # TODO(synk): numpy->cuda tensor conversions in the PyTorch forward are
        # host-side glue with no TPU equivalent; inputs are already jnp arrays.
        rois = rois.astype(jnp.float32)
        roi_indices = roi_indices.astype(jnp.float32)
        indices_and_rois = jnp.concatenate([roi_indices[:, None], rois], axis=1)
        # rois come in as (y1, x1, y2, x2); permute to (idx, x1, y1, x2, y2)
        xy_indices_and_rois = indices_and_rois[:, jnp.array([0, 2, 1, 4, 3])]

        B, C, H, W = x.shape
        P = self.roi_size
        R = rois.shape[0]
        batch_idx = xy_indices_and_rois[:, 0].astype(jnp.int32)
        hs, he, ws, we = _roi_bin_bounds(
            xy_indices_and_rois[:, 1:], self.spatial_scale, P, H, W)

        # Pad the RoI batch once to the GEMM row tile; padded RoIs get empty
        # bins so the pool writes exact zeros (no garbage rows reach fc6).
        Mp = _round_up(R, self.tm)
        tm = Mp if Mp <= 256 else self.tm   # single M tile => weights stream once
        pad_n = Mp - R

        # Sort RoIs by batch index so consecutive pool-grid steps reuse the
        # HBM->VMEM feature-slab DMA; unsort at the very end (all later ops are
        # per-RoI row-independent).
        order = jnp.argsort(batch_idx, stable=True)
        inv = jnp.argsort(order)
        bidx_s = batch_idx[order]
        bidx_p = jnp.concatenate(
            [bidx_s, jnp.broadcast_to(bidx_s[-1:], (pad_n,))])  # keeps slab reuse

        def _pad_bins(a):
            a = a[order]
            return jnp.concatenate([a, jnp.zeros((pad_n, P), a.dtype)]).reshape(-1)

        hs_p, he_p, ws_p, we_p = map(_pad_bins, (hs, he, ws, we))

        # NCHW -> channel-last bf16 feature map, channels padded to a 128
        # multiple so pooled output / fc6 rows stay 128-lane aligned.
        x_nhwc = jnp.transpose(x, (0, 2, 3, 1)).astype(jnp.bfloat16)
        if self.c_pad > C:
            x_nhwc = jnp.pad(x_nhwc, ((0, 0), (0, 0), (0, 0), (0, self.c_pad - C)))

        pool = roi_pool_pallas(x_nhwc, bidx_p, hs_p, he_p, ws_p, we_p,
                               P, num_valid=R)        # (Mp, P, P, Cpad) bf16
        feat = pool.reshape(Mp, self.kp6)             # free reshape: fc6 layout

        tk6 = _pick_tile(self.kp6, self.tk_max)
        tk7 = _pick_tile(self.HIDDEN, self.tk_max)
        fc6 = linear_pallas(feat, self.w_fc6, self.b_fc6, relu=True,
                            out_dtype=jnp.bfloat16, tm=tm, tn=self.tn, tk=tk6)
        fc7 = linear_pallas(fc6, self.w_fc7, self.b_fc7, relu=True,
                            out_dtype=jnp.bfloat16, tm=tm, tn=self.tn, tk=tk7)
        # Fused loc/score head: single K step, whole (4096 x 128) weight resident.
        head = linear_pallas(fc7, self.w_head, self.b_head, relu=False,
                             out_dtype=jnp.float32, tm=tm,
                             tn=self.np_head, tk=self.HIDDEN)

        head = head[:R, :self.n_head][inv]            # back to input order
        roi_cls_locs = head[:, : self.n_class * 4]
        roi_scores = head[:, self.n_class * 4:]
        return roi_cls_locs, roi_scores


if __name__ == "__main__":
    key = jax.random.PRNGKey(0)
    B, C, H, W = 2, 16, 16, 16
    n_class, roi_size, spatial_scale = 5, 7, 1.0 / 16.0
    R = 6

    ks = jax.random.split(key, 8)
    x = jax.random.normal(ks[0], (B, C, H, W), jnp.float32)

    # rois in original-image coordinates (y1, x1, y2, x2); image side = H/scale = 256
    y1 = jax.random.uniform(ks[1], (R,), minval=0.0, maxval=180.0)
    x1 = jax.random.uniform(ks[2], (R,), minval=0.0, maxval=180.0)
    hh = jax.random.uniform(ks[3], (R,), minval=20.0, maxval=75.0)
    ww = jax.random.uniform(ks[4], (R,), minval=20.0, maxval=75.0)
    rois = jnp.stack([y1, x1,
                      jnp.minimum(y1 + hh, 255.0),
                      jnp.minimum(x1 + ww, 255.0)], axis=1)
    roi_indices = jax.random.randint(ks[5], (R,), 0, B).astype(jnp.float32)

    head = HeadPallas(n_class, roi_size, spatial_scale, in_channels=C, key=ks[6])
    roi_cls_locs, roi_scores = head(x, rois, roi_indices)
    jax.block_until_ready((roi_cls_locs, roi_scores))

    assert roi_cls_locs.shape == (R, n_class * 4)
    assert roi_scores.shape == (R, n_class)
    assert bool(jnp.all(jnp.isfinite(roi_cls_locs)))
    assert bool(jnp.all(jnp.isfinite(roi_scores)))
    print("KERNEL_OK")
</pallas_src>

<mosaic_0001>
module attributes {stable_mosaic.version = 11 : i64} {
  func.func @_roi_pool_kernel(%arg0: i32, %arg1: i32, %arg2: memref<128xi32, #tpu.memory_space<smem>>, %arg3: memref<896xi32, #tpu.memory_space<smem>>, %arg4: memref<896xi32, #tpu.memory_space<smem>>, %arg5: memref<896xi32, #tpu.memory_space<smem>>, %arg6: memref<896xi32, #tpu.memory_space<smem>>, %arg7: memref<1x16x16x128xbf16, #tpu.memory_space<vmem>>, %arg8: memref<1x7x7x128xbf16, #tpu.memory_space<vmem>>) attributes {dimension_semantics = [#tpu.dimension_semantics<parallel>, #tpu.dimension_semantics<arbitrary>], iteration_bounds = array<i64: 1, 128>, scalar_prefetch = 5 : i64, scratch_operands = 0 : i64, tpu.core_type = #tpu.core_type<tc>, window_params = [{transform_indices = @transform_0, window_bounds = array<i64: 1, 16, 16, 128>}, {transform_indices = @transform_1, window_bounds = array<i64: 1, 7, 7, 128>}]} {
    %c7_i32 = arith.constant 7 : i32
    %0 = arith.muli %arg1, %c7_i32 : i32
    %c6_i32 = arith.constant 6 : i32
    %1 = arith.cmpi sge, %arg1, %c6_i32 : i32
    %2 = arith.extui %1 : i1 to i32
    %c0_i32 = arith.constant 0 : i32
    %3 = arith.cmpi ne, %2, %c0_i32 : i32
    scf.if %3 {
      %cst = arith.constant 0.000000e+00 : bf16
      %7 = vector.broadcast %cst : bf16 to vector<1x7x7x128xbf16>
      %c0 = arith.constant 0 : index
      %c0_2 = arith.constant 0 : index
      %c0_3 = arith.constant 0 : index
      %c0_4 = arith.constant 0 : index
      %8 = vector.load %arg8[%c0, %c0_2, %c0_3, %c0_4] : memref<1x7x7x128xbf16, #tpu.memory_space<vmem>>, vector<1x7x7x128xbf16>
      tpu.vector_store %arg8[%c0, %c0_2, %c0_3, %c0_4], %7 {strides = array<i32>} : memref<1x7x7x128xbf16, #tpu.memory_space<vmem>>, vector<1x7x7x128xbf16>,
    } else {
    }
    %c6_i32_0 = arith.constant 6 : i32
    %4 = arith.cmpi slt, %arg1, %c6_i32_0 : i32
    %5 = arith.extui %4 : i1 to i32
    %c0_i32_1 = arith.constant 0 : i32
    %6 = arith.cmpi ne, %5, %c0_i32_1 : i32
    scf.if %6 {
      %c0 = arith.constant 0 : index
      %c0_2 = arith.constant 0 : index
      %c0_3 = arith.constant 0 : index
      %c0_4 = arith.constant 0 : index
      %7 = vector.load %arg7[%c0, %c0_2, %c0_3, %c0_4] : memref<1x16x16x128xbf16, #tpu.memory_space<vmem>>, vector<1x16x16x128xbf16>
      %8 = vector.shape_cast %7 : vector<1x16x16x128xbf16> to vector<16x16x128xbf16>
      %9 = arith.extf %8 : vector<16x16x128xbf16> to vector<16x16x128xf32>
      %10 = tpu.iota {dimensions = array<i32: 1>} : vector<1x16x1xi32>
      %11 = tpu.iota {dimensions = array<i32: 0>} : vector<16x1x1xi32>
      %c0_i32_5 = arith.constant 0 : i32
      %12 = arith.addi %0, %c0_i32_5 : i32
      %13 = arith.index_cast %12 : i32 to index
      %14 = memref.load %arg5[%13] : memref<896xi32, #tpu.memory_space<smem>>
      %c0_i32_6 = arith.constant 0 : i32
      %15 = arith.addi %0, %c0_i32_6 : i32
      %16 = arith.index_cast %15 : i32 to index
      %17 = memref.load %arg6[%16] : memref<896xi32, #tpu.memory_space<smem>>
      %18 = vector.broadcast %14 : i32 to vector<1x16x1xi32>
      %19 = arith.cmpi sge, %10, %18 : vector<1x16x1xi32>
      %20 = vector.broadcast %17 : i32 to vector<1x16x1xi32>
      %21 = arith.cmpi slt, %10, %20 : vector<1x16x1xi32>
      %22 = arith.andi %19, %21 : vector<1x16x1xi1>
      %cst = arith.constant -3.40282347E+38 : f32
      %23 = vector.shape_cast %22 : vector<1x16x1xi1> to vector<1x16x1xi1>
      %24 = vector.broadcast %23 : vector<1x16x1xi1> to vector<16x16x128xi1>
      %25 = vector.broadcast %cst : f32 to vector<16x16x128xf32>
      %26 = arith.select %24, %9, %25 : vector<16x16x128xi1>, vector<16x16x128xf32>
      %cst_7 = arith.constant dense<0xFF800000> : vector<16x128xf32>
      %27 = vector.multi_reduction <maximumf>, %26, %cst_7 [1] : vector<16x16x128xf32> to vector<16x128xf32>
      %28 = vector.shape_cast %27 : vector<16x128xf32> to vector<16x1x128xf32>
      %c1_i32 = arith.constant 1 : i32
      %29 = arith.addi %0, %c1_i32 : i32
      %30 = arith.index_cast %29 : i32 to index
      %31 = memref.load %arg5[%30] : memref<896xi32, #tpu.memory_space<smem>>
      %c1_i32_8 = arith.constant 1 : i32
      %32 = arith.addi %0, %c1_i32_8 : i32
      %33 = arith.index_cast %32 : i32 to index
      %34 = memref.load %arg6[%33] : memref<896xi32, #tpu.memory_space<smem>>
      %35 = vector.broadcast %31 : i32 to vector<1x16x1xi32>
      %36 = arith.cmpi sge, %10, %35 : vector<1x16x1xi32>
      %37 = vector.broadcast %34 : i32 to vector<1x16x1xi32>
      %38 = arith.cmpi slt, %10, %37 : vector<1x16x1xi32>
      %39 = arith.andi %36, %38 : vector<1x16x1xi1>
      %cst_9 = arith.constant -3.40282347E+38 : f32
      %40 = vector.shape_cast %39 : vector<1x16x1xi1> to vector<1x16x1xi1>
      %41 = vector.broadcast %40 : vector<1x16x1xi1> to vector<16x16x128xi1>
      %42 = vector.broadcast %cst_9 : f32 to vector<16x16x128xf32>
      %43 = arith.select %41, %9, %42 : vector<16x16x128xi1>, vector<16x16x128xf32>
      %cst_10 = arith.constant dense<0xFF800000> : vector<16x128xf32>
      %44 = vector.multi_reduction <maximumf>, %43, %cst_10 [1] : vector<16x16x128xf32> to vector<16x128xf32>
      %45 = vector.shape_cast %44 : vector<16x128xf32> to vector<16x1x128xf32>
      %c2_i32 = arith.constant 2 : i32
      %46 = arith.addi %0, %c2_i32 : i32
      %47 = arith.index_cast %46 : i32 to index
      %48 = memref.load %arg5[%47] : memref<896xi32, #tpu.memory_space<smem>>
      %c2_i32_11 = arith.constant 2 : i32
      %49 = arith.addi %0, %c2_i32_11 : i32
      %50 = arith.index_cast %49 : i32 to index
      %51 = memref.load %arg6[%50] : memref<896xi32, #tpu.memory_space<smem>>
      %52 = vector.broadcast %48 : i32 to vector<1x16x1xi32>
      %53 = arith.cmpi sge, %10, %52 : vector<1x16x1xi32>
      %54 = vector.broadcast %51 : i32 to vector<1x16x1xi32>
      %55 = arith.cmpi slt, %10, %54 : vector<1x16x1xi32>
      %56 = arith.andi %53, %55 : vector<1x16x1xi1>
      %cst_12 = arith.constant -3.40282347E+38 : f32
      %57 = vector.shape_cast %56 : vector<1x16x1xi1> to vector<1x16x1xi1>
      %58 = vector.broadcast %57 : vector<1x16x1xi1> to vector<16x16x128xi1>
      %59 = vector.broadcast %cst_12 : f32 to vector<16x16x128xf32>
      %60 = arith.select %58, %9, %59 : vector<16x16x128xi1>, vector<16x16x128xf32>
      %cst_13 = arith.constant dense<0xFF800000> : vector<16x128xf32>
      %61 = vector.multi_reduction <maximumf>, %60, %cst_13 [1] : vector<16x16x128xf32> to vector<16x128xf32>
      %62 = vector.shape_cast %61 : vector<16x128xf32> to vector<16x1x128xf32>
      %c3_i32 = arith.constant 3 : i32
      %63 = arith.addi %0, %c3_i32 : i32
      %64 = arith.index_cast %63 : i32 to index
      %65 = memref.load %arg5[%64] : memref<896xi32, #tpu.memory_space<smem>>
      %c3_i32_14 = arith.constant 3 : i32
      %66 = arith.addi %0, %c3_i32_14 : i32
      %67 = arith.index_cast %66 : i32 to index
      %68 = memref.load %arg6[%67] : memref<896xi32, #tpu.memory_space<smem>>
      %69 = vector.broadcast %65 : i32 to vector<1x16x1xi32>
      %70 = arith.cmpi sge, %10, %69 : vector<1x16x1xi32>
      %71 = vector.broadcast %68 : i32 to vector<1x16x1xi32>
      %72 = arith.cmpi slt, %10, %71 : vector<1x16x1xi32>
      %73 = arith.andi %70, %72 : vector<1x16x1xi1>
      %cst_15 = arith.constant -3.40282347E+38 : f32
      %74 = vector.shape_cast %73 : vector<1x16x1xi1> to vector<1x16x1xi1>
      %75 = vector.broadcast %74 : vector<1x16x1xi1> to vector<16x16x128xi1>
      %76 = vector.broadcast %cst_15 : f32 to vector<16x16x128xf32>
      %77 = arith.select %75, %9, %76 : vector<16x16x128xi1>, vector<16x16x128xf32>
      %cst_16 = arith.constant dense<0xFF800000> : vector<16x128xf32>
      %78 = vector.multi_reduction <maximumf>, %77, %cst_16 [1] : vector<16x16x128xf32> to vector<16x128xf32>
      %79 = vector.shape_cast %78 : vector<16x128xf32> to vector<16x1x128xf32>
      %c4_i32 = arith.constant 4 : i32
      %80 = arith.addi %0, %c4_i32 : i32
      %81 = arith.index_cast %80 : i32 to index
      %82 = memref.load %arg5[%81] : memref<896xi32, #tpu.memory_space<smem>>
      %c4_i32_17 = arith.constant 4 : i32
      %83 = arith.addi %0, %c4_i32_17 : i32
      %84 = arith.index_cast %83 : i32 to index
      %85 = memref.load %arg6[%84] : memref<896xi32, #tpu.memory_space<smem>>
      %86 = vector.broadcast %82 : i32 to vector<1x16x1xi32>
      %87 = arith.cmpi sge, %10, %86 : vector<1x16x1xi32>
      %88 = vector.broadcast %85 : i32 to vector<1x16x1xi32>
      %89 = arith.cmpi slt, %10, %88 : vector<1x16x1xi32>
      %90 = arith.andi %87, %89 : vector<1x16x1xi1>
      %cst_18 = arith.constant -3.40282347E+38 : f32
      %91 = vector.shape_cast %90 : vector<1x16x1xi1> to vector<1x16x1xi1>
      %92 = vector.broadcast %91 : vector<1x16x1xi1> to vector<16x16x128xi1>
      %93 = vector.broadcast %cst_18 : f32 to vector<16x16x128xf32>
      %94 = arith.select %92, %9, %93 : vector<16x16x128xi1>, vector<16x16x128xf32>
      %cst_19 = arith.constant dense<0xFF800000> : vector<16x128xf32>
      %95 = vector.multi_reduction <maximumf>, %94, %cst_19 [1] : vector<16x16x128xf32> to vector<16x128xf32>
      %96 = vector.shape_cast %95 : vector<16x128xf32> to vector<16x1x128xf32>
      %c5_i32 = arith.constant 5 : i32
      %97 = arith.addi %0, %c5_i32 : i32
      %98 = arith.index_cast %97 : i32 to index
      %99 = memref.load %arg5[%98] : memref<896xi32, #tpu.memory_space<smem>>
      %c5_i32_20 = arith.constant 5 : i32
      %100 = arith.addi %0, %c5_i32_20 : i32
      %101 = arith.index_cast %100 : i32 to index
      %102 = memref.load %arg6[%101] : memref<896xi32, #tpu.memory_space<smem>>
      %103 = vector.broadcast %99 : i32 to vector<1x16x1xi32>
      %104 = arith.cmpi sge, %10, %103 : vector<1x16x1xi32>
      %105 = vector.broadcast %102 : i32 to vector<1x16x1xi32>
      %106 = arith.cmpi slt, %10, %105 : vector<1x16x1xi32>
      %107 = arith.andi %104, %106 : vector<1x16x1xi1>
      %cst_21 = arith.constant -3.40282347E+38 : f32
      %108 = vector.shape_cast %107 : vector<1x16x1xi1> to vector<1x16x1xi1>
      %109 = vector.broadcast %108 : vector<1x16x1xi1> to vector<16x16x128xi1>
      %110 = vector.broadcast %cst_21 : f32 to vector<16x16x128xf32>
      %111 = arith.select %109, %9, %110 : vector<16x16x128xi1>, vector<16x16x128xf32>
      %cst_22 = arith.constant dense<0xFF800000> : vector<16x128xf32>
      %112 = vector.multi_reduction <maximumf>, %111, %cst_22 [1] : vector<16x16x128xf32> to vector<16x128xf32>
      %113 = vector.shape_cast %112 : vector<16x128xf32> to vector<16x1x128xf32>
      %c6_i32_23 = arith.constant 6 : i32
      %114 = arith.addi %0, %c6_i32_23 : i32
      %115 = arith.index_cast %114 : i32 to index
      %116 = memref.load %arg5[%115] : memref<896xi32, #tpu.memory_space<smem>>
      %c6_i32_24 = arith.constant 6 : i32
      %117 = arith.addi %0, %c6_i32_24 : i32
      %118 = arith.index_cast %117 : i32 to index
      %119 = memref.load %arg6[%118] : memref<896xi32, #tpu.memory_space<smem>>
      %120 = vector.broadcast %116 : i32 to vector<1x16x1xi32>
      %121 = arith.cmpi sge, %10, %120 : vector<1x16x1xi32>
      %122 = vector.broadcast %119 : i32 to vector<1x16x1xi32>
      %123 = arith.cmpi slt, %10, %122 : vector<1x16x1xi32>
      %124 = arith.andi %121, %123 : vector<1x16x1xi1>
      %cst_25 = arith.constant -3.40282347E+38 : f32
      %125 = vector.shape_cast %124 : vector<1x16x1xi1> to vector<1x16x1xi1>
      %126 = vector.broadcast %125 : vector<1x16x1xi1> to vector<16x16x128xi1>
      %127 = vector.broadcast %cst_25 : f32 to vector<16x16x128xf32>
      %128 = arith.select %126, %9, %127 : vector<16x16x128xi1>, vector<16x16x128xf32>
      %cst_26 = arith.constant dense<0xFF800000> : vector<16x128xf32>
      %129 = vector.multi_reduction <maximumf>, %128, %cst_26 [1] : vector<16x16x128xf32> to vector<16x128xf32>
      %130 = vector.shape_cast %129 : vector<16x128xf32> to vector<16x1x128xf32>
      %131 = tpu.concatenate %28, %45, %62, %79, %96, %113, %130 in 1 : vector<16x1x128xf32>, vector<16x1x128xf32>, vector<16x1x128xf32>, vector<16x1x128xf32>, vector<16x1x128xf32>, vector<16x1x128xf32>, vector<16x1x128xf32> -> vector<16x7x128xf32>
      %c0_i32_27 = arith.constant 0 : i32
      %132 = arith.addi %0, %c0_i32_27 : i32
      %133 = arith.index_cast %132 : i32 to index
      %134 = memref.load %arg3[%133] : memref<896xi32, #tpu.memory_space<smem>>
      %c0_i32_28 = arith.constant 0 : i32
      %135 = arith.addi %0, %c0_i32_28 : i32
      %136 = arith.index_cast %135 : i32 to index
      %137 = memref.load %arg4[%136] : memref<896xi32, #tpu.memory_space<smem>>
      %138 = vector.broadcast %134 : i32 to vector<16x1x1xi32>
      %139 = arith.cmpi sge, %11, %138 : vector<16x1x1xi32>
      %140 = vector.broadcast %137 : i32 to vector<16x1x1xi32>
      %141 = arith.cmpi slt, %11, %140 : vector<16x1x1xi32>
      %142 = arith.andi %139, %141 : vector<16x1x1xi1>
      %cst_29 = arith.constant -3.40282347E+38 : f32
      %143 = vector.shape_cast %142 : vector<16x1x1xi1> to vector<16x1x1xi1>
      %144 = vector.broadcast %143 : vector<16x1x1xi1> to vector<16x7x128xi1>
      %145 = vector.broadcast %cst_29 : f32 to vector<16x7x128xf32>
      %146 = arith.select %144, %131, %145 : vector<16x7x128xi1>, vector<16x7x128xf32>
      %cst_30 = arith.constant dense<0xFF800000> : vector<7x128xf32>
      %147 = vector.multi_reduction <maximumf>, %146, %cst_30 [0] : vector<16x7x128xf32> to vector<7x128xf32>
      %148 = vector.shape_cast %147 : vector<7x128xf32> to vector<1x7x128xf32>
      %c1_i32_31 = arith.constant 1 : i32
      %149 = arith.addi %0, %c1_i32_31 : i32
      %150 = arith.index_cast %149 : i32 to index
      %151 = memref.load %arg3[%150] : memref<896xi32, #tpu.memory_space<smem>>
      %c1_i32_32 = arith.constant 1 : i32
      %152 = arith.addi %0, %c1_i32_32 : i32
      %153 = arith.index_cast %152 : i32 to index
      %154 = memref.load %arg4[%153] : memref<896xi32, #tpu.memory_space<smem>>
      %155 = vector.broadcast %151 : i32 to vector<16x1x1xi32>
      %156 = arith.cmpi sge, %11, %155 : vector<16x1x1xi32>
      %157 = vector.broadcast %154 : i32 to vector<16x1x1xi32>
      %158 = arith.cmpi slt, %11, %157 : vector<16x1x1xi32>
      %159 = arith.andi %156, %158 : vector<16x1x1xi1>
      %cst_33 = arith.constant -3.40282347E+38 : f32
      %160 = vector.shape_cast %159 : vector<16x1x1xi1> to vector<16x1x1xi1>
      %161 = vector.broadcast %160 : vector<16x1x1xi1> to vector<16x7x128xi1>
      %162 = vector.broadcast %cst_33 : f32 to vector<16x7x128xf32>
      %163 = arith.select %161, %131, %162 : vector<16x7x128xi1>, vector<16x7x128xf32>
      %cst_34 = arith.constant dense<0xFF800000> : vector<7x128xf32>
      %164 = vector.multi_reduction <maximumf>, %163, %cst_34 [0] : vector<16x7x128xf32> to vector<7x128xf32>
      %165 = vector.shape_cast %164 : vector<7x128xf32> to vector<1x7x128xf32>
      %c2_i32_35 = arith.constant 2 : i32
      %166 = arith.addi %0, %c2_i32_35 : i32
      %167 = arith.index_cast %166 : i32 to index
      %168 = memref.load %arg3[%167] : memref<896xi32, #tpu.memory_space<smem>>
      %c2_i32_36 = arith.constant 2 : i32
      %169 = arith.addi %0, %c2_i32_36 : i32
      %170 = arith.index_cast %169 : i32 to index
      %171 = memref.load %arg4[%170] : memref<896xi32, #tpu.memory_space<smem>>
      %172 = vector.broadcast %168 : i32 to vector<16x1x1xi32>
      %173 = arith.cmpi sge, %11, %172 : vector<16x1x1xi32>
      %174 = vector.broadcast %171 : i32 to vector<16x1x1xi32>
      %175 = arith.cmpi slt, %11, %174 : vector<16x1x1xi32>
      %176 = arith.andi %173, %175 : vector<16x1x1xi1>
      %cst_37 = arith.constant -3.40282347E+38 : f32
      %177 = vector.shape_cast %176 : vector<16x1x1xi1> to vector<16x1x1xi1>
      %178 = vector.broadcast %177 : vector<16x1x1xi1> to vector<16x7x128xi1>
      %179 = vector.broadcast %cst_37 : f32 to vector<16x7x128xf32>
      %180 = arith.select %178, %131, %179 : vector<16x7x128xi1>, vector<16x7x128xf32>
      %cst_38 = arith.constant dense<0xFF800000> : vector<7x128xf32>
      %181 = vector.multi_reduction <maximumf>, %180, %cst_38 [0] : vector<16x7x128xf32> to vector<7x128xf32>
      %182 = vector.shape_cast %181 : vector<7x128xf32> to vector<1x7x128xf32>
      %c3_i32_39 = arith.constant 3 : i32
      %183 = arith.addi %0, %c3_i32_39 : i32
      %184 = arith.index_cast %183 : i32 to index
      %185 = memref.load %arg3[%184] : memref<896xi32, #tpu.memory_space<smem>>
      %c3_i32_40 = arith.constant 3 : i32
      %186 = arith.addi %0, %c3_i32_40 : i32
      %187 = arith.index_cast %186 : i32 to index
      %188 = memref.load %arg4[%187] : memref<896xi32, #tpu.memory_space<smem>>
      %189 = vector.broadcast %185 : i32 to vector<16x1x1xi32>
      %190 = arith.cmpi sge, %11, %189 : vector<16x1x1xi32>
      %191 = vector.broadcast %188 : i32 to vector<16x1x1xi32>
      %192 = arith.cmpi slt, %11, %191 : vector<16x1x1xi32>
      %193 = arith.andi %190, %192 : vector<16x1x1xi1>
      %cst_41 = arith.constant -3.40282347E+38 : f32
      %194 = vector.shape_cast %193 : vector<16x1x1xi1> to vector<16x1x1xi1>
      %195 = vector.broadcast %194 : vector<16x1x1xi1> to vector<16x7x128xi1>
      %196 = vector.broadcast %cst_41 : f32 to vector<16x7x128xf32>
      %197 = arith.select %195, %131, %196 : vector<16x7x128xi1>, vector<16x7x128xf32>
      %cst_42 = arith.constant dense<0xFF800000> : vector<7x128xf32>
      %198 = vector.multi_reduction <maximumf>, %197, %cst_42 [0] : vector<16x7x128xf32> to vector<7x128xf32>
      %199 = vector.shape_cast %198 : vector<7x128xf32> to vector<1x7x128xf32>
      %c4_i32_43 = arith.constant 4 : i32
      %200 = arith.addi %0, %c4_i32_43 : i32
      %201 = arith.index_cast %200 : i32 to index
      %202 = memref.load %arg3[%201] : memref<896xi32, #tpu.memory_space<smem>>
      %c4_i32_44 = arith.constant 4 : i32
      %203 = arith.addi %0, %c4_i32_44 : i32
      %204 = arith.index_cast %203 : i32 to index
      %205 = memref.load %arg4[%204] : memref<896xi32, #tpu.memory_space<smem>>
      %206 = vector.broadcast %202 : i32 to vector<16x1x1xi32>
      %207 = arith.cmpi sge, %11, %206 : vector<16x1x1xi32>
      %208 = vector.broadcast %205 : i32 to vector<16x1x1xi32>
      %209 = arith.cmpi slt, %11, %208 : vector<16x1x1xi32>
      %210 = arith.andi %207, %209 : vector<16x1x1xi1>
      %cst_45 = arith.constant -3.40282347E+38 : f32
      %211 = vector.shape_cast %210 : vector<16x1x1xi1> to vector<16x1x1xi1>
      %212 = vector.broadcast %211 : vector<16x1x1xi1> to vector<16x7x128xi1>
      %213 = vector.broadcast %cst_45 : f32 to vector<16x7x128xf32>
      %214 = arith.select %212, %131, %213 : vector<16x7x128xi1>, vector<16x7x128xf32>
      %cst_46 = arith.constant dense<0xFF800000> : vector<7x128xf32>
      %215 = vector.multi_reduction <maximumf>, %214, %cst_46 [0] : vector<16x7x128xf32> to vector<7x128xf32>
      %216 = vector.shape_cast %215 : vector<7x128xf32> to vector<1x7x128xf32>
      %c5_i32_47 = arith.constant 5 : i32
      %217 = arith.addi %0, %c5_i32_47 : i32
      %218 = arith.index_cast %217 : i32 to index
      %219 = memref.load %arg3[%218] : memref<896xi32, #tpu.memory_space<smem>>
      %c5_i32_48 = arith.constant 5 : i32
      %220 = arith.addi %0, %c5_i32_48 : i32
      %221 = arith.index_cast %220 : i32 to index
      %222 = memref.load %arg4[%221] : memref<896xi32, #tpu.memory_space<smem>>
      %223 = vector.broadcast %219 : i32 to vector<16x1x1xi32>
      %224 = arith.cmpi sge, %11, %223 : vector<16x1x1xi32>
      %225 = vector.broadcast %222 : i32 to vector<16x1x1xi32>
      %226 = arith.cmpi slt, %11, %225 : vector<16x1x1xi32>
      %227 = arith.andi %224, %226 : vector<16x1x1xi1>
      %cst_49 = arith.constant -3.40282347E+38 : f32
      %228 = vector.shape_cast %227 : vector<16x1x1xi1> to vector<16x1x1xi1>
      %229 = vector.broadcast %228 : vector<16x1x1xi1> to vector<16x7x128xi1>
      %230 = vector.broadcast %cst_49 : f32 to vector<16x7x128xf32>
      %231 = arith.select %229, %131, %230 : vector<16x7x128xi1>, vector<16x7x128xf32>
      %cst_50 = arith.constant dense<0xFF800000> : vector<7x128xf32>
      %232 = vector.multi_reduction <maximumf>, %231, %cst_50 [0] : vector<16x7x128xf32> to vector<7x128xf32>
      %233 = vector.shape_cast %232 : vector<7x128xf32> to vector<1x7x128xf32>
      %c6_i32_51 = arith.constant 6 : i32
      %234 = arith.addi %0, %c6_i32_51 : i32
      %235 = arith.index_cast %234 : i32 to index
      %236 = memref.load %arg3[%235] : memref<896xi32, #tpu.memory_space<smem>>
      %c6_i32_52 = arith.constant 6 : i32
      %237 = arith.addi %0, %c6_i32_52 : i32
      %238 = arith.index_cast %237 : i32 to index
      %239 = memref.load %arg4[%238] : memref<896xi32, #tpu.memory_space<smem>>
      %240 = vector.broadcast %236 : i32 to vector<16x1x1xi32>
      %241 = arith.cmpi sge, %11, %240 : vector<16x1x1xi32>
      %242 = vector.broadcast %239 : i32 to vector<16x1x1xi32>
      %243 = arith.cmpi slt, %11, %242 : vector<16x1x1xi32>
      %244 = arith.andi %241, %243 : vector<16x1x1xi1>
      %cst_53 = arith.constant -3.40282347E+38 : f32
      %245 = vector.shape_cast %244 : vector<16x1x1xi1> to vector<16x1x1xi1>
      %246 = vector.broadcast %245 : vector<16x1x1xi1> to vector<16x7x128xi1>
      %247 = vector.broadcast %cst_53 : f32 to vector<16x7x128xf32>
      %248 = arith.select %246, %131, %247 : vector<16x7x128xi1>, vector<16x7x128xf32>
      %cst_54 = arith.constant dense<0xFF800000> : vector<7x128xf32>
      %249 = vector.multi_reduction <maximumf>, %248, %cst_54 [0] : vector<16x7x128xf32> to vector<7x128xf32>
      %250 = vector.shape_cast %249 : vector<7x128xf32> to vector<1x7x128xf32>
      %251 = tpu.concatenate %148, %165, %182, %199, %216, %233, %250 in 0 : vector<1x7x128xf32>, vector<1x7x128xf32>, vector<1x7x128xf32>, vector<1x7x128xf32>, vector<1x7x128xf32>, vector<1x7x128xf32>, vector<1x7x128xf32> -> vector<7x7x128xf32>
      %252 = tpu.iota {dimensions = array<i32: 0>} : vector<7x1x1xi32>
      %253 = tpu.iota {dimensions = array<i32: 1>} : vector<1x7x1xi32>
      %false = arith.constant false
      %254 = vector.broadcast %false : i1 to vector<7x1x1xi1>
      %false_55 = arith.constant false
      %255 = vector.broadcast %false_55 : i1 to vector<1x7x1xi1>
      %c0_i32_56 = arith.constant 0 : i32
      %256 = vector.broadcast %c0_i32_56 : i32 to vector<7x1x1xi32>
      %257 = arith.cmpi eq, %252, %256 : vector<7x1x1xi32>
      %c0_i32_57 = arith.constant 0 : i32
      %258 = arith.addi %0, %c0_i32_57 : i32
      %259 = arith.index_cast %258 : i32 to index
      %260 = memref.load %arg4[%259] : memref<896xi32, #tpu.memory_space<smem>>
      %c0_i32_58 = arith.constant 0 : i32
      %261 = arith.addi %0, %c0_i32_58 : i32
      %262 = arith.index_cast %261 : i32 to index
      %263 = memref.load %arg3[%262] : memref<896xi32, #tpu.memory_space<smem>>
      %264 = arith.cmpi sgt, %260, %263 : i32
      %265 = vector.broadcast %264 : i1 to vector<7x1x1xi1>
      %266 = arith.andi %257, %265 : vector<7x1x1xi1>
      %267 = arith.ori %254, %266 : vector<7x1x1xi1>
      %c0_i32_59 = arith.constant 0 : i32
      %268 = vector.broadcast %c0_i32_59 : i32 to vector<1x7x1xi32>
      %269 = arith.cmpi eq, %253, %268 : vector<1x7x1xi32>
      %c0_i32_60 = arith.constant 0 : i32
      %270 = arith.addi %0, %c0_i32_60 : i32
      %271 = arith.index_cast %270 : i32 to index
      %272 = memref.load %arg6[%271] : memref<896xi32, #tpu.memory_space<smem>>
      %c0_i32_61 = arith.constant 0 : i32
      %273 = arith.addi %0, %c0_i32_61 : i32
      %274 = arith.index_cast %273 : i32 to index
      %275 = memref.load %arg5[%274] : memref<896xi32, #tpu.memory_space<smem>>
      %276 = arith.cmpi sgt, %272, %275 : i32
      %277 = vector.broadcast %276 : i1 to vector<1x7x1xi1>
      %278 = arith.andi %269, %277 : vector<1x7x1xi1>
      %279 = arith.ori %255, %278 : vector<1x7x1xi1>
      %c1_i32_62 = arith.constant 1 : i32
      %280 = vector.broadcast %c1_i32_62 : i32 to vector<7x1x1xi32>
      %281 = arith.cmpi eq, %252, %280 : vector<7x1x1xi32>
      %c1_i32_63 = arith.constant 1 : i32
      %282 = arith.addi %0, %c1_i32_63 : i32
      %283 = arith.index_cast %282 : i32 to index
      %284 = memref.load %arg4[%283] : memref<896xi32, #tpu.memory_space<smem>>
      %c1_i32_64 = arith.constant 1 : i32
      %285 = arith.addi %0, %c1_i32_64 : i32
      %286 = arith.index_cast %285 : i32 to index
      %287 = memref.load %arg3[%286] : memref<896xi32, #tpu.memory_space<smem>>
      %288 = arith.cmpi sgt, %284, %287 : i32
      %289 = vector.broadcast %288 : i1 to vector<7x1x1xi1>
      %290 = arith.andi %281, %289 : vector<7x1x1xi1>
      %291 = arith.ori %267, %290 : vector<7x1x1xi1>
      %c1_i32_65 = arith.constant 1 : i32
      %292 = vector.broadcast %c1_i32_65 : i32 to vector<1x7x1xi32>
      %293 = arith.cmpi eq, %253, %292 : vector<1x7x1xi32>
      %c1_i32_66 = arith.constant 1 : i32
      %294 = arith.addi %0, %c1_i32_66 : i32
      %295 = arith.index_cast %294 : i32 to index
      %296 = memref.load %arg6[%295] : memref<896xi32, #tpu.memory_space<smem>>
      %c1_i32_67 = arith.constant 1 : i32
      %297 = arith.addi %0, %c1_i32_67 : i32
      %298 = arith.index_cast %297 : i32 to index
      %299 = memref.load %arg5[%298] : memref<896xi32, #tpu.memory_space<smem>>
      %300 = arith.cmpi sgt, %296, %299 : i32
      %301 = vector.broadcast %300 : i1 to vector<1x7x1xi1>
      %302 = arith.andi %293, %301 : vector<1x7x1xi1>
      %303 = arith.ori %279, %302 : vector<1x7x1xi1>
      %c2_i32_68 = arith.constant 2 : i32
      %304 = vector.broadcast %c2_i32_68 : i32 to vector<7x1x1xi32>
      %305 = arith.cmpi eq, %252, %304 : vector<7x1x1xi32>
      %c2_i32_69 = arith.constant 2 : i32
      %306 = arith.addi %0, %c2_i32_69 : i32
      %307 = arith.index_cast %306 : i32 to index
      %308 = memref.load %arg4[%307] : memref<896xi32, #tpu.memory_space<smem>>
      %c2_i32_70 = arith.constant 2 : i32
      %309 = arith.addi %0, %c2_i32_70 : i32
      %310 = arith.index_cast %309 : i32 to index
      %311 = memref.load %arg3[%310] : memref<896xi32, #tpu.memory_space<smem>>
      %312 = arith.cmpi sgt, %308, %311 : i32
      %313 = vector.broadcast %312 : i1 to vector<7x1x1xi1>
      %314 = arith.andi %305, %313 : vector<7x1x1xi1>
      %315 = arith.ori %291, %314 : vector<7x1x1xi1>
      %c2_i32_71 = arith.constant 2 : i32
      %316 = vector.broadcast %c2_i32_71 : i32 to vector<1x7x1xi32>
      %317 = arith.cmpi eq, %253, %316 : vector<1x7x1xi32>
      %c2_i32_72 = arith.constant 2 : i32
      %318 = arith.addi %0, %c2_i32_72 : i32
      %319 = arith.index_cast %318 : i32 to index
      %320 = memref.load %arg6[%319] : memref<896xi32, #tpu.memory_space<smem>>
      %c2_i32_73 = arith.constant 2 : i32
      %321 = arith.addi %0, %c2_i32_73 : i32
      %322 = arith.index_cast %321 : i32 to index
      %323 = memref.load %arg5[%322] : memref<896xi32, #tpu.memory_space<smem>>
      %324 = arith.cmpi sgt, %320, %323 : i32
      %325 = vector.broadcast %324 : i1 to vector<1x7x1xi1>
      %326 = arith.andi %317, %325 : vector<1x7x1xi1>
      %327 = arith.ori %303, %326 : vector<1x7x1xi1>
      %c3_i32_74 = arith.constant 3 : i32
      %328 = vector.broadcast %c3_i32_74 : i32 to vector<7x1x1xi32>
      %329 = arith.cmpi eq, %252, %328 : vector<7x1x1xi32>
      %c3_i32_75 = arith.constant 3 : i32
      %330 = arith.addi %0, %c3_i32_75 : i32
      %331 = arith.index_cast %330 : i32 to index
      %332 = memref.load %arg4[%331] : memref<896xi32, #tpu.memory_space<smem>>
      %c3_i32_76 = arith.constant 3 : i32
      %333 = arith.addi %0, %c3_i32_76 : i32
      %334 = arith.index_cast %333 : i32 to index
      %335 = memref.load %arg3[%334] : memref<896xi32, #tpu.memory_space<smem>>
      %336 = arith.cmpi sgt, %332, %335 : i32
      %337 = vector.broadcast %336 : i1 to vector<7x1x1xi1>
      %338 = arith.andi %329, %337 : vector<7x1x1xi1>
      %339 = arith.ori %315, %338 : vector<7x1x1xi1>
      %c3_i32_77 = arith.constant 3 : i32
      %340 = vector.broadcast %c3_i32_77 : i32 to vector<1x7x1xi32>
      %341 = arith.cmpi eq, %253, %340 : vector<1x7x1xi32>
      %c3_i32_78 = arith.constant 3 : i32
      %342 = arith.addi %0, %c3_i32_78 : i32
      %343 = arith.index_cast %342 : i32 to index
      %344 = memref.load %arg6[%343] : memref<896xi32, #tpu.memory_space<smem>>
      %c3_i32_79 = arith.constant 3 : i32
      %345 = arith.addi %0, %c3_i32_79 : i32
      %346 = arith.index_cast %345 : i32 to index
      %347 = memref.load %arg5[%346] : memref<896xi32, #tpu.memory_space<smem>>
      %348 = arith.cmpi sgt, %344, %347 : i32
      %349 = vector.broadcast %348 : i1 to vector<1x7x1xi1>
      %350 = arith.andi %341, %349 : vector<1x7x1xi1>
      %351 = arith.ori %327, %350 : vector<1x7x1xi1>
      %c4_i32_80 = arith.constant 4 : i32
      %352 = vector.broadcast %c4_i32_80 : i32 to vector<7x1x1xi32>
      %353 = arith.cmpi eq, %252, %352 : vector<7x1x1xi32>
      %c4_i32_81 = arith.constant 4 : i32
      %354 = arith.addi %0, %c4_i32_81 : i32
      %355 = arith.index_cast %354 : i32 to index
      %356 = memref.load %arg4[%355] : memref<896xi32, #tpu.memory_space<smem>>
      %c4_i32_82 = arith.constant 4 : i32
      %357 = arith.addi %0, %c4_i32_82 : i32
      %358 = arith.index_cast %357 : i32 to index
      %359 = memref.load %arg3[%358] : memref<896xi32, #tpu.memory_space<smem>>
      %360 = arith.cmpi sgt, %356, %359 : i32
      %361 = vector.broadcast %360 : i1 to vector<7x1x1xi1>
      %362 = arith.andi %353, %361 : vector<7x1x1xi1>
      %363 = arith.ori %339, %362 : vector<7x1x1xi1>
      %c4_i32_83 = arith.constant 4 : i32
      %364 = vector.broadcast %c4_i32_83 : i32 to vector<1x7x1xi32>
      %365 = arith.cmpi eq, %253, %364 : vector<1x7x1xi32>
      %c4_i32_84 = arith.constant 4 : i32
      %366 = arith.addi %0, %c4_i32_84 : i32
      %367 = arith.index_cast %366 : i32 to index
      %368 = memref.load %arg6[%367] : memref<896xi32, #tpu.memory_space<smem>>
      %c4_i32_85 = arith.constant 4 : i32
      %369 = arith.addi %0, %c4_i32_85 : i32
      %370 = arith.index_cast %369 : i32 to index
      %371 = memref.load %arg5[%370] : memref<896xi32, #tpu.memory_space<smem>>
      %372 = arith.cmpi sgt, %368, %371 : i32
      %373 = vector.broadcast %372 : i1 to vector<1x7x1xi1>
      %374 = arith.andi %365, %373 : vector<1x7x1xi1>
      %375 = arith.ori %351, %374 : vector<1x7x1xi1>
      %c5_i32_86 = arith.constant 5 : i32
      %376 = vector.broadcast %c5_i32_86 : i32 to vector<7x1x1xi32>
      %377 = arith.cmpi eq, %252, %376 : vector<7x1x1xi32>
      %c5_i32_87 = arith.constant 5 : i32
      %378 = arith.addi %0, %c5_i32_87 : i32
      %379 = arith.index_cast %378 : i32 to index
      %380 = memref.load %arg4[%379] : memref<896xi32, #tpu.memory_space<smem>>
      %c5_i32_88 = arith.constant 5 : i32
      %381 = arith.addi %0, %c5_i32_88 : i32
      %382 = arith.index_cast %381 : i32 to index
      %383 = memref.load %arg3[%382] : memref<896xi32, #tpu.memory_space<smem>>
      %384 = arith.cmpi sgt, %380, %383 : i32
      %385 = vector.broadcast %384 : i1 to vector<7x1x1xi1>
      %386 = arith.andi %377, %385 : vector<7x1x1xi1>
      %387 = arith.ori %363, %386 : vector<7x1x1xi1>
      %c5_i32_89 = arith.constant 5 : i32
      %388 = vector.broadcast %c5_i32_89 : i32 to vector<1x7x1xi32>
      %389 = arith.cmpi eq, %253, %388 : vector<1x7x1xi32>
      %c5_i32_90 = arith.constant 5 : i32
      %390 = arith.addi %0, %c5_i32_90 : i32
      %391 = arith.index_cast %390 : i32 to index
      %392 = memref.load %arg6[%391] : memref<896xi32, #tpu.memory_space<smem>>
      %c5_i32_91 = arith.constant 5 : i32
      %393 = arith.addi %0, %c5_i32_91 : i32
      %394 = arith.index_cast %393 : i32 to index
      %395 = memref.load %arg5[%394] : memref<896xi32, #tpu.memory_space<smem>>
      %396 = arith.cmpi sgt, %392, %395 : i32
      %397 = vector.broadcast %396 : i1 to vector<1x7x1xi1>
      %398 = arith.andi %389, %397 : vector<1x7x1xi1>
      %399 = arith.ori %375, %398 : vector<1x7x1xi1>
      %c6_i32_92 = arith.constant 6 : i32
      %400 = vector.broadcast %c6_i32_92 : i32 to vector<7x1x1xi32>
      %401 = arith.cmpi eq, %252, %400 : vector<7x1x1xi32>
      %c6_i32_93 = arith.constant 6 : i32
      %402 = arith.addi %0, %c6_i32_93 : i32
      %403 = arith.index_cast %402 : i32 to index
      %404 = memref.load %arg4[%403] : memref<896xi32, #tpu.memory_space<smem>>
      %c6_i32_94 = arith.constant 6 : i32
      %405 = arith.addi %0, %c6_i32_94 : i32
      %406 = arith.index_cast %405 : i32 to index
      %407 = memref.load %arg3[%406] : memref<896xi32, #tpu.memory_space<smem>>
      %408 = arith.cmpi sgt, %404, %407 : i32
      %409 = vector.broadcast %408 : i1 to vector<7x1x1xi1>
      %410 = arith.andi %401, %409 : vector<7x1x1xi1>
      %411 = arith.ori %387, %410 : vector<7x1x1xi1>
      %c6_i32_95 = arith.constant 6 : i32
      %412 = vector.broadcast %c6_i32_95 : i32 to vector<1x7x1xi32>
      %413 = arith.cmpi eq, %253, %412 : vector<1x7x1xi32>
      %c6_i32_96 = arith.constant 6 : i32
      %414 = arith.addi %0, %c6_i32_96 : i32
      %415 = arith.index_cast %414 : i32 to index
      %416 = memref.load %arg6[%415] : memref<896xi32, #tpu.memory_space<smem>>
      %c6_i32_97 = arith.constant 6 : i32
      %417 = arith.addi %0, %c6_i32_97 : i32
      %418 = arith.index_cast %417 : i32 to index
      %419 = memref.load %arg5[%418] : memref<896xi32, #tpu.memory_space<smem>>
      %420 = arith.cmpi sgt, %416, %419 : i32
      %421 = vector.broadcast %420 : i1 to vector<1x7x1xi1>
      %422 = arith.andi %413, %421 : vector<1x7x1xi1>
      %423 = arith.ori %399, %422 : vector<1x7x1xi1>
      %424 = vector.broadcast %411 : vector<7x1x1xi1> to vector<7x7x1xi1>
      %425 = vector.broadcast %423 : vector<1x7x1xi1> to vector<7x7x1xi1>
      %426 = arith.andi %424, %425 : vector<7x7x1xi1>
      %cst_98 = arith.constant 0.000000e+00 : f32
      %427 = vector.shape_cast %426 : vector<7x7x1xi1> to vector<7x7x1xi1>
      %428 = vector.broadcast %427 : vector<7x7x1xi1> to vector<7x7x128xi1>
      %429 = vector.broadcast %cst_98 : f32 to vector<7x7x128xf32>
      %430 = arith.select %428, %251, %429 : vector<7x7x128xi1>, vector<7x7x128xf32>
      %431 = arith.truncf %430 : vector<7x7x128xf32> to vector<7x7x128xbf16>
      %c0_99 = arith.constant 0 : index
      %c0_100 = arith.constant 0 : index
      %c0_101 = arith.constant 0 : index
      %c0_102 = arith.constant 0 : index
      %432 = vector.load %arg8[%c0_99, %c0_100, %c0_101, %c0_102] : memref<1x7x7x128xbf16, #tpu.memory_space<vmem>>, vector<1x7x7x128xbf16>
      %433 = vector.shape_cast %432 : vector<1x7x7x128xbf16> to vector<7x7x128xbf16>
      %434 = vector.shape_cast %431 : vector<7x7x128xbf16> to vector<1x7x7x128xbf16>
      tpu.vector_store %arg8[%c0_99, %c0_100, %c0_101, %c0_102], %434 {strides = array<i32>} : memref<1x7x7x128xbf16, #tpu.memory_space<vmem>>, vector<1x7x7x128xbf16>,
    } else {
    }
    return
  }
  func.func @transform_0(%arg0: i32, %arg1: i32, %arg2: memref<128xi32, #tpu.memory_space<smem>>, %arg3: memref<896xi32, #tpu.memory_space<smem>>, %arg4: memref<896xi32, #tpu.memory_space<smem>>, %arg5: memref<896xi32, #tpu.memory_space<smem>>, %arg6: memref<896xi32, #tpu.memory_space<smem>>) -> (i32, i32, i32, i32) {
    %0 = arith.index_cast %arg1 : i32 to index
    %1 = memref.load %arg2[%0] : memref<128xi32, #tpu.memory_space<smem>>
    %c0_i32 = arith.constant 0 : i32
    %c0_i32_0 = arith.constant 0 : i32
    %c0_i32_1 = arith.constant 0 : i32
    return %1, %c0_i32, %c0_i32_0, %arg0 : i32, i32, i32, i32
  }
  func.func @transform_1(%arg0: i32, %arg1: i32, %arg2: memref<128xi32, #tpu.memory_space<smem>>, %arg3: memref<896xi32, #tpu.memory_space<smem>>, %arg4: memref<896xi32, #tpu.memory_space<smem>>, %arg5: memref<896xi32, #tpu.memory_space<smem>>, %arg6: memref<896xi32, #tpu.memory_space<smem>>) -> (i32, i32, i32, i32) {
    %c0_i32 = arith.constant 0 : i32
    %c0_i32_0 = arith.constant 0 : i32
    %c0_i32_1 = arith.constant 0 : i32
    return %arg1, %c0_i32, %c0_i32_0, %arg0 : i32, i32, i32, i32
  }
}

</mosaic_0001>

<llo_original>
// kernel: tpu_custom_call.1
$region0: #{tpu_custom_call.1}
  #allocation0 [shape = 'u32[]', space=smem, size = 0x4, offset = 0x4, fixed_abs, tag = 'smem constant byte address 0x4 - core index']
  #allocation1 [shape = 'u32[72,128]{1,0:T(1,128)}', space=vmem, size = 0x9000, scoped, tag = 'internal scratch']
  #allocation2 [shape = 's32[1]{0}', space=sflag, size = 0x4, scoped, tag = 'scoped memory for tpu_custom_call.1']
  #allocation3 [shape = 'u8[512]{0}', space=smem, size = 0x200, scoped, tag = 'prefetched SMEM operand 0']
  #allocation4 [shape = 'u8[3584]{0}', space=smem, size = 0xe00, scoped, tag = 'prefetched SMEM operand 1']
  #allocation5 [shape = 'u8[3584]{0}', space=smem, size = 0xe00, scoped, tag = 'prefetched SMEM operand 2']
  #allocation6 [shape = 'u8[3584]{0}', space=smem, size = 0xe00, scoped, tag = 'prefetched SMEM operand 3']
  #allocation7 [shape = 'u8[3584]{0}', space=smem, size = 0xe00, scoped, tag = 'prefetched SMEM operand 4']
  %s0 = inlined_call_operand.hbm [shape: s32[128], index: 0, kind: input, shape index: {}]
  %s1 = inlined_call_operand.hbm [shape: s32[896], index: 1, kind: input, shape index: {}]
  %s2 = inlined_call_operand.hbm [shape: s32[896], index: 2, kind: input, shape index: {}]
  %s3 = inlined_call_operand.hbm [shape: s32[896], index: 3, kind: input, shape index: {}]
  %s4 = inlined_call_operand.hbm [shape: s32[896], index: 4, kind: input, shape index: {}]
  %s5 = inlined_call_operand.hbm [shape: bf16[2,16,16,128], index: 5, kind: input, shape index: {}]
  %s6 = inlined_call_operand.vmem [shape: bf16[128,7,7,128], index: 6, kind: output, shape index: {}]
  %s7 = sld [smem:[#allocation0]]
  $region49: #{tpu_custom_call.1} parent=0
    _
  %s9 = ssub.s32 1, %s7
  %s10 = scalar_select 0, %s9, %s7
  %s12 = sshll.u32 %s0, 4
  %s13 = int_to_ptr.hbm [resolvable:$true] %s12
  %15 = dma.hbm_to_smem %s13, 16, [#allocation3], [#allocation2]
  %s17 = sshll.u32 %s1, 4
  %s18 = int_to_ptr.hbm [resolvable:$true] %s17
  %20 = dma.hbm_to_smem %s18, 112, [#allocation4], [#allocation2]
  %s22 = sshll.u32 %s2, 4
  %s23 = int_to_ptr.hbm [resolvable:$true] %s22
  %25 = dma.hbm_to_smem %s23, 112, [#allocation5], [#allocation2]
  %s27 = sshll.u32 %s3, 4
  %s28 = int_to_ptr.hbm [resolvable:$true] %s27
  %30 = dma.hbm_to_smem %s28, 112, [#allocation6], [#allocation2]
  %s32 = sshll.u32 %s4, 4
  %s33 = int_to_ptr.hbm [resolvable:$true] %s32
  %35 = dma.hbm_to_smem %s33, 112, [#allocation7], [#allocation2]
  %37 = dma.done [#allocation2], 464
  %38 = sfence
  $region1: #{tpu_custom_call.1} parent=0
    #allocation8 [shape = 'u8[131072]{0}', space=vmem, size = 0x20000, scoped, tag = 'input window, operand 5']
    #allocation9 [shape = 's32[2]{0}', space=sflag, size = 0x8, scoped, tag = 'scoped memory for tpu_custom_call.1']
    %39 = vsyncpa [#allocation9], 0
    %s40 = scalar_lea.sflag [#allocation9], 1
    %41 = vsyncpa %s40, 0
    loop: start=0, step=1, limit=130
    $region2: #{tpu_custom_call.1} parent=1 // loop_pre_header
      _
    $region3: #{tpu_custom_call.1} parent=1 // loop_header
      %s43 = sphi 0, %s47
      %p44 = scmp.ge.s32.totalorder %s43, 130
      %s50 = sphi 0, %s62
      %s51 = sphi 0, %s58
      %s52 = sphi 0, %s50
      %s53 = sphi 0, %s51
      %s54 = sphi 0, %s52
      %s55 = sphi 0, %s53
      %s69 = sphi 0, %s71
      %s72 = sphi 0, %s69
      %s73 = sphi 0, %s72
      %s89 = sphi 0, %s73
      %s97 = sphi 0, %s99
      %s100 = sphi 0, %s97
      %s101 = sphi 0, %s100
      %s117 = sphi 0, %s101
    $region4: #{tpu_custom_call.1} parent=1 // loop_header_branch
      %46 = sbr.rel (%p44) target = $region8
    $region5: #{tpu_custom_call.1} parent=1 // loop_body
      %s48 = ssub.s32 %s43, 1
      %s49 = ssub.s32 %s43, 2
      %s56 = sadd.s32 1, %s51
      %p57 = scmp.ge.s32.totalorder %s56, 128
      %s58 = scalar_select %p57, 0, %s56
      %s59 = sadd.s32 1, %s50
      %s60 = scalar_select %p57, %s59, %s50
      %p61 = scmp.ge.s32.totalorder %s60, 1
      %s62 = scalar_select %p61, 0, %s60
      %s63 = sld [smem:[#allocation3 + %s51]]
      %s64 = sld [smem:[#allocation3 + %s58]]
      %s65 = ssub.s32 %s63, %s64
      %s66 = ssub.s32 %s50, %s62
      %s67 = sor.u32 %s65, %s66
      %p68 = scmp.eq.s32.totalorder %s67, 0
      %s70 = sadd.s32 %s69, 1
      %s71 = scalar_select %p68, %s69, %s70
      %p74 = pneg %p68
      %p75 = scmp.eq.s32.totalorder %s43, 127
      %p76 = por %p74, %p75
      %p77 = scmp.ne.s32.totalorder %s69, %s72
      %p78 = scmp.eq.s32.totalorder %s43, 0
      %p79 = por %p77, %p78
      %p80 = scmp.ne.s32.totalorder %s69, %s72
      %p81 = scmp.eq.s32.totalorder %s48, 127
      %p82 = por %p80, %p81
      %p83 = scmp.ne.s32.totalorder %s72, %s73
      %p84 = scmp.eq.s32.totalorder %s48, 0
      %p85 = por %p83, %p84
      %p86 = scmp.ne.s32.totalorder %s72, %s73
      %p87 = scmp.eq.s32.totalorder %s49, 127
      %p88 = por %p86, %p87
      %p90 = scmp.ne.s32.totalorder %s73, %s89
      %p91 = scmp.eq.s32.totalorder %s49, 0
      %p92 = por %p90, %p91
      %s93 = ssub.s32 %s51, %s58
      %s94 = ssub.s32 %s50, %s62
      %s95 = sor.u32 %s93, %s94
      %p96 = scmp.eq.s32.totalorder %s95, 0
      %s98 = sadd.s32 %s97, 1
      %s99 = scalar_select %p96, %s97, %s98
      %p102 = pneg %p96
      %p103 = scmp.eq.s32.totalorder %s43, 127
      %p104 = por %p102, %p103
      %p105 = scmp.ne.s32.totalorder %s97, %s100
      %p106 = scmp.eq.s32.totalorder %s43, 0
      %p107 = por %p105, %p106
      %p108 = scmp.ne.s32.totalorder %s97, %s100
      %p109 = scmp.eq.s32.totalorder %s48, 127
      %p110 = por %p108, %p109
      %p111 = scmp.ne.s32.totalorder %s100, %s101
      %p112 = scmp.eq.s32.totalorder %s48, 0
      %p113 = por %p111, %p112
      %p114 = scmp.ne.s32.totalorder %s100, %s101
      %p115 = scmp.eq.s32.totalorder %s49, 127
      %p116 = por %p114, %p115
      %p118 = scmp.ne.s32.totalorder %s101, %s117
      %p119 = scmp.eq.s32.totalorder %s49, 0
      %p120 = por %p118, %p119
      %p121 = scmp.le.s32.totalorder 1, %s43
      %p122 = scmp.lt.s32.totalorder %s43, 129
      %p123 = pnand %p121, %p122
      %p124 = pneg %p123
      // Predicated region
      $region9: #{tpu_custom_call.1} parent=5 // pred_check
        _
      $region10: #{tpu_custom_call.1} parent=5 // pred_check_branch
        %126 = sbr.rel (%p123) target = $region12
      $region11: #{tpu_custom_call.1} parent=5 // pred_region
        %s127 = ssub.s32 %s43, 1
      $region12: #{tpu_custom_call.1} parent=5 // pred_fallthru
        _
      %p128 = scmp.lt.s32.totalorder %s43, 128
      // Predicated region
      $region13: #{tpu_custom_call.1} parent=5 // pred_check
        %p129 = pneg %p128
      $region14: #{tpu_custom_call.1} parent=5 // pred_check_branch
        %131 = sbr.rel (%p129) target = $region16
      $region15: #{tpu_custom_call.1} parent=5 // pred_region
        // Predicated region
        $region17: #{tpu_custom_call.1} parent=15 // pred_check
          %p132 = pneg %p79
        $region18: #{tpu_custom_call.1} parent=15 // pred_check_branch
          %134 = sbr.rel (%p132) target = $region20
        $region19: #{tpu_custom_call.1} parent=15 // pred_region
          %s135 = sand.u32 %s69, 1
          %s136 = scalar_lea.sflag [#allocation9], %s135
          %s137 = sand.u32 %s69, 1
          %s138 = smul.addr %s137, 128
          %s139 = scalar_lea.vmem [#allocation8], %s138
          %s140 = sld [smem:[#allocation3 + %s51]]
          %142 = vsyncadd %s136, 0
          %s143 = smul.addr %s140, 32
          %s144 = sadd.s32 %s50, %s143
          %s145 = smul.addr %s144, 4
          %s146 = scalar_lea.hbm %s5, %s145
          %s147 = sshll.u32 %s146, 4
          %s148 = int_to_ptr.hbm [resolvable:$true] %s147
          %s149 = sshll.u32 %s139, 4
          %s150 = int_to_ptr.vmem [resolvable:$true] %s149
          %155 = dma.hbm_to_vmem [thread:$0]  %s148, 2048, %s150, %s136, 64, 64, 4
        $region20: #{tpu_custom_call.1} parent=15 // pred_fallthru
          _
      $region16: #{tpu_custom_call.1} parent=5 // pred_fallthru
        _
      %p156 = scmp.le.s32.totalorder 1, %s43
      %p157 = scmp.lt.s32.totalorder %s43, 129
      %p158 = pnand %p156, %p157
      %p159 = pneg %p158
      // Predicated region
      $region21: #{tpu_custom_call.1} parent=5 // pred_check
        _
      $region22: #{tpu_custom_call.1} parent=5 // pred_check_branch
        %161 = sbr.rel (%p158) target = $region24
      $region23: #{tpu_custom_call.1} parent=5 // pred_region
        %s162 = ssub.s32 %s43, 1
        %s163 = sand.u32 %s72, 1
        %s164 = scalar_lea.sflag [#allocation9], %s163
        %s165 = sand.u32 %s72, 1
        %s166 = smul.addr %s165, 128
        %s167 = scalar_lea.vmem [#allocation8], %s166
        // Predicated region
        $region25: #{tpu_custom_call.1} parent=23 // pred_check
          %p168 = pneg %p85
        $region26: #{tpu_custom_call.1} parent=23 // pred_check_branch
          %170 = sbr.rel (%p168) target = $region28
        $region27: #{tpu_custom_call.1} parent=23 // pred_region
          %172 = dma.done %s164, 2048
        $region28: #{tpu_custom_call.1} parent=23 // pred_fallthru
          _
        %s173 = sand.u32 %s72, 1
        %s174 = scalar_lea.sflag [#allocation9], %s173
        %s175 = sand.u32 %s72, 1
        %s176 = smul.addr %s175, 128
        %s177 = scalar_lea.vmem [#allocation8], %s176
        %p178 = pneg %p85
        %p179 = pneg %p82
        %p180 = pneg %p113
        %p181 = pneg %p110
        %p182 = scmp.lt.s32.totalorder %s53, 127
        %s183 = scalar_select %p182, %s53, 127
        %p184 = scmp.lt.s32.totalorder %s52, 0
        %s185 = scalar_select %p184, %s52, 0
        %s186 = smul.addr %s183, 7
        %s187 = sadd.s32 %s185, %s186
        %s188 = smul.addr %s187, 4
        %s189 = scalar_lea.vmem %s6, %s188
        %s190 = sld [smem:[#allocation3 + %s53]]
        %p191 = scmp.lt.s32.totalorder %s53, 127
        %s192 = scalar_select %p191, %s53, 127
        %p193 = scmp.lt.s32.totalorder %s52, 0
        %s194 = scalar_select %p193, %s52, 0
        %s195 = smul.addr %s192, 7
        %s196 = sadd.s32 %s194, %s195
        %s197 = smul.addr %s196, 4
        %s198 = scalar_lea.vmem %s6, %s197
        %s200 = smul.u32 %s53, 7
        %p201 = scmp.ge.s32.totalorder %s53, 6
        // Predicated region
        $region29: #{tpu_custom_call.1} parent=23 // pred_check
          %p202 = pneg %p201
        $region30: #{tpu_custom_call.1} parent=23 // pred_check_branch
          %204 = sbr.rel (%p202) target = $region32
        $region31: #{tpu_custom_call.1} parent=23 // pred_region
          %vm205 = vcmask 1043456
          %vm206 = vsmask.f32 3328
          %vm207 = vmand %vm205, %vm206
          %v208 = vld [vmem:[%s198] sm:$0xf]
          %v209 = vsel %vm207, 0, %v208
          %210 = vst [vmem:[%s198] sm:$0xf] %v209
          %v211 = vld [vmem:[%s198 + $0x4] sm:$0xf]
          %v212 = vsel %vm207, 0, %v211
          %213 = vst [vmem:[%s198 + $0x4] sm:$0xf] %v212
          %v214 = vld [vmem:[%s198 + $0x8] sm:$0xf]
          %v215 = vsel %vm207, 0, %v214
          %216 = vst [vmem:[%s198 + $0x8] sm:$0xf] %v215
          %v217 = vld [vmem:[%s198 + $0xc] sm:$0xf]
          %v218 = vsel %vm207, 0, %v217
          %219 = vst [vmem:[%s198 + $0xc] sm:$0xf] %v218
          %v220 = vld [vmem:[%s198 + $0x10] sm:$0xf]
          %v221 = vsel %vm207, 0, %v220
          %222 = vst [vmem:[%s198 + $0x10] sm:$0xf] %v221
          %v223 = vld [vmem:[%s198 + $0x14] sm:$0xf]
          %v224 = vsel %vm207, 0, %v223
          %225 = vst [vmem:[%s198 + $0x14] sm:$0xf] %v224
          %v226 = vld [vmem:[%s198 + $0x18] sm:$0xf]
          %v227 = vsel %vm207, 0, %v226
          %228 = vst [vmem:[%s198 + $0x18] sm:$0xf] %v227
        $region32: #{tpu_custom_call.1} parent=23 // pred_fallthru
          _
        %p229 = scmp.lt.s32.totalorder %s53, 6
        // Predicated region
        $region33: #{tpu_custom_call.1} parent=23 // pred_check
          %p230 = pneg %p229
        $region34: #{tpu_custom_call.1} parent=23 // pred_check_branch
          %232 = sbr.rel (%p230) target = $region36
        $region35: #{tpu_custom_call.1} parent=23 // pred_region
          %v233 = vld [vmem:[%s167] sm:$0xf]
          %v234 = vld [vmem:[%s167 + $0x4] sm:$0xf]
          %v235 = vld [vmem:[%s167 + $0x8] sm:$0xf]
          %v236 = vld [vmem:[%s167 + $0xc] sm:$0xf]
          %v237 = vld [vmem:[%s167 + $0x10] sm:$0xf]
          %v238 = vld [vmem:[%s167 + $0x14] sm:$0xf]
          %v239 = vld [vmem:[%s167 + $0x18] sm:$0xf]
          %v240 = vld [vmem:[%s167 + $0x1c] sm:$0xf]
          %v241 = vld [vmem:[%s167 + $0x20] sm:$0xf]
          %v242 = vld [vmem:[%s167 + $0x24] sm:$0xf]
          %v243 = vld [vmem:[%s167 + $0x28] sm:$0xf]
          %v244 = vld [vmem:[%s167 + $0x2c] sm:$0xf]
          %v245 = vld [vmem:[%s167 + $0x30] sm:$0xf]
          %v246 = vld [vmem:[%s167 + $0x34] sm:$0xf]
          %v247 = vld [vmem:[%s167 + $0x38] sm:$0xf]
          %v248 = vld [vmem:[%s167 + $0x3c] sm:$0xf]
          %v249 = vld [vmem:[%s167 + $0x40] sm:$0xf]
          %v250 = vld [vmem:[%s167 + $0x44] sm:$0xf]
          %v251 = vld [vmem:[%s167 + $0x48] sm:$0xf]
          %v252 = vld [vmem:[%s167 + $0x4c] sm:$0xf]
          %v253 = vld [vmem:[%s167 + $0x50] sm:$0xf]
          %v254 = vld [vmem:[%s167 + $0x54] sm:$0xf]
          %v255 = vld [vmem:[%s167 + $0x58] sm:$0xf]
          %v256 = vld [vmem:[%s167 + $0x5c] sm:$0xf]
          %v257 = vld [vmem:[%s167 + $0x60] sm:$0xf]
          %v258 = vld [vmem:[%s167 + $0x64] sm:$0xf]
          %v259 = vld [vmem:[%s167 + $0x68] sm:$0xf]
          %v260 = vld [vmem:[%s167 + $0x6c] sm:$0xf]
          %v261 = vld [vmem:[%s167 + $0x70] sm:$0xf]
          %v262 = vld [vmem:[%s167 + $0x74] sm:$0xf]
          %v263 = vld [vmem:[%s167 + $0x78] sm:$0xf]
          %v264 = vld [vmem:[%s167 + $0x7c] sm:$0xf]
          %v265 = vunpack.c.l.bf16 %v233
          %v266 = vunpack.c.l.bf16 %v234
          %v267 = vunpack.c.l.bf16 %v235
          %v268 = vunpack.c.l.bf16 %v236
          %v269 = vunpack.c.l.bf16 %v237
          %v270 = vunpack.c.l.bf16 %v238
          %v271 = vunpack.c.l.bf16 %v239
          %v272 = vunpack.c.l.bf16 %v240
          %v273 = vunpack.c.l.bf16 %v241
          %v274 = vunpack.c.l.bf16 %v242
          %v275 = vunpack.c.l.bf16 %v243
          %v276 = vunpack.c.l.bf16 %v244
          %v277 = vunpack.c.l.bf16 %v245
          %v278 = vunpack.c.l.bf16 %v246
          %v279 = vunpack.c.l.bf16 %v247
          %v280 = vunpack.c.l.bf16 %v248
          %v281 = vunpack.c.l.bf16 %v249
          %v282 = vunpack.c.l.bf16 %v250
          %v283 = vunpack.c.l.bf16 %v251
          %v284 = vunpack.c.l.bf16 %v252
          %v285 = vunpack.c.l.bf16 %v253
          %v286 = vunpack.c.l.bf16 %v254
          %v287 = vunpack.c.l.bf16 %v255
          %v288 = vunpack.c.l.bf16 %v256
          %v289 = vunpack.c.l.bf16 %v257
          %v290 = vunpack.c.l.bf16 %v258
          %v291 = vunpack.c.l.bf16 %v259
          %v292 = vunpack.c.l.bf16 %v260
          %v293 = vunpack.c.l.bf16 %v261
          %v294 = vunpack.c.l.bf16 %v262
          %v295 = vunpack.c.l.bf16 %v263
          %v296 = vunpack.c.l.bf16 %v264
          %v297 = vlaneseq
          %v298 = vshrl.u32 %v297, 7
          %v299 = vadd.s32 %v298, 8
          %s300 = sld [smem:[#allocation6 + %s200]]
          %s301 = sld [smem:[#allocation7 + %s200]]
          %v302 = vstv %s300
          %vm303 = vcmp.ge.s32.totalorder %v298, %v302
          %vm304 = vcmp.ge.s32.totalorder %v299, %v302
          %v305 = vstv %s301
          %vm306 = vcmp.lt.s32.totalorder %v298, %v305
          %vm307 = vcmp.lt.s32.totalorder %v299, %v305
          %vm308 = vmand %vm303, %vm306
          %vm309 = vmand %vm304, %vm307
          %v310 = vsel %vm308, 1, 0
          %v311 = vsel %vm309, 1, 0
          %vm312 = vcmp.eq.s32.totalorder %v310, 1
          %vm313 = vcmp.eq.s32.totalorder %v311, 1
          %v314 = vsel %vm312, %v265, -3.4028235e+38
          %v315 = vsel %vm313, %v266, -3.4028235e+38
          %v316 = vsel %vm312, %v267, -3.4028235e+38
          %v317 = vsel %vm313, %v268, -3.4028235e+38
          %v318 = vsel %vm312, %v269, -3.4028235e+38
          %v319 = vsel %vm313, %v270, -3.4028235e+38
          %v320 = vsel %vm312, %v271, -3.4028235e+38
          %v321 = vsel %vm313, %v272, -3.4028235e+38
          %v322 = vsel %vm312, %v273, -3.4028235e+38
          %v323 = vsel %vm313, %v274, -3.4028235e+38
          %v324 = vsel %vm312, %v275, -3.4028235e+38
          %v325 = vsel %vm313, %v276, -3.4028235e+38
          %v326 = vsel %vm312, %v277, -3.4028235e+38
          %v327 = vsel %vm313, %v278, -3.4028235e+38
          %v328 = vsel %vm312, %v279, -3.4028235e+38
          %v329 = vsel %vm313, %v280, -3.4028235e+38
          %v330 = vsel %vm312, %v281, -3.4028235e+38
          %v331 = vsel %vm313, %v282, -3.4028235e+38
          %v332 = vsel %vm312, %v283, -3.4028235e+38
          %v333 = vsel %vm313, %v284, -3.4028235e+38
          %v334 = vsel %vm312, %v285, -3.4028235e+38
          %v335 = vsel %vm313, %v286, -3.4028235e+38
          %v336 = vsel %vm312, %v287, -3.4028235e+38
          %v337 = vsel %vm313, %v288, -3.4028235e+38
          %v338 = vsel %vm312, %v289, -3.4028235e+38
          %v339 = vsel %vm313, %v290, -3.4028235e+38
          %v340 = vsel %vm312, %v291, -3.4028235e+38
          %v341 = vsel %vm313, %v292, -3.4028235e+38
          %v342 = vsel %vm312, %v293, -3.4028235e+38
          %v343 = vsel %vm313, %v294, -3.4028235e+38
          %v344 = vsel %vm312, %v295, -3.4028235e+38
          %v345 = vsel %vm313, %v296, -3.4028235e+38
          %v346 = vmax.f32 %v314, %v315
          %v347 = vrot.slane %v346, 4
          %v348 = vmax.f32 %v346, %v347
          %v349 = vrot.slane %v348, 2
          %v350 = vmax.f32 %v348, %v349
          %v351 = vrot.slane %v350, 1
          %v352 = vmax.f32 %v350, %v351
          %v353 = vmax.f32 %v316, %v317
          %v354 = vrot.slane %v353, 4
          %v355 = vmax.f32 %v353, %v354
          %v356 = vrot.slane %v355, 2
          %v357 = vmax.f32 %v355, %v356
          %v358 = vrot.slane %v357, 1
          %v359 = vmax.f32 %v357, %v358
          %v360 = vmax.f32 %v318, %v319
          %v361 = vrot.slane %v360, 4
          %v362 = vmax.f32 %v360, %v361
          %v363 = vrot.slane %v362, 2
          %v364 = vmax.f32 %v362, %v363
          %v365 = vrot.slane %v364, 1
          %v366 = vmax.f32 %v364, %v365
          %v367 = vmax.f32 %v320, %v321
          %v368 = vrot.slane %v367, 4
          %v369 = vmax.f32 %v367, %v368
          %v370 = vrot.slane %v369, 2
          %v371 = vmax.f32 %v369, %v370
          %v372 = vrot.slane %v371, 1
          %v373 = vmax.f32 %v371, %v372
          %v374 = vmax.f32 %v322, %v323
          %v375 = vrot.slane %v374, 4
          %v376 = vmax.f32 %v374, %v375
          %v377 = vrot.slane %v376, 2
          %v378 = vmax.f32 %v376, %v377
          %v379 = vrot.slane %v378, 1
          %v380 = vmax.f32 %v378, %v379
          %v381 = vmax.f32 %v324, %v325
          %v382 = vrot.slane %v381, 4
          %v383 = vmax.f32 %v381, %v382
          %v384 = vrot.slane %v383, 2
          %v385 = vmax.f32 %v383, %v384
          %v386 = vrot.slane %v385, 1
          %v387 = vmax.f32 %v385, %v386
          %v388 = vmax.f32 %v326, %v327
          %v389 = vrot.slane %v388, 4
          %v390 = vmax.f32 %v388, %v389
          %v391 = vrot.slane %v390, 2
          %v392 = vmax.f32 %v390, %v391
          %v393 = vrot.slane %v392, 1
          %v394 = vmax.f32 %v392, %v393
          %v395 = vmax.f32 %v328, %v329
          %v396 = vrot.slane %v395, 4
          %v397 = vmax.f32 %v395, %v396
          %v398 = vrot.slane %v397, 2
          %v399 = vmax.f32 %v397, %v398
          %v400 = vrot.slane %v399, 1
          %v401 = vmax.f32 %v399, %v400
          %v402 = vmax.f32 %v330, %v331
          %v403 = vrot.slane %v402, 4
          %v404 = vmax.f32 %v402, %v403
          %v405 = vrot.slane %v404, 2
          %v406 = vmax.f32 %v404, %v405
          %v407 = vrot.slane %v406, 1
          %v408 = vmax.f32 %v406, %v407
          %v409 = vmax.f32 %v332, %v333
          %v410 = vrot.slane %v409, 4
          %v411 = vmax.f32 %v409, %v410
          %v412 = vrot.slane %v411, 2
          %v413 = vmax.f32 %v411, %v412
          %v414 = vrot.slane %v413, 1
          %v415 = vmax.f32 %v413, %v414
          %v416 = vmax.f32 %v334, %v335
          %v417 = vrot.slane %v416, 4
          %v418 = vmax.f32 %v416, %v417
          %v419 = vrot.slane %v418, 2
          %v420 = vmax.f32 %v418, %v419
          %v421 = vrot.slane %v420, 1
          %v422 = vmax.f32 %v420, %v421
          %v423 = vmax.f32 %v336, %v337
          %v424 = vrot.slane %v423, 4
          %v425 = vmax.f32 %v423, %v424
          %v426 = vrot.slane %v425, 2
          %v427 = vmax.f32 %v425, %v426
          %v428 = vrot.slane %v427, 1
          %v429 = vmax.f32 %v427, %v428
          %v430 = vmax.f32 %v338, %v339
          %v431 = vrot.slane %v430, 4
          %v432 = vmax.f32 %v430, %v431
          %v433 = vrot.slane %v432, 2
          %v434 = vmax.f32 %v432, %v433
          %v435 = vrot.slane %v434, 1
          %v436 = vmax.f32 %v434, %v435
          %v437 = vmax.f32 %v340, %v341
          %v438 = vrot.slane %v437, 4
          %v439 = vmax.f32 %v437, %v438
          %v440 = vrot.slane %v439, 2
          %v441 = vmax.f32 %v439, %v440
          %v442 = vrot.slane %v441, 1
          %v443 = vmax.f32 %v441, %v442
          %v444 = vmax.f32 %v342, %v343
          %v445 = vrot.slane %v444, 4
          %v446 = vmax.f32 %v444, %v445
          %v447 = vrot.slane %v446, 2
          %v448 = vmax.f32 %v446, %v447
          %v449 = vrot.slane %v448, 1
          %v450 = vmax.f32 %v448, %v449
          %v451 = vmax.f32 %v344, %v345
          %v452 = vrot.slane %v451, 4
          %v453 = vmax.f32 %v451, %v452
          %v454 = vrot.slane %v453, 2
          %v455 = vmax.f32 %v453, %v454
          %v456 = vrot.slane %v455, 1
          %v457 = vmax.f32 %v455, %v456
          %s458 = sadd.s32 %s200, 1
          %s459 = sld [smem:[#allocation6 + %s458]]
          %s460 = sld [smem:[#allocation7 + %s458]]
          %v461 = vstv %s459
          %vm462 = vcmp.ge.s32.totalorder %v298, %v461
          %vm463 = vcmp.ge.s32.totalorder %v299, %v461
          %v464 = vstv %s460
          %vm465 = vcmp.lt.s32.totalorder %v298, %v464
          %vm466 = vcmp.lt.s32.totalorder %v299, %v464
          %vm467 = vmand %vm462, %vm465
          %vm468 = vmand %vm463, %vm466
          %v469 = vsel %vm467, 1, 0
          %v470 = vsel %vm468, 1, 0
          %vm471 = vcmp.eq.s32.totalorder %v469, 1
          %vm472 = vcmp.eq.s32.totalorder %v470, 1
          %v473 = vsel %vm471, %v265, -3.4028235e+38
          %v474 = vsel %vm472, %v266, -3.4028235e+38
          %v475 = vsel %vm471, %v267, -3.4028235e+38
          %v476 = vsel %vm472, %v268, -3.4028235e+38
          %v477 = vsel %vm471, %v269, -3.4028235e+38
          %v478 = vsel %vm472, %v270, -3.4028235e+38
          %v479 = vsel %vm471, %v271, -3.4028235e+38
          %v480 = vsel %vm472, %v272, -3.4028235e+38
          %v481 = vsel %vm471, %v273, -3.4028235e+38
          %v482 = vsel %vm472, %v274, -3.4028235e+38
          %v483 = vsel %vm471, %v275, -3.4028235e+38
          %v484 = vsel %vm472, %v276, -3.4028235e+38
          %v485 = vsel %vm471, %v277, -3.4028235e+38
          %v486 = vsel %vm472, %v278, -3.4028235e+38
          %v487 = vsel %vm471, %v279, -3.4028235e+38
          %v488 = vsel %vm472, %v280, -3.4028235e+38
          %v489 = vsel %vm471, %v281, -3.4028235e+38
          %v490 = vsel %vm472, %v282, -3.4028235e+38
          %v491 = vsel %vm471, %v283, -3.4028235e+38
          %v492 = vsel %vm472, %v284, -3.4028235e+38
          %v493 = vsel %vm471, %v285, -3.4028235e+38
          %v494 = vsel %vm472, %v286, -3.4028235e+38
          %v495 = vsel %vm471, %v287, -3.4028235e+38
          %v496 = vsel %vm472, %v288, -3.4028235e+38
          %v497 = vsel %vm471, %v289, -3.4028235e+38
          %v498 = vsel %vm472, %v290, -3.4028235e+38
          %v499 = vsel %vm471, %v291, -3.4028235e+38
          %v500 = vsel %vm472, %v292, -3.4028235e+38
          %v501 = vsel %vm471, %v293, -3.4028235e+38
          %v502 = vsel %vm472, %v294, -3.4028235e+38
          %v503 = vsel %vm471, %v295, -3.4028235e+38
          %v504 = vsel %vm472, %v296, -3.4028235e+38
          %v505 = vmax.f32 %v473, %v474
          %v506 = vrot.slane %v505, 4
          %v507 = vmax.f32 %v505, %v506
          %v508 = vrot.slane %v507, 2
          %v509 = vmax.f32 %v507, %v508
          %v510 = vrot.slane %v509, 1
          %v511 = vmax.f32 %v509, %v510
          %v512 = vmax.f32 %v475, %v476
          %v513 = vrot.slane %v512, 4
          %v514 = vmax.f32 %v512, %v513
          %v515 = vrot.slane %v514, 2
          %v516 = vmax.f32 %v514, %v515
          %v517 = vrot.slane %v516, 1
          %v518 = vmax.f32 %v516, %v517
          %v519 = vmax.f32 %v477, %v478
          %v520 = vrot.slane %v519, 4
          %v521 = vmax.f32 %v519, %v520
          %v522 = vrot.slane %v521, 2
          %v523 = vmax.f32 %v521, %v522
          %v524 = vrot.slane %v523, 1
          %v525 = vmax.f32 %v523, %v524
          %v526 = vmax.f32 %v479, %v480
          %v527 = vrot.slane %v526, 4
          %v528 = vmax.f32 %v526, %v527
          %v529 = vrot.slane %v528, 2
          %v530 = vmax.f32 %v528, %v529
          %v531 = vrot.slane %v530, 1
          %v532 = vmax.f32 %v530, %v531
          %v533 = vmax.f32 %v481, %v482
          %v534 = vrot.slane %v533, 4
          %v535 = vmax.f32 %v533, %v534
          %v536 = vrot.slane %v535, 2
          %v537 = vmax.f32 %v535, %v536
          %v538 = vrot.slane %v537, 1
          %v539 = vmax.f32 %v537, %v538
          %v540 = vmax.f32 %v483, %v484
          %v541 = vrot.slane %v540, 4
          %v542 = vmax.f32 %v540, %v541
          %v543 = vrot.slane %v542, 2
          %v544 = vmax.f32 %v542, %v543
          %v545 = vrot.slane %v544, 1
          %v546 = vmax.f32 %v544, %v545
          %v547 = vmax.f32 %v485, %v486
          %v548 = vrot.slane %v547, 4
          %v549 = vmax.f32 %v547, %v548
          %v550 = vrot.slane %v549, 2
          %v551 = vmax.f32 %v549, %v550
          %v552 = vrot.slane %v551, 1
          %v553 = vmax.f32 %v551, %v552
          %v554 = vmax.f32 %v487, %v488
          %v555 = vrot.slane %v554, 4
          %v556 = vmax.f32 %v554, %v555
          %v557 = vrot.slane %v556, 2
          %v558 = vmax.f32 %v556, %v557
          %v559 = vrot.slane %v558, 1
          %v560 = vmax.f32 %v558, %v559
          %v561 = vmax.f32 %v489, %v490
          %v562 = vrot.slane %v561, 4
          %v563 = vmax.f32 %v561, %v562
          %v564 = vrot.slane %v563, 2
          %v565 = vmax.f32 %v563, %v564
          %v566 = vrot.slane %v565, 1
          %v567 = vmax.f32 %v565, %v566
          %v568 = vmax.f32 %v491, %v492
          %v569 = vrot.slane %v568, 4
          %v570 = vmax.f32 %v568, %v569
          %v571 = vrot.slane %v570, 2
          %v572 = vmax.f32 %v570, %v571
          %v573 = vrot.slane %v572, 1
          %v574 = vmax.f32 %v572, %v573
          %v575 = vmax.f32 %v493, %v494
          %v576 = vrot.slane %v575, 4
          %v577 = vmax.f32 %v575, %v576
          %v578 = vrot.slane %v577, 2
          %v579 = vmax.f32 %v577, %v578
          %v580 = vrot.slane %v579, 1
          %v581 = vmax.f32 %v579, %v580
          %v582 = vmax.f32 %v495, %v496
          %v583 = vrot.slane %v582, 4
          %v584 = vmax.f32 %v582, %v583
          %v585 = vrot.slane %v584, 2
          %v586 = vmax.f32 %v584, %v585
          %v587 = vrot.slane %v586, 1
          %v588 = vmax.f32 %v586, %v587
          %v589 = vmax.f32 %v497, %v498
          %v590 = vrot.slane %v589, 4
          %v591 = vmax.f32 %v589, %v590
          %v592 = vrot.slane %v591, 2
          %v593 = vmax.f32 %v591, %v592
          %v594 = vrot.slane %v593, 1
          %v595 = vmax.f32 %v593, %v594
          %v596 = vmax.f32 %v499, %v500
          %v597 = vrot.slane %v596, 4
          %v598 = vmax.f32 %v596, %v597
          %v599 = vrot.slane %v598, 2
          %v600 = vmax.f32 %v598, %v599
          %v601 = vrot.slane %v600, 1
          %v602 = vmax.f32 %v600, %v601
          %v603 = vmax.f32 %v501, %v502
          %v604 = vrot.slane %v603, 4
          %v605 = vmax.f32 %v603, %v604
          %v606 = vrot.slane %v605, 2
          %v607 = vmax.f32 %v605, %v606
          %v608 = vrot.slane %v607, 1
          %v609 = vmax.f32 %v607, %v608
          %v610 = vmax.f32 %v503, %v504
          %v611 = vrot.slane %v610, 4
          %v612 = vmax.f32 %v610, %v611
          %v613 = vrot.slane %v612, 2
          %v614 = vmax.f32 %v612, %v613
          %v615 = vrot.slane %v614, 1
          %v616 = vmax.f32 %v614, %v615
          %s617 = sadd.s32 %s200, 2
          %s618 = sld [smem:[#allocation6 + %s617]]
          %s619 = sld [smem:[#allocation7 + %s617]]
          %v620 = vstv %s618
          %vm621 = vcmp.ge.s32.totalorder %v298, %v620
          %vm622 = vcmp.ge.s32.totalorder %v299, %v620
          %v623 = vstv %s619
          %vm624 = vcmp.lt.s32.totalorder %v298, %v623
          %vm625 = vcmp.lt.s32.totalorder %v299, %v623
          %vm626 = vmand %vm621, %vm624
          %vm627 = vmand %vm622, %vm625
          %v628 = vsel %vm626, 1, 0
          %v629 = vsel %vm627, 1, 0
          %vm630 = vcmp.eq.s32.totalorder %v628, 1
          %vm631 = vcmp.eq.s32.totalorder %v629, 1
          %v632 = vsel %vm630, %v265, -3.4028235e+38
          %v633 = vsel %vm631, %v266, -3.4028235e+38
          %v634 = vsel %vm630, %v267, -3.4028235e+38
          %v635 = vsel %vm631, %v268, -3.4028235e+38
          %v636 = vsel %vm630, %v269, -3.4028235e+38
          %v637 = vsel %vm631, %v270, -3.4028235e+38
          %v638 = vsel %vm630, %v271, -3.4028235e+38
          %v639 = vsel %vm631, %v272, -3.4028235e+38
          %v640 = vsel %vm630, %v273, -3.4028235e+38
          %v641 = vsel %vm631, %v274, -3.4028235e+38
          %v642 = vsel %vm630, %v275, -3.4028235e+38
          %v643 = vsel %vm631, %v276, -3.4028235e+38
          %v644 = vsel %vm630, %v277, -3.4028235e+38
          %v645 = vsel %vm631, %v278, -3.4028235e+38
          %v646 = vsel %vm630, %v279, -3.4028235e+38
          %v647 = vsel %vm631, %v280, -3.4028235e+38
          %v648 = vsel %vm630, %v281, -3.4028235e+38
          %v649 = vsel %vm631, %v282, -3.4028235e+38
          %v650 = vsel %vm630, %v283, -3.4028235e+38
          %v651 = vsel %vm631, %v284, -3.4028235e+38
          %v652 = vsel %vm630, %v285, -3.4028235e+38
          %v653 = vsel %vm631, %v286, -3.4028235e+38
          %v654 = vsel %vm630, %v287, -3.4028235e+38
          %v655 = vsel %vm631, %v288, -3.4028235e+38
          %v656 = vsel %vm630, %v289, -3.4028235e+38
          %v657 = vsel %vm631, %v290, -3.4028235e+38
          %v658 = vsel %vm630, %v291, -3.4028235e+38
          %v659 = vsel %vm631, %v292, -3.4028235e+38
          %v660 = vsel %vm630, %v293, -3.4028235e+38
          %v661 = vsel %vm631, %v294, -3.4028235e+38
          %v662 = vsel %vm630, %v295, -3.4028235e+38
          %v663 = vsel %vm631, %v296, -3.4028235e+38
          %v664 = vmax.f32 %v632, %v633
          %v665 = vrot.slane %v664, 4
          %v666 = vmax.f32 %v664, %v665
          %v667 = vrot.slane %v666, 2
          %v668 = vmax.f32 %v666, %v667
          %v669 = vrot.slane %v668, 1
          %v670 = vmax.f32 %v668, %v669
          %v671 = vmax.f32 %v634, %v635
          %v672 = vrot.slane %v671, 4
          %v673 = vmax.f32 %v671, %v672
          %v674 = vrot.slane %v673, 2
          %v675 = vmax.f32 %v673, %v674
          %v676 = vrot.slane %v675, 1
          %v677 = vmax.f32 %v675, %v676
          %v678 = vmax.f32 %v636, %v637
          %v679 = vrot.slane %v678, 4
          %v680 = vmax.f32 %v678, %v679
          %v681 = vrot.slane %v680, 2
          %v682 = vmax.f32 %v680, %v681
          %v683 = vrot.slane %v682, 1
          %v684 = vmax.f32 %v682, %v683
          %v685 = vmax.f32 %v638, %v639
          %v686 = vrot.slane %v685, 4
          %v687 = vmax.f32 %v685, %v686
          %v688 = vrot.slane %v687, 2
          %v689 = vmax.f32 %v687, %v688
          %v690 = vrot.slane %v689, 1
          %v691 = vmax.f32 %v689, %v690
          %v692 = vmax.f32 %v640, %v641
          %v693 = vrot.slane %v692, 4
          %v694 = vmax.f32 %v692, %v693
          %v695 = vrot.slane %v694, 2
          %v696 = vmax.f32 %v694, %v695
          %v697 = vrot.slane %v696, 1
          %v698 = vmax.f32 %v696, %v697
          %v699 = vmax.f32 %v642, %v643
          %v700 = vrot.slane %v699, 4
          %v701 = vmax.f32 %v699, %v700
          %v702 = vrot.slane %v701, 2
          %v703 = vmax.f32 %v701, %v702
          %v704 = vrot.slane %v703, 1
          %v705 = vmax.f32 %v703, %v704
          %v706 = vmax.f32 %v644, %v645
          %v707 = vrot.slane %v706, 4
          %v708 = vmax.f32 %v706, %v707
          %v709 = vrot.slane %v708, 2
          %v710 = vmax.f32 %v708, %v709
          %v711 = vrot.slane %v710, 1
          %v712 = vmax.f32 %v710, %v711
          %v713 = vmax.f32 %v646, %v647
          %v714 = vrot.slane %v713, 4
          %v715 = vmax.f32 %v713, %v714
          %v716 = vrot.slane %v715, 2
          %v717 = vmax.f32 %v715, %v716
          %v718 = vrot.slane %v717, 1
          %v719 = vmax.f32 %v717, %v718
          %v720 = vmax.f32 %v648, %v649
          %v721 = vrot.slane %v720, 4
          %v722 = vmax.f32 %v720, %v721
          %v723 = vrot.slane %v722, 2
          %v724 = vmax.f32 %v722, %v723
          %v725 = vrot.slane %v724, 1
          %v726 = vmax.f32 %v724, %v725
          %v727 = vmax.f32 %v650, %v651
          %v728 = vrot.slane %v727, 4
          %v729 = vmax.f32 %v727, %v728
          %v730 = vrot.slane %v729, 2
          %v731 = vmax.f32 %v729, %v730
          %v732 = vrot.slane %v731, 1
          %v733 = vmax.f32 %v731, %v732
          %v734 = vmax.f32 %v652, %v653
          %v735 = vrot.slane %v734, 4
          %v736 = vmax.f32 %v734, %v735
          %v737 = vrot.slane %v736, 2
          %v738 = vmax.f32 %v736, %v737
          %v739 = vrot.slane %v738, 1
          %v740 = vmax.f32 %v738, %v739
          %v741 = vmax.f32 %v654, %v655
          %v742 = vrot.slane %v741, 4
          %v743 = vmax.f32 %v741, %v742
          %v744 = vrot.slane %v743, 2
          %v745 = vmax.f32 %v743, %v744
          %v746 = vrot.slane %v745, 1
          %v747 = vmax.f32 %v745, %v746
          %v748 = vmax.f32 %v656, %v657
          %v749 = vrot.slane %v748, 4
          %v750 = vmax.f32 %v748, %v749
          %v751 = vrot.slane %v750, 2
          %v752 = vmax.f32 %v750, %v751
          %v753 = vrot.slane %v752, 1
          %v754 = vmax.f32 %v752, %v753
          %v755 = vmax.f32 %v658, %v659
          %v756 = vrot.slane %v755, 4
          %v757 = vmax.f32 %v755, %v756
          %v758 = vrot.slane %v757, 2
          %v759 = vmax.f32 %v757, %v758
          %v760 = vrot.slane %v759, 1
          %v761 = vmax.f32 %v759, %v760
          %v762 = vmax.f32 %v660, %v661
          %v763 = vrot.slane %v762, 4
          %v764 = vmax.f32 %v762, %v763
          %v765 = vrot.slane %v764, 2
          %v766 = vmax.f32 %v764, %v765
          %v767 = vrot.slane %v766, 1
          %v768 = vmax.f32 %v766, %v767
          %v769 = vmax.f32 %v662, %v663
          %v770 = vrot.slane %v769, 4
          %v771 = vmax.f32 %v769, %v770
          %v772 = vrot.slane %v771, 2
          %v773 = vmax.f32 %v771, %v772
          %v774 = vrot.slane %v773, 1
          %v775 = vmax.f32 %v773, %v774
          %s776 = sadd.s32 %s200, 3
          %s777 = sld [smem:[#allocation6 + %s776]]
          %s778 = sld [smem:[#allocation7 + %s776]]
          %v779 = vstv %s777
          %vm780 = vcmp.ge.s32.totalorder %v298, %v779
          %vm781 = vcmp.ge.s32.totalorder %v299, %v779
          %v782 = vstv %s778
          %vm783 = vcmp.lt.s32.totalorder %v298, %v782
          %vm784 = vcmp.lt.s32.totalorder %v299, %v782
          %vm785 = vmand %vm780, %vm783
          %vm786 = vmand %vm781, %vm784
          %v787 = vsel %vm785, 1, 0
          %v788 = vsel %vm786, 1, 0
          %vm789 = vcmp.eq.s32.totalorder %v787, 1
          %vm790 = vcmp.eq.s32.totalorder %v788, 1
          %v791 = vsel %vm789, %v265, -3.4028235e+38
          %v792 = vsel %vm790, %v266, -3.4028235e+38
          %v793 = vsel %vm789, %v267, -3.4028235e+38
          %v794 = vsel %vm790, %v268, -3.4028235e+38
          %v795 = vsel %vm789, %v269, -3.4028235e+38
          %v796 = vsel %vm790, %v270, -3.4028235e+38
          %v797 = vsel %vm789, %v271, -3.4028235e+38
          %v798 = vsel %vm790, %v272, -3.4028235e+38
          %v799 = vsel %vm789, %v273, -3.4028235e+38
          %v800 = vsel %vm790, %v274, -3.4028235e+38
          %v801 = vsel %vm789, %v275, -3.4028235e+38
          %v802 = vsel %vm790, %v276, -3.4028235e+38
          %v803 = vsel %vm789, %v277, -3.4028235e+38
          %v804 = vsel %vm790, %v278, -3.4028235e+38
          %v805 = vsel %vm789, %v279, -3.4028235e+38
          %v806 = vsel %vm790, %v280, -3.4028235e+38
          %v807 = vsel %vm789, %v281, -3.4028235e+38
          %v808 = vsel %vm790, %v282, -3.4028235e+38
          %v809 = vsel %vm789, %v283, -3.4028235e+38
          %v810 = vsel %vm790, %v284, -3.4028235e+38
          %v811 = vsel %vm789, %v285, -3.4028235e+38
          %v812 = vsel %vm790, %v286, -3.4028235e+38
          %v813 = vsel %vm789, %v287, -3.4028235e+38
          %v814 = vsel %vm790, %v288, -3.4028235e+38
          %v815 = vsel %vm789, %v289, -3.4028235e+38
          %v816 = vsel %vm790, %v290, -3.4028235e+38
          %v817 = vsel %vm789, %v291, -3.4028235e+38
          %v818 = vsel %vm790, %v292, -3.4028235e+38
          %v819 = vsel %vm789, %v293, -3.4028235e+38
          %v820 = vsel %vm790, %v294, -3.4028235e+38
          %v821 = vsel %vm789, %v295, -3.4028235e+38
          %v822 = vsel %vm790, %v296, -3.4028235e+38
          %v823 = vmax.f32 %v791, %v792
          %v824 = vrot.slane %v823, 4
          %v825 = vmax.f32 %v823, %v824
          %v826 = vrot.slane %v825, 2
          %v827 = vmax.f32 %v825, %v826
          %v828 = vrot.slane %v827, 1
          %v829 = vmax.f32 %v827, %v828
          %v830 = vmax.f32 %v793, %v794
          %v831 = vrot.slane %v830, 4
          %v832 = vmax.f32 %v830, %v831
          %v833 = vrot.slane %v832, 2
          %v834 = vmax.f32 %v832, %v833
          %v835 = vrot.slane %v834, 1
          %v836 = vmax.f32 %v834, %v835
          %v837 = vmax.f32 %v795, %v796
          %v838 = vrot.slane %v837, 4
          %v839 = vmax.f32 %v837, %v838
          %v840 = vrot.slane %v839, 2
          %v841 = vmax.f32 %v839, %v840
          %v842 = vrot.slane %v841, 1
          %v843 = vmax.f32 %v841, %v842
          %v844 = vmax.f32 %v797, %v798
          %v845 = vrot.slane %v844, 4
          %v846 = vmax.f32 %v844, %v845
          %v847 = vrot.slane %v846, 2
          %v848 = vmax.f32 %v846, %v847
          %v849 = vrot.slane %v848, 1
          %v850 = vmax.f32 %v848, %v849
          %v851 = vmax.f32 %v799, %v800
          %v852 = vrot.slane %v851, 4
          %v853 = vmax.f32 %v851, %v852
          %v854 = vrot.slane %v853, 2
          %v855 = vmax.f32 %v853, %v854
          %v856 = vrot.slane %v855, 1
          %v857 = vmax.f32 %v855, %v856
          %v858 = vmax.f32 %v801, %v802
          %v859 = vrot.slane %v858, 4
          %v860 = vmax.f32 %v858, %v859
          %v861 = vrot.slane %v860, 2
          %v862 = vmax.f32 %v860, %v861
          %v863 = vrot.slane %v862, 1
          %v864 = vmax.f32 %v862, %v863
          %v865 = vmax.f32 %v803, %v804
          %v866 = vrot.slane %v865, 4
          %v867 = vmax.f32 %v865, %v866
          %v868 = vrot.slane %v867, 2
          %v869 = vmax.f32 %v867, %v868
          %v870 = vrot.slane %v869, 1
          %v871 = vmax.f32 %v869, %v870
          %v872 = vmax.f32 %v805, %v806
          %v873 = vrot.slane %v872, 4
          %v874 = vmax.f32 %v872, %v873
          %v875 = vrot.slane %v874, 2
          %v876 = vmax.f32 %v874, %v875
          %v877 = vrot.slane %v876, 1
          %v878 = vmax.f32 %v876, %v877
          %v879 = vmax.f32 %v807, %v808
          %v880 = vrot.slane %v879, 4
          %v881 = vmax.f32 %v879, %v880
          %v882 = vrot.slane %v881, 2
          %v883 = vmax.f32 %v881, %v882
          %v884 = vrot.slane %v883, 1
          %v885 = vmax.f32 %v883, %v884
          %v886 = vmax.f32 %v809, %v810
          %v887 = vrot.slane %v886, 4
          %v888 = vmax.f32 %v886, %v887
          %v889 = vrot.slane %v888, 2
          %v890 = vmax.f32 %v888, %v889
          %v891 = vrot.slane %v890, 1
          %v892 = vmax.f32 %v890, %v891
          %v893 = vmax.f32 %v811, %v812
          %v894 = vrot.slane %v893, 4
          %v895 = vmax.f32 %v893, %v894
          %v896 = vrot.slane %v895, 2
          %v897 = vmax.f32 %v895, %v896
          %v898 = vrot.slane %v897, 1
          %v899 = vmax.f32 %v897, %v898
          %v900 = vmax.f32 %v813, %v814
          %v901 = vrot.slane %v900, 4
          %v902 = vmax.f32 %v900, %v901
          %v903 = vrot.slane %v902, 2
          %v904 = vmax.f32 %v902, %v903
          %v905 = vrot.slane %v904, 1
          %v906 = vmax.f32 %v904, %v905
          %v907 = vmax.f32 %v815, %v816
          %v908 = vrot.slane %v907, 4
          %v909 = vmax.f32 %v907, %v908
          %v910 = vrot.slane %v909, 2
          %v911 = vmax.f32 %v909, %v910
          %v912 = vrot.slane %v911, 1
          %v913 = vmax.f32 %v911, %v912
          %v914 = vmax.f32 %v817, %v818
          %v915 = vrot.slane %v914, 4
          %v916 = vmax.f32 %v914, %v915
          %v917 = vrot.slane %v916, 2
          %v918 = vmax.f32 %v916, %v917
          %v919 = vrot.slane %v918, 1
          %v920 = vmax.f32 %v918, %v919
          %v921 = vmax.f32 %v819, %v820
          %v922 = vrot.slane %v921, 4
          %v923 = vmax.f32 %v921, %v922
          %v924 = vrot.slane %v923, 2
          %v925 = vmax.f32 %v923, %v924
          %v926 = vrot.slane %v925, 1
          %v927 = vmax.f32 %v925, %v926
          %v928 = vmax.f32 %v821, %v822
          %v929 = vrot.slane %v928, 4
          %v930 = vmax.f32 %v928, %v929
          %v931 = vrot.slane %v930, 2
          %v932 = vmax.f32 %v930, %v931
          %v933 = vrot.slane %v932, 1
          %v934 = vmax.f32 %v932, %v933
          %s935 = sadd.s32 %s200, 4
          %s936 = sld [smem:[#allocation6 + %s935]]
          %s937 = sld [smem:[#allocation7 + %s935]]
          %v938 = vstv %s936
          %vm939 = vcmp.ge.s32.totalorder %v298, %v938
          %vm940 = vcmp.ge.s32.totalorder %v299, %v938
          %v941 = vstv %s937
          %vm942 = vcmp.lt.s32.totalorder %v298, %v941
          %vm943 = vcmp.lt.s32.totalorder %v299, %v941
          %vm944 = vmand %vm939, %vm942
          %vm945 = vmand %vm940, %vm943
          %v946 = vsel %vm944, 1, 0
          %v947 = vsel %vm945, 1, 0
          %vm948 = vcmp.eq.s32.totalorder %v946, 1
          %vm949 = vcmp.eq.s32.totalorder %v947, 1
          %v950 = vsel %vm948, %v265, -3.4028235e+38
          %v951 = vsel %vm949, %v266, -3.4028235e+38
          %v952 = vsel %vm948, %v267, -3.4028235e+38
          %v953 = vsel %vm949, %v268, -3.4028235e+38
          %v954 = vsel %vm948, %v269, -3.4028235e+38
          %v955 = vsel %vm949, %v270, -3.4028235e+38
          %v956 = vsel %vm948, %v271, -3.4028235e+38
          %v957 = vsel %vm949, %v272, -3.4028235e+38
          %v958 = vsel %vm948, %v273, -3.4028235e+38
          %v959 = vsel %vm949, %v274, -3.4028235e+38
          %v960 = vsel %vm948, %v275, -3.4028235e+38
          %v961 = vsel %vm949, %v276, -3.4028235e+38
          %v962 = vsel %vm948, %v277, -3.4028235e+38
          %v963 = vsel %vm949, %v278, -3.4028235e+38
          %v964 = vsel %vm948, %v279, -3.4028235e+38
          %v965 = vsel %vm949, %v280, -3.4028235e+38
          %v966 = vsel %vm948, %v281, -3.4028235e+38
          %v967 = vsel %vm949, %v282, -3.4028235e+38
          %v968 = vsel %vm948, %v283, -3.4028235e+38
          %v969 = vsel %vm949, %v284, -3.4028235e+38
          %v970 = vsel %vm948, %v285, -3.4028235e+38
          %v971 = vsel %vm949, %v286, -3.4028235e+38
          %v972 = vsel %vm948, %v287, -3.4028235e+38
          %v973 = vsel %vm949, %v288, -3.4028235e+38
          %v974 = vsel %vm948, %v289, -3.4028235e+38
          %v975 = vsel %vm949, %v290, -3.4028235e+38
          %v976 = vsel %vm948, %v291, -3.4028235e+38
          %v977 = vsel %vm949, %v292, -3.4028235e+38
          %v978 = vsel %vm948, %v293, -3.4028235e+38
          %v979 = vsel %vm949, %v294, -3.4028235e+38
          %v980 = vsel %vm948, %v295, -3.4028235e+38
          %v981 = vsel %vm949, %v296, -3.4028235e+38
          %v982 = vmax.f32 %v950, %v951
          %v983 = vrot.slane %v982, 4
          %v984 = vmax.f32 %v982, %v983
          %v985 = vrot.slane %v984, 2
          %v986 = vmax.f32 %v984, %v985
          %v987 = vrot.slane %v986, 1
          %v988 = vmax.f32 %v986, %v987
          %v989 = vmax.f32 %v952, %v953
          %v990 = vrot.slane %v989, 4
          %v991 = vmax.f32 %v989, %v990
          %v992 = vrot.slane %v991, 2
          %v993 = vmax.f32 %v991, %v992
          %v994 = vrot.slane %v993, 1
          %v995 = vmax.f32 %v993, %v994
          %v996 = vmax.f32 %v954, %v955
          %v997 = vrot.slane %v996, 4
          %v998 = vmax.f32 %v996, %v997
          %v999 = vrot.slane %v998, 2
          %v1000 = vmax.f32 %v998, %v999
          %v1001 = vrot.slane %v1000, 1
          %v1002 = vmax.f32 %v1000, %v1001
          %v1003 = vmax.f32 %v956, %v957
          %v1004 = vrot.slane %v1003, 4
          %v1005 = vmax.f32 %v1003, %v1004
          %v1006 = vrot.slane %v1005, 2
          %v1007 = vmax.f32 %v1005, %v1006
          %v1008 = vrot.slane %v1007, 1
          %v1009 = vmax.f32 %v1007, %v1008
          %v1010 = vmax.f32 %v958, %v959
          %v1011 = vrot.slane %v1010, 4
          %v1012 = vmax.f32 %v1010, %v1011
          %v1013 = vrot.slane %v1012, 2
          %v1014 = vmax.f32 %v1012, %v1013
          %v1015 = vrot.slane %v1014, 1
          %v1016 = vmax.f32 %v1014, %v1015
          %v1017 = vmax.f32 %v960, %v961
          %v1018 = vrot.slane %v1017, 4
          %v1019 = vmax.f32 %v1017, %v1018
          %v1020 = vrot.slane %v1019, 2
          %v1021 = vmax.f32 %v1019, %v1020
          %v1022 = vrot.slane %v1021, 1
          %v1023 = vmax.f32 %v1021, %v1022
          %v1024 = vmax.f32 %v962, %v963
          %v1025 = vrot.slane %v1024, 4
          %v1026 = vmax.f32 %v1024, %v1025
          %v1027 = vrot.slane %v1026, 2
          %v1028 = vmax.f32 %v1026, %v1027
          %v1029 = vrot.slane %v1028, 1
          %v1030 = vmax.f32 %v1028, %v1029
          %v1031 = vmax.f32 %v964, %v965
          %v1032 = vrot.slane %v1031, 4
          %v1033 = vmax.f32 %v1031, %v1032
          %v1034 = vrot.slane %v1033, 2
          %v1035 = vmax.f32 %v1033, %v1034
          %v1036 = vrot.slane %v1035, 1
          %v1037 = vmax.f32 %v1035, %v1036
          %v1038 = vmax.f32 %v966, %v967
          %v1039 = vrot.slane %v1038, 4
          %v1040 = vmax.f32 %v1038, %v1039
          %v1041 = vrot.slane %v1040, 2
          %v1042 = vmax.f32 %v1040, %v1041
          %v1043 = vrot.slane %v1042, 1
          %v1044 = vmax.f32 %v1042, %v1043
          %v1045 = vmax.f32 %v968, %v969
          %v1046 = vrot.slane %v1045, 4
          %v1047 = vmax.f32 %v1045, %v1046
          %v1048 = vrot.slane %v1047, 2
          %v1049 = vmax.f32 %v1047, %v1048
          %v1050 = vrot.slane %v1049, 1
          %v1051 = vmax.f32 %v1049, %v1050
          %v1052 = vmax.f32 %v970, %v971
          %v1053 = vrot.slane %v1052, 4
          %v1054 = vmax.f32 %v1052, %v1053
          %v1055 = vrot.slane %v1054, 2
          %v1056 = vmax.f32 %v1054, %v1055
          %v1057 = vrot.slane %v1056, 1
          %v1058 = vmax.f32 %v1056, %v1057
          %v1059 = vmax.f32 %v972, %v973
          %v1060 = vrot.slane %v1059, 4
          %v1061 = vmax.f32 %v1059, %v1060
          %v1062 = vrot.slane %v1061, 2
          %v1063 = vmax.f32 %v1061, %v1062
          %v1064 = vrot.slane %v1063, 1
          %v1065 = vmax.f32 %v1063, %v1064
          %v1066 = vmax.f32 %v974, %v975
          %v1067 = vrot.slane %v1066, 4
          %v1068 = vmax.f32 %v1066, %v1067
          %v1069 = vrot.slane %v1068, 2
          %v1070 = vmax.f32 %v1068, %v1069
          %v1071 = vrot.slane %v1070, 1
          %v1072 = vmax.f32 %v1070, %v1071
          %v1073 = vmax.f32 %v976, %v977
          %v1074 = vrot.slane %v1073, 4
          %v1075 = vmax.f32 %v1073, %v1074
          %v1076 = vrot.slane %v1075, 2
          %v1077 = vmax.f32 %v1075, %v1076
          %v1078 = vrot.slane %v1077, 1
          %v1079 = vmax.f32 %v1077, %v1078
          %v1080 = vmax.f32 %v978, %v979
          %v1081 = vrot.slane %v1080, 4
          %v1082 = vmax.f32 %v1080, %v1081
          %v1083 = vrot.slane %v1082, 2
          %v1084 = vmax.f32 %v1082, %v1083
          %v1085 = vrot.slane %v1084, 1
          %v1086 = vmax.f32 %v1084, %v1085
          %v1087 = vmax.f32 %v980, %v981
          %v1088 = vrot.slane %v1087, 4
          %v1089 = vmax.f32 %v1087, %v1088
          %v1090 = vrot.slane %v1089, 2
          %v1091 = vmax.f32 %v1089, %v1090
          %v1092 = vrot.slane %v1091, 1
          %v1093 = vmax.f32 %v1091, %v1092
          %s1094 = sadd.s32 %s200, 5
          %s1095 = sld [smem:[#allocation6 + %s1094]]
          %s1096 = sld [smem:[#allocation7 + %s1094]]
          %v1097 = vstv %s1095
          %vm1098 = vcmp.ge.s32.totalorder %v298, %v1097
          %vm1099 = vcmp.ge.s32.totalorder %v299, %v1097
          %v1100 = vstv %s1096
          %vm1101 = vcmp.lt.s32.totalorder %v298, %v1100
          %vm1102 = vcmp.lt.s32.totalorder %v299, %v1100
          %vm1103 = vmand %vm1098, %vm1101
          %vm1104 = vmand %vm1099, %vm1102
          %v1105 = vsel %vm1103, 1, 0
          %v1106 = vsel %vm1104, 1, 0
          %vm1107 = vcmp.eq.s32.totalorder %v1105, 1
          %vm1108 = vcmp.eq.s32.totalorder %v1106, 1
          %v1109 = vsel %vm1107, %v265, -3.4028235e+38
          %v1110 = vsel %vm1108, %v266, -3.4028235e+38
          %v1111 = vsel %vm1107, %v267, -3.4028235e+38
          %v1112 = vsel %vm1108, %v268, -3.4028235e+38
          %v1113 = vsel %vm1107, %v269, -3.4028235e+38
          %v1114 = vsel %vm1108, %v270, -3.4028235e+38
          %v1115 = vsel %vm1107, %v271, -3.4028235e+38
          %v1116 = vsel %vm1108, %v272, -3.4028235e+38
          %v1117 = vsel %vm1107, %v273, -3.4028235e+38
          %v1118 = vsel %vm1108, %v274, -3.4028235e+38
          %v1119 = vsel %vm1107, %v275, -3.4028235e+38
          %v1120 = vsel %vm1108, %v276, -3.4028235e+38
          %v1121 = vsel %vm1107, %v277, -3.4028235e+38
          %v1122 = vsel %vm1108, %v278, -3.4028235e+38
          %v1123 = vsel %vm1107, %v279, -3.4028235e+38
          %v1124 = vsel %vm1108, %v280, -3.4028235e+38
          %v1125 = vsel %vm1107, %v281, -3.4028235e+38
          %v1126 = vsel %vm1108, %v282, -3.4028235e+38
          %v1127 = vsel %vm1107, %v283, -3.4028235e+38
          %v1128 = vsel %vm1108, %v284, -3.4028235e+38
          %v1129 = vsel %vm1107, %v285, -3.4028235e+38
          %v1130 = vsel %vm1108, %v286, -3.4028235e+38
          %v1131 = vsel %vm1107, %v287, -3.4028235e+38
          %v1132 = vsel %vm1108, %v288, -3.4028235e+38
          %v1133 = vsel %vm1107, %v289, -3.4028235e+38
          %v1134 = vsel %vm1108, %v290, -3.4028235e+38
          %v1135 = vsel %vm1107, %v291, -3.4028235e+38
          %v1136 = vsel %vm1108, %v292, -3.4028235e+38
          %v1137 = vsel %vm1107, %v293, -3.4028235e+38
          %v1138 = vsel %vm1108, %v294, -3.4028235e+38
          %v1139 = vsel %vm1107, %v295, -3.4028235e+38
          %v1140 = vsel %vm1108, %v296, -3.4028235e+38
          %v1141 = vmax.f32 %v1109, %v1110
          %v1142 = vrot.slane %v1141, 4
          %v1143 = vmax.f32 %v1141, %v1142
          %v1144 = vrot.slane %v1143, 2
          %v1145 = vmax.f32 %v1143, %v1144
          %v1146 = vrot.slane %v1145, 1
          %v1147 = vmax.f32 %v1145, %v1146
          %v1148 = vmax.f32 %v1111, %v1112
          %v1149 = vrot.slane %v1148, 4
          %v1150 = vmax.f32 %v1148, %v1149
          %v1151 = vrot.slane %v1150, 2
          %v1152 = vmax.f32 %v1150, %v1151
          %v1153 = vrot.slane %v1152, 1
          %v1154 = vmax.f32 %v1152, %v1153
          %v1155 = vmax.f32 %v1113, %v1114
          %v1156 = vrot.slane %v1155, 4
          %v1157 = vmax.f32 %v1155, %v1156
          %v1158 = vrot.slane %v1157, 2
          %v1159 = vmax.f32 %v1157, %v1158
          %v1160 = vrot.slane %v1159, 1
          %v1161 = vmax.f32 %v1159, %v1160
          %v1162 = vmax.f32 %v1115, %v1116
          %v1163 = vrot.slane %v1162, 4
          %v1164 = vmax.f32 %v1162, %v1163
          %v1165 = vrot.slane %v1164, 2
          %v1166 = vmax.f32 %v1164, %v1165
          %v1167 = vrot.slane %v1166, 1
          %v1168 = vmax.f32 %v1166, %v1167
          %v1169 = vmax.f32 %v1117, %v1118
          %v1170 = vrot.slane %v1169, 4
          %v1171 = vmax.f32 %v1169, %v1170
          %v1172 = vrot.slane %v1171, 2
          %v1173 = vmax.f32 %v1171, %v1172
          %v1174 = vrot.slane %v1173, 1
          %v1175 = vmax.f32 %v1173, %v1174
          %v1176 = vmax.f32 %v1119, %v1120
          %v1177 = vrot.slane %v1176, 4
          %v1178 = vmax.f32 %v1176, %v1177
          %v1179 = vrot.slane %v1178, 2
          %v1180 = vmax.f32 %v1178, %v1179
          %v1181 = vrot.slane %v1180, 1
          %v1182 = vmax.f32 %v1180, %v1181
          %v1183 = vmax.f32 %v1121, %v1122
          %v1184 = vrot.slane %v1183, 4
          %v1185 = vmax.f32 %v1183, %v1184
          %v1186 = vrot.slane %v1185, 2
          %v1187 = vmax.f32 %v1185, %v1186
          %v1188 = vrot.slane %v1187, 1
          %v1189 = vmax.f32 %v1187, %v1188
          %v1190 = vmax.f32 %v1123, %v1124
          %v1191 = vrot.slane %v1190, 4
          %v1192 = vmax.f32 %v1190, %v1191
          %v1193 = vrot.slane %v1192, 2
          %v1194 = vmax.f32 %v1192, %v1193
          %v1195 = vrot.slane %v1194, 1
          %v1196 = vmax.f32 %v1194, %v1195
          %v1197 = vmax.f32 %v1125, %v1126
          %v1198 = vrot.slane %v1197, 4
          %v1199 = vmax.f32 %v1197, %v1198
          %v1200 = vrot.slane %v1199, 2
          %v1201 = vmax.f32 %v1199, %v1200
          %v1202 = vrot.slane %v1201, 1
          %v1203 = vmax.f32 %v1201, %v1202
          %v1204 = vmax.f32 %v1127, %v1128
          %v1205 = vrot.slane %v1204, 4
          %v1206 = vmax.f32 %v1204, %v1205
          %v1207 = vrot.slane %v1206, 2
          %v1208 = vmax.f32 %v1206, %v1207
          %v1209 = vrot.slane %v1208, 1
          %v1210 = vmax.f32 %v1208, %v1209
          %v1211 = vmax.f32 %v1129, %v1130
          %v1212 = vrot.slane %v1211, 4
          %v1213 = vmax.f32 %v1211, %v1212
          %v1214 = vrot.slane %v1213, 2
          %v1215 = vmax.f32 %v1213, %v1214
          %v1216 = vrot.slane %v1215, 1
          %v1217 = vmax.f32 %v1215, %v1216
          %v1218 = vmax.f32 %v1131, %v1132
          %v1219 = vrot.slane %v1218, 4
          %v1220 = vmax.f32 %v1218, %v1219
          %v1221 = vrot.slane %v1220, 2
          %v1222 = vmax.f32 %v1220, %v1221
          %v1223 = vrot.slane %v1222, 1
          %v1224 = vmax.f32 %v1222, %v1223
          %v1225 = vmax.f32 %v1133, %v1134
          %v1226 = vrot.slane %v1225, 4
          %v1227 = vmax.f32 %v1225, %v1226
          %v1228 = vrot.slane %v1227, 2
          %v1229 = vmax.f32 %v1227, %v1228
          %v1230 = vrot.slane %v1229, 1
          %v1231 = vmax.f32 %v1229, %v1230
          %v1232 = vmax.f32 %v1135, %v1136
          %v1233 = vrot.slane %v1232, 4
          %v1234 = vmax.f32 %v1232, %v1233
          %v1235 = vrot.slane %v1234, 2
          %v1236 = vmax.f32 %v1234, %v1235
          %v1237 = vrot.slane %v1236, 1
          %v1238 = vmax.f32 %v1236, %v1237
          %v1239 = vmax.f32 %v1137, %v1138
          %v1240 = vrot.slane %v1239, 4
          %v1241 = vmax.f32 %v1239, %v1240
          %v1242 = vrot.slane %v1241, 2
          %v1243 = vmax.f32 %v1241, %v1242
          %v1244 = vrot.slane %v1243, 1
          %v1245 = vmax.f32 %v1243, %v1244
          %v1246 = vmax.f32 %v1139, %v1140
          %v1247 = vrot.slane %v1246, 4
          %v1248 = vmax.f32 %v1246, %v1247
          %v1249 = vrot.slane %v1248, 2
          %v1250 = vmax.f32 %v1248, %v1249
          %v1251 = vrot.slane %v1250, 1
          %v1252 = vmax.f32 %v1250, %v1251
          %s1253 = sadd.s32 %s200, 6
          %s1254 = sld [smem:[#allocation6 + %s1253]]
          %s1255 = sld [smem:[#allocation7 + %s1253]]
          %v1256 = vstv %s1254
          %vm1257 = vcmp.ge.s32.totalorder %v298, %v1256
          %vm1258 = vcmp.ge.s32.totalorder %v299, %v1256
          %v1259 = vstv %s1255
          %vm1260 = vcmp.lt.s32.totalorder %v298, %v1259
          %vm1261 = vcmp.lt.s32.totalorder %v299, %v1259
          %vm1262 = vmand %vm1257, %vm1260
          %vm1263 = vmand %vm1258, %vm1261
          %v1264 = vsel %vm1262, 1, 0
          %v1265 = vsel %vm1263, 1, 0
          %vm1266 = vcmp.eq.s32.totalorder %v1264, 1
          %vm1267 = vcmp.eq.s32.totalorder %v1265, 1
          %v1268 = vsel %vm1266, %v265, -3.4028235e+38
          %v1269 = vsel %vm1267, %v266, -3.4028235e+38
          %v1270 = vsel %vm1266, %v267, -3.4028235e+38
          %v1271 = vsel %vm1267, %v268, -3.4028235e+38
          %v1272 = vsel %vm1266, %v269, -3.4028235e+38
          %v1273 = vsel %vm1267, %v270, -3.4028235e+38
          %v1274 = vsel %vm1266, %v271, -3.4028235e+38
          %v1275 = vsel %vm1267, %v272, -3.4028235e+38
          %v1276 = vsel %vm1266, %v273, -3.4028235e+38
          %v1277 = vsel %vm1267, %v274, -3.4028235e+38
          %v1278 = vsel %vm1266, %v275, -3.4028235e+38
          %v1279 = vsel %vm1267, %v276, -3.4028235e+38
          %v1280 = vsel %vm1266, %v277, -3.4028235e+38
          %v1281 = vsel %vm1267, %v278, -3.4028235e+38
          %v1282 = vsel %vm1266, %v279, -3.4028235e+38
          %v1283 = vsel %vm1267, %v280, -3.4028235e+38
          %v1284 = vsel %vm1266, %v281, -3.4028235e+38
          %v1285 = vsel %vm1267, %v282, -3.4028235e+38
          %v1286 = vsel %vm1266, %v283, -3.4028235e+38
          %v1287 = vsel %vm1267, %v284, -3.4028235e+38
          %v1288 = vsel %vm1266, %v285, -3.4028235e+38
          %v1289 = vsel %vm1267, %v286, -3.4028235e+38
          %v1290 = vsel %vm1266, %v287, -3.4028235e+38
          %v1291 = vsel %vm1267, %v288, -3.4028235e+38
          %v1292 = vsel %vm1266, %v289, -3.4028235e+38
          %v1293 = vsel %vm1267, %v290, -3.4028235e+38
          %v1294 = vsel %vm1266, %v291, -3.4028235e+38
          %v1295 = vsel %vm1267, %v292, -3.4028235e+38
          %v1296 = vsel %vm1266, %v293, -3.4028235e+38
          %v1297 = vsel %vm1267, %v294, -3.4028235e+38
          %v1298 = vsel %vm1266, %v295, -3.4028235e+38
          %v1299 = vsel %vm1267, %v296, -3.4028235e+38
          %v1300 = vmax.f32 %v1268, %v1269
          %v1301 = vrot.slane %v1300, 4
          %v1302 = vmax.f32 %v1300, %v1301
          %v1303 = vrot.slane %v1302, 2
          %v1304 = vmax.f32 %v1302, %v1303
          %v1305 = vrot.slane %v1304, 1
          %v1306 = vmax.f32 %v1304, %v1305
          %v1307 = vmax.f32 %v1270, %v1271
          %v1308 = vrot.slane %v1307, 4
          %v1309 = vmax.f32 %v1307, %v1308
          %v1310 = vrot.slane %v1309, 2
          %v1311 = vmax.f32 %v1309, %v1310
          %v1312 = vrot.slane %v1311, 1
          %v1313 = vmax.f32 %v1311, %v1312
          %v1314 = vmax.f32 %v1272, %v1273
          %v1315 = vrot.slane %v1314, 4
          %v1316 = vmax.f32 %v1314, %v1315
          %v1317 = vrot.slane %v1316, 2
          %v1318 = vmax.f32 %v1316, %v1317
          %v1319 = vrot.slane %v1318, 1
          %v1320 = vmax.f32 %v1318, %v1319
          %v1321 = vmax.f32 %v1274, %v1275
          %v1322 = vrot.slane %v1321, 4
          %v1323 = vmax.f32 %v1321, %v1322
          %v1324 = vrot.slane %v1323, 2
          %v1325 = vmax.f32 %v1323, %v1324
          %v1326 = vrot.slane %v1325, 1
          %v1327 = vmax.f32 %v1325, %v1326
          %v1328 = vmax.f32 %v1276, %v1277
          %v1329 = vrot.slane %v1328, 4
          %v1330 = vmax.f32 %v1328, %v1329
          %v1331 = vrot.slane %v1330, 2
          %v1332 = vmax.f32 %v1330, %v1331
          %v1333 = vrot.slane %v1332, 1
          %v1334 = vmax.f32 %v1332, %v1333
          %v1335 = vmax.f32 %v1278, %v1279
          %v1336 = vrot.slane %v1335, 4
          %v1337 = vmax.f32 %v1335, %v1336
          %v1338 = vrot.slane %v1337, 2
          %v1339 = vmax.f32 %v1337, %v1338
          %v1340 = vrot.slane %v1339, 1
          %v1341 = vmax.f32 %v1339, %v1340
          %v1342 = vmax.f32 %v1280, %v1281
          %v1343 = vrot.slane %v1342, 4
          %v1344 = vmax.f32 %v1342, %v1343
          %v1345 = vrot.slane %v1344, 2
          %v1346 = vmax.f32 %v1344, %v1345
          %v1347 = vrot.slane %v1346, 1
          %v1348 = vmax.f32 %v1346, %v1347
          %v1349 = vmax.f32 %v1282, %v1283
          %v1350 = vrot.slane %v1349, 4
          %v1351 = vmax.f32 %v1349, %v1350
          %v1352 = vrot.slane %v1351, 2
          %v1353 = vmax.f32 %v1351, %v1352
          %v1354 = vrot.slane %v1353, 1
          %v1355 = vmax.f32 %v1353, %v1354
          %v1356 = vmax.f32 %v1284, %v1285
          %v1357 = vrot.slane %v1356, 4
          %v1358 = vmax.f32 %v1356, %v1357
          %v1359 = vrot.slane %v1358, 2
          %v1360 = vmax.f32 %v1358, %v1359
          %v1361 = vrot.slane %v1360, 1
          %v1362 = vmax.f32 %v1360, %v1361
          %v1363 = vmax.f32 %v1286, %v1287
          %v1364 = vrot.slane %v1363, 4
          %v1365 = vmax.f32 %v1363, %v1364
          %v1366 = vrot.slane %v1365, 2
          %v1367 = vmax.f32 %v1365, %v1366
          %v1368 = vrot.slane %v1367, 1
          %v1369 = vmax.f32 %v1367, %v1368
          %v1370 = vmax.f32 %v1288, %v1289
          %v1371 = vrot.slane %v1370, 4
          %v1372 = vmax.f32 %v1370, %v1371
          %v1373 = vrot.slane %v1372, 2
          %v1374 = vmax.f32 %v1372, %v1373
          %v1375 = vrot.slane %v1374, 1
          %v1376 = vmax.f32 %v1374, %v1375
          %v1377 = vmax.f32 %v1290, %v1291
          %v1378 = vrot.slane %v1377, 4
          %v1379 = vmax.f32 %v1377, %v1378
          %v1380 = vrot.slane %v1379, 2
          %v1381 = vmax.f32 %v1379, %v1380
          %v1382 = vrot.slane %v1381, 1
          %v1383 = vmax.f32 %v1381, %v1382
          %v1384 = vmax.f32 %v1292, %v1293
          %v1385 = vrot.slane %v1384, 4
          %v1386 = vmax.f32 %v1384, %v1385
          %v1387 = vrot.slane %v1386, 2
          %v1388 = vmax.f32 %v1386, %v1387
          %v1389 = vrot.slane %v1388, 1
          %v1390 = vmax.f32 %v1388, %v1389
          %v1391 = vmax.f32 %v1294, %v1295
          %v1392 = vrot.slane %v1391, 4
          %v1393 = vmax.f32 %v1391, %v1392
          %v1394 = vrot.slane %v1393, 2
          %v1395 = vmax.f32 %v1393, %v1394
          %v1396 = vrot.slane %v1395, 1
          %v1397 = vmax.f32 %v1395, %v1396
          %v1398 = vmax.f32 %v1296, %v1297
          %v1399 = vrot.slane %v1398, 4
          %v1400 = vmax.f32 %v1398, %v1399
          %v1401 = vrot.slane %v1400, 2
          %v1402 = vmax.f32 %v1400, %v1401
          %v1403 = vrot.slane %v1402, 1
          %v1404 = vmax.f32 %v1402, %v1403
          %v1405 = vmax.f32 %v1298, %v1299
          %v1406 = vrot.slane %v1405, 4
          %v1407 = vmax.f32 %v1405, %v1406
          %v1408 = vrot.slane %v1407, 2
          %v1409 = vmax.f32 %v1407, %v1408
          %v1410 = vrot.slane %v1409, 1
          %v1411 = vmax.f32 %v1409, %v1410
          %vm1412 = vcmask 1040384
          %v1413 = vsel %vm1412, %v352, %v511
          %v1414 = vsel %vm1412, %v359, %v518
          %v1415 = vsel %vm1412, %v366, %v525
          %v1416 = vsel %vm1412, %v373, %v532
          %v1417 = vsel %vm1412, %v380, %v539
          %v1418 = vsel %vm1412, %v387, %v546
          %v1419 = vsel %vm1412, %v394, %v553
          %v1420 = vsel %vm1412, %v401, %v560
          %v1421 = vsel %vm1412, %v408, %v567
          %v1422 = vsel %vm1412, %v415, %v574
          %v1423 = vsel %vm1412, %v422, %v581
          %v1424 = vsel %vm1412, %v429, %v588
          %v1425 = vsel %vm1412, %v436, %v595
          %v1426 = vsel %vm1412, %v443, %v602
          %v1427 = vsel %vm1412, %v450, %v609
          %v1428 = vsel %vm1412, %v457, %v616
          %vm1429 = vcmask 1041408
          %v1430 = vsel %vm1429, %v1413, %v670
          %v1431 = vsel %vm1429, %v1414, %v677
          %v1432 = vsel %vm1429, %v1415, %v684
          %v1433 = vsel %vm1429, %v1416, %v691
          %v1434 = vsel %vm1429, %v1417, %v698
          %v1435 = vsel %vm1429, %v1418, %v705
          %v1436 = vsel %vm1429, %v1419, %v712
          %v1437 = vsel %vm1429, %v1420, %v719
          %v1438 = vsel %vm1429, %v1421, %v726
          %v1439 = vsel %vm1429, %v1422, %v733
          %v1440 = vsel %vm1429, %v1423, %v740
          %v1441 = vsel %vm1429, %v1424, %v747
          %v1442 = vsel %vm1429, %v1425, %v754
          %v1443 = vsel %vm1429, %v1426, %v761
          %v1444 = vsel %vm1429, %v1427, %v768
          %v1445 = vsel %vm1429, %v1428, %v775
          %vm1446 = vcmask 1042432
          %v1447 = vsel %vm1446, %v1430, %v829
          %v1448 = vsel %vm1446, %v1431, %v836
          %v1449 = vsel %vm1446, %v1432, %v843
          %v1450 = vsel %vm1446, %v1433, %v850
          %v1451 = vsel %vm1446, %v1434, %v857
          %v1452 = vsel %vm1446, %v1435, %v864
          %v1453 = vsel %vm1446, %v1436, %v871
          %v1454 = vsel %vm1446, %v1437, %v878
          %v1455 = vsel %vm1446, %v1438, %v885
          %v1456 = vsel %vm1446, %v1439, %v892
          %v1457 = vsel %vm1446, %v1440, %v899
          %v1458 = vsel %vm1446, %v1441, %v906
          %v1459 = vsel %vm1446, %v1442, %v913
          %v1460 = vsel %vm1446, %v1443, %v920
          %v1461 = vsel %vm1446, %v1444, %v927
          %v1462 = vsel %vm1446, %v1445, %v934
          %vm1463 = vcmask 1043456
          %v1464 = vsel %vm1463, %v1447, %v988
          %v1465 = vsel %vm1463, %v1448, %v995
          %v1466 = vsel %vm1463, %v1449, %v1002
          %v1467 = vsel %vm1463, %v1450, %v1009
          %v1468 = vsel %vm1463, %v1451, %v1016
          %v1469 = vsel %vm1463, %v1452, %v1023
          %v1470 = vsel %vm1463, %v1453, %v1030
          %v1471 = vsel %vm1463, %v1454, %v1037
          %v1472 = vsel %vm1463, %v1455, %v1044
          %v1473 = vsel %vm1463, %v1456, %v1051
          %v1474 = vsel %vm1463, %v1457, %v1058
          %v1475 = vsel %vm1463, %v1458, %v1065
          %v1476 = vsel %vm1463, %v1459, %v1072
          %v1477 = vsel %vm1463, %v1460, %v1079
          %v1478 = vsel %vm1463, %v1461, %v1086
          %v1479 = vsel %vm1463, %v1462, %v1093
          %vm1480 = vcmask 1044480
          %v1481 = vsel %vm1480, %v1464, %v1147
          %v1482 = vsel %vm1480, %v1465, %v1154
          %v1483 = vsel %vm1480, %v1466, %v1161
          %v1484 = vsel %vm1480, %v1467, %v1168
          %v1485 = vsel %vm1480, %v1468, %v1175
          %v1486 = vsel %vm1480, %v1469, %v1182
          %v1487 = vsel %vm1480, %v1470, %v1189
          %v1488 = vsel %vm1480, %v1471, %v1196
          %v1489 = vsel %vm1480, %v1472, %v1203
          %v1490 = vsel %vm1480, %v1473, %v1210
          %v1491 = vsel %vm1480, %v1474, %v1217
          %v1492 = vsel %vm1480, %v1475, %v1224
          %v1493 = vsel %vm1480, %v1476, %v1231
          %v1494 = vsel %vm1480, %v1477, %v1238
          %v1495 = vsel %vm1480, %v1478, %v1245
          %v1496 = vsel %vm1480, %v1479, %v1252
          %vm1497 = vcmask 1045504
          %v1498 = vsel %vm1497, %v1481, %v1306
          %v1499 = vsel %vm1497, %v1482, %v1313
          %v1500 = vsel %vm1497, %v1483, %v1320
          %v1501 = vsel %vm1497, %v1484, %v1327
          %v1502 = vsel %vm1497, %v1485, %v1334
          %v1503 = vsel %vm1497, %v1486, %v1341
          %v1504 = vsel %vm1497, %v1487, %v1348
          %v1505 = vsel %vm1497, %v1488, %v1355
          %v1506 = vsel %vm1497, %v1489, %v1362
          %v1507 = vsel %vm1497, %v1490, %v1369
          %v1508 = vsel %vm1497, %v1491, %v1376
          %v1509 = vsel %vm1497, %v1492, %v1383
          %v1510 = vsel %vm1497, %v1493, %v1390
          %v1511 = vsel %vm1497, %v1494, %v1397
          %v1512 = vsel %vm1497, %v1495, %v1404
          %v1513 = vsel %vm1497, %v1496, %v1411
          %s1514 = sld [smem:[#allocation4 + %s200]]
          %s1515 = sld [smem:[#allocation5 + %s200]]
          %v1516 = vstv %s1514
          %vm1517 = vcmp.le.s32.totalorder %v1516, 0
          %vm1518 = vcmp.le.s32.totalorder %v1516, 1
          %vm1519 = vcmp.le.s32.totalorder %v1516, 2
          %vm1520 = vcmp.le.s32.totalorder %v1516, 3
          %vm1521 = vcmp.le.s32.totalorder %v1516, 4
          %vm1522 = vcmp.le.s32.totalorder %v1516, 5
          %vm1523 = vcmp.le.s32.totalorder %v1516, 6
          %vm1524 = vcmp.le.s32.totalorder %v1516, 7
          %vm1525 = vcmp.le.s32.totalorder %v1516, 8
          %vm1526 = vcmp.le.s32.totalorder %v1516, 9
          %vm1527 = vcmp.le.s32.totalorder %v1516, 10
          %vm1528 = vcmp.le.s32.totalorder %v1516, 11
          %vm1529 = vcmp.le.s32.totalorder %v1516, 12
          %vm1530 = vcmp.le.s32.totalorder %v1516, 13
          %vm1531 = vcmp.le.s32.totalorder %v1516, 14
          %vm1532 = vcmp.le.s32.totalorder %v1516, 15
          %v1533 = vstv %s1515
          %vm1534 = vcmp.gt.s32.totalorder %v1533, 0
          %vm1535 = vcmp.gt.s32.totalorder %v1533, 1
          %vm1536 = vcmp.gt.s32.totalorder %v1533, 2
          %vm1537 = vcmp.gt.s32.totalorder %v1533, 3
          %vm1538 = vcmp.gt.s32.totalorder %v1533, 4
          %vm1539 = vcmp.gt.s32.totalorder %v1533, 5
          %vm1540 = vcmp.gt.s32.totalorder %v1533, 6
          %vm1541 = vcmp.gt.s32.totalorder %v1533, 7
          %vm1542 = vcmp.gt.s32.totalorder %v1533, 8
          %vm1543 = vcmp.gt.s32.totalorder %v1533, 9
          %vm1544 = vcmp.gt.s32.totalorder %v1533, 10
          %vm1545 = vcmp.gt.s32.totalorder %v1533, 11
          %vm1546 = vcmp.gt.s32.totalorder %v1533, 12
          %vm1547 = vcmp.gt.s32.totalorder %v1533, 13
          %vm1548 = vcmp.gt.s32.totalorder %v1533, 14
          %vm1549 = vcmp.gt.s32.totalorder %v1533, 15
          %vm1550 = vmand %vm1517, %vm1534
          %vm1551 = vmand %vm1518, %vm1535
          %vm1552 = vmand %vm1519, %vm1536
          %vm1553 = vmand %vm1520, %vm1537
          %vm1554 = vmand %vm1521, %vm1538
          %vm1555 = vmand %vm1522, %vm1539
          %vm1556 = vmand %vm1523, %vm1540
          %vm1557 = vmand %vm1524, %vm1541
          %vm1558 = vmand %vm1525, %vm1542
          %vm1559 = vmand %vm1526, %vm1543
          %vm1560 = vmand %vm1527, %vm1544
          %vm1561 = vmand %vm1528, %vm1545
          %vm1562 = vmand %vm1529, %vm1546
          %vm1563 = vmand %vm1530, %vm1547
          %vm1564 = vmand %vm1531, %vm1548
          %vm1565 = vmand %vm1532, %vm1549
          %v1566 = vsel %vm1550, 1, 0
          %v1567 = vsel %vm1551, 1, 0
          %v1568 = vsel %vm1552, 1, 0
          %v1569 = vsel %vm1553, 1, 0
          %v1570 = vsel %vm1554, 1, 0
          %v1571 = vsel %vm1555, 1, 0
          %v1572 = vsel %vm1556, 1, 0
          %v1573 = vsel %vm1557, 1, 0
          %v1574 = vsel %vm1558, 1, 0
          %v1575 = vsel %vm1559, 1, 0
          %v1576 = vsel %vm1560, 1, 0
          %v1577 = vsel %vm1561, 1, 0
          %v1578 = vsel %vm1562, 1, 0
          %v1579 = vsel %vm1563, 1, 0
          %v1580 = vsel %vm1564, 1, 0
          %v1581 = vsel %vm1565, 1, 0
          %vm1582 = vcmp.eq.s32.totalorder %v1566, 1
          %vm1583 = vcmp.eq.s32.totalorder %v1567, 1
          %vm1584 = vcmp.eq.s32.totalorder %v1568, 1
          %vm1585 = vcmp.eq.s32.totalorder %v1569, 1
          %vm1586 = vcmp.eq.s32.totalorder %v1570, 1
          %vm1587 = vcmp.eq.s32.totalorder %v1571, 1
          %vm1588 = vcmp.eq.s32.totalorder %v1572, 1
          %vm1589 = vcmp.eq.s32.totalorder %v1573, 1
          %vm1590 = vcmp.eq.s32.totalorder %v1574, 1
          %vm1591 = vcmp.eq.s32.totalorder %v1575, 1
          %vm1592 = vcmp.eq.s32.totalorder %v1576, 1
          %vm1593 = vcmp.eq.s32.totalorder %v1577, 1
          %vm1594 = vcmp.eq.s32.totalorder %v1578, 1
          %vm1595 = vcmp.eq.s32.totalorder %v1579, 1
          %vm1596 = vcmp.eq.s32.totalorder %v1580, 1
          %vm1597 = vcmp.eq.s32.totalorder %v1581, 1
          %v1598 = vsel %vm1582, %v1498, -3.4028235e+38
          %v1599 = vsel %vm1583, %v1499, -3.4028235e+38
          %v1600 = vsel %vm1584, %v1500, -3.4028235e+38
          %v1601 = vsel %vm1585, %v1501, -3.4028235e+38
          %v1602 = vsel %vm1586, %v1502, -3.4028235e+38
          %v1603 = vsel %vm1587, %v1503, -3.4028235e+38
          %v1604 = vsel %vm1588, %v1504, -3.4028235e+38
          %v1605 = vsel %vm1589, %v1505, -3.4028235e+38
          %v1606 = vsel %vm1590, %v1506, -3.4028235e+38
          %v1607 = vsel %vm1591, %v1507, -3.4028235e+38
          %v1608 = vsel %vm1592, %v1508, -3.4028235e+38
          %v1609 = vsel %vm1593, %v1509, -3.4028235e+38
          %v1610 = vsel %vm1594, %v1510, -3.4028235e+38
          %v1611 = vsel %vm1595, %v1511, -3.4028235e+38
          %v1612 = vsel %vm1596, %v1512, -3.4028235e+38
          %v1613 = vsel %vm1597, %v1513, -3.4028235e+38
          %vm1614 = vcmask 1046528
          %v1615 = vsel %vm1614, %v1598, -inf
          %v1616 = vsel %vm1614, %v1599, -inf
          %v1617 = vsel %vm1614, %v1600, -inf
          %v1618 = vsel %vm1614, %v1601, -inf
          %v1619 = vsel %vm1614, %v1602, -inf
          %v1620 = vmax.f32 %v1615, %v1619
          %v1621 = vsel %vm1614, %v1603, -inf
          %v1622 = vmax.f32 %v1616, %v1621
          %v1623 = vsel %vm1614, %v1604, -inf
          %v1624 = vmax.f32 %v1617, %v1623
          %v1625 = vsel %vm1614, %v1605, -inf
          %v1626 = vmax.f32 %v1618, %v1625
          %v1627 = vsel %vm1614, %v1606, -inf
          %v1628 = vmax.f32 %v1620, %v1627
          %v1629 = vsel %vm1614, %v1607, -inf
          %v1630 = vmax.f32 %v1622, %v1629
          %v1631 = vsel %vm1614, %v1608, -inf
          %v1632 = vmax.f32 %v1624, %v1631
          %v1633 = vsel %vm1614, %v1609, -inf
          %v1634 = vmax.f32 %v1626, %v1633
          %v1635 = vsel %vm1614, %v1610, -inf
          %v1636 = vmax.f32 %v1628, %v1635
          %v1637 = vsel %vm1614, %v1611, -inf
          %v1638 = vmax.f32 %v1630, %v1637
          %v1639 = vsel %vm1614, %v1612, -inf
          %v1640 = vmax.f32 %v1632, %v1639
          %v1641 = vsel %vm1614, %v1613, -inf
          %v1642 = vmax.f32 %v1634, %v1641
          %v1643 = vmax.f32 %v1636, %v1638
          %v1644 = vmax.f32 %v1640, %v1642
          %v1645 = vmax.f32 %v1643, %v1644
          %s1646 = sld [smem:[#allocation4 + %s458]]
          %s1647 = sld [smem:[#allocation5 + %s458]]
          %v1648 = vstv %s1646
          %vm1649 = vcmp.le.s32.totalorder %v1648, 0
          %vm1650 = vcmp.le.s32.totalorder %v1648, 1
          %vm1651 = vcmp.le.s32.totalorder %v1648, 2
          %vm1652 = vcmp.le.s32.totalorder %v1648, 3
          %vm1653 = vcmp.le.s32.totalorder %v1648, 4
          %vm1654 = vcmp.le.s32.totalorder %v1648, 5
          %vm1655 = vcmp.le.s32.totalorder %v1648, 6
          %vm1656 = vcmp.le.s32.totalorder %v1648, 7
          %vm1657 = vcmp.le.s32.totalorder %v1648, 8
          %vm1658 = vcmp.le.s32.totalorder %v1648, 9
          %vm1659 = vcmp.le.s32.totalorder %v1648, 10
          %vm1660 = vcmp.le.s32.totalorder %v1648, 11
          %vm1661 = vcmp.le.s32.totalorder %v1648, 12
          %vm1662 = vcmp.le.s32.totalorder %v1648, 13
          %vm1663 = vcmp.le.s32.totalorder %v1648, 14
          %vm1664 = vcmp.le.s32.totalorder %v1648, 15
          %v1665 = vstv %s1647
          %vm1666 = vcmp.gt.s32.totalorder %v1665, 0
          %vm1667 = vcmp.gt.s32.totalorder %v1665, 1
          %vm1668 = vcmp.gt.s32.totalorder %v1665, 2
          %vm1669 = vcmp.gt.s32.totalorder %v1665, 3
          %vm1670 = vcmp.gt.s32.totalorder %v1665, 4
          %vm1671 = vcmp.gt.s32.totalorder %v1665, 5
          %vm1672 = vcmp.gt.s32.totalorder %v1665, 6
          %vm1673 = vcmp.gt.s32.totalorder %v1665, 7
          %vm1674 = vcmp.gt.s32.totalorder %v1665, 8
          %vm1675 = vcmp.gt.s32.totalorder %v1665, 9
          %vm1676 = vcmp.gt.s32.totalorder %v1665, 10
          %vm1677 = vcmp.gt.s32.totalorder %v1665, 11
          %vm1678 = vcmp.gt.s32.totalorder %v1665, 12
          %vm1679 = vcmp.gt.s32.totalorder %v1665, 13
          %vm1680 = vcmp.gt.s32.totalorder %v1665, 14
          %vm1681 = vcmp.gt.s32.totalorder %v1665, 15
          %vm1682 = vmand %vm1649, %vm1666
          %vm1683 = vmand %vm1650, %vm1667
          %vm1684 = vmand %vm1651, %vm1668
          %vm1685 = vmand %vm1652, %vm1669
          %vm1686 = vmand %vm1653, %vm1670
          %vm1687 = vmand %vm1654, %vm1671
          %vm1688 = vmand %vm1655, %vm1672
          %vm1689 = vmand %vm1656, %vm1673
          %vm1690 = vmand %vm1657, %vm1674
          %vm1691 = vmand %vm1658, %vm1675
          %vm1692 = vmand %vm1659, %vm1676
          %vm1693 = vmand %vm1660, %vm1677
          %vm1694 = vmand %vm1661, %vm1678
          %vm1695 = vmand %vm1662, %vm1679
          %vm1696 = vmand %vm1663, %vm1680
          %vm1697 = vmand %vm1664, %vm1681
          %v1698 = vsel %vm1682, 1, 0
          %v1699 = vsel %vm1683, 1, 0
          %v1700 = vsel %vm1684, 1, 0
          %v1701 = vsel %vm1685, 1, 0
          %v1702 = vsel %vm1686, 1, 0
          %v1703 = vsel %vm1687, 1, 0
          %v1704 = vsel %vm1688, 1, 0
          %v1705 = vsel %vm1689, 1, 0
          %v1706 = vsel %vm1690, 1, 0
          %v1707 = vsel %vm1691, 1, 0
          %v1708 = vsel %vm1692, 1, 0
          %v1709 = vsel %vm1693, 1, 0
          %v1710 = vsel %vm1694, 1, 0
          %v1711 = vsel %vm1695, 1, 0
          %v1712 = vsel %vm1696, 1, 0
          %v1713 = vsel %vm1697, 1, 0
          %vm1714 = vcmp.eq.s32.totalorder %v1698, 1
          %vm1715 = vcmp.eq.s32.totalorder %v1699, 1
          %vm1716 = vcmp.eq.s32.totalorder %v1700, 1
          %vm1717 = vcmp.eq.s32.totalorder %v1701, 1
          %vm1718 = vcmp.eq.s32.totalorder %v1702, 1
          %vm1719 = vcmp.eq.s32.totalorder %v1703, 1
          %vm1720 = vcmp.eq.s32.totalorder %v1704, 1
          %vm1721 = vcmp.eq.s32.totalorder %v1705, 1
          %vm1722 = vcmp.eq.s32.totalorder %v1706, 1
          %vm1723 = vcmp.eq.s32.totalorder %v1707, 1
          %vm1724 = vcmp.eq.s32.totalorder %v1708, 1
          %vm1725 = vcmp.eq.s32.totalorder %v1709, 1
          %vm1726 = vcmp.eq.s32.totalorder %v1710, 1
          %vm1727 = vcmp.eq.s32.totalorder %v1711, 1
          %vm1728 = vcmp.eq.s32.totalorder %v1712, 1
          %vm1729 = vcmp.eq.s32.totalorder %v1713, 1
          %v1730 = vsel %vm1714, %v1498, -3.4028235e+38
          %v1731 = vsel %vm1715, %v1499, -3.4028235e+38
          %v1732 = vsel %vm1716, %v1500, -3.4028235e+38
          %v1733 = vsel %vm1717, %v1501, -3.4028235e+38
          %v1734 = vsel %vm1718, %v1502, -3.4028235e+38
          %v1735 = vsel %vm1719, %v1503, -3.4028235e+38
          %v1736 = vsel %vm1720, %v1504, -3.4028235e+38
          %v1737 = vsel %vm1721, %v1505, -3.4028235e+38
          %v1738 = vsel %vm1722, %v1506, -3.4028235e+38
          %v1739 = vsel %vm1723, %v1507, -3.4028235e+38
          %v1740 = vsel %vm1724, %v1508, -3.4028235e+38
          %v1741 = vsel %vm1725, %v1509, -3.4028235e+38
          %v1742 = vsel %vm1726, %v1510, -3.4028235e+38
          %v1743 = vsel %vm1727, %v1511, -3.4028235e+38
          %v1744 = vsel %vm1728, %v1512, -3.4028235e+38
          %v1745 = vsel %vm1729, %v1513, -3.4028235e+38
          %v1746 = vsel %vm1614, %v1730, -inf
          %v1747 = vsel %vm1614, %v1731, -inf
          %v1748 = vsel %vm1614, %v1732, -inf
          %v1749 = vsel %vm1614, %v1733, -inf
          %v1750 = vsel %vm1614, %v1734, -inf
          %v1751 = vmax.f32 %v1746, %v1750
          %v1752 = vsel %vm1614, %v1735, -inf
          %v1753 = vmax.f32 %v1747, %v1752
          %v1754 = vsel %vm1614, %v1736, -inf
          %v1755 = vmax.f32 %v1748, %v1754
          %v1756 = vsel %vm1614, %v1737, -inf
          %v1757 = vmax.f32 %v1749, %v1756
          %v1758 = vsel %vm1614, %v1738, -inf
          %v1759 = vmax.f32 %v1751, %v1758
          %v1760 = vsel %vm1614, %v1739, -inf
          %v1761 = vmax.f32 %v1753, %v1760
          %v1762 = vsel %vm1614, %v1740, -inf
          %v1763 = vmax.f32 %v1755, %v1762
          %v1764 = vsel %vm1614, %v1741, -inf
          %v1765 = vmax.f32 %v1757, %v1764
          %v1766 = vsel %vm1614, %v1742, -inf
          %v1767 = vmax.f32 %v1759, %v1766
          %v1768 = vsel %vm1614, %v1743, -inf
          %v1769 = vmax.f32 %v1761, %v1768
          %v1770 = vsel %vm1614, %v1744, -inf
          %v1771 = vmax.f32 %v1763, %v1770
          %v1772 = vsel %vm1614, %v1745, -inf
          %v1773 = vmax.f32 %v1765, %v1772
          %v1774 = vmax.f32 %v1767, %v1769
          %v1775 = vmax.f32 %v1771, %v1773
          %v1776 = vmax.f32 %v1774, %v1775
          %s1777 = sld [smem:[#allocation4 + %s617]]
          %s1778 = sld [smem:[#allocation5 + %s617]]
          %v1779 = vstv %s1777
          %vm1780 = vcmp.le.s32.totalorder %v1779, 0
          %vm1781 = vcmp.le.s32.totalorder %v1779, 1
          %vm1782 = vcmp.le.s32.totalorder %v1779, 2
          %vm1783 = vcmp.le.s32.totalorder %v1779, 3
          %vm1784 = vcmp.le.s32.totalorder %v1779, 4
          %vm1785 = vcmp.le.s32.totalorder %v1779, 5
          %vm1786 = vcmp.le.s32.totalorder %v1779, 6
          %vm1787 = vcmp.le.s32.totalorder %v1779, 7
          %vm1788 = vcmp.le.s32.totalorder %v1779, 8
          %vm1789 = vcmp.le.s32.totalorder %v1779, 9
          %vm1790 = vcmp.le.s32.totalorder %v1779, 10
          %vm1791 = vcmp.le.s32.totalorder %v1779, 11
          %vm1792 = vcmp.le.s32.totalorder %v1779, 12
          %vm1793 = vcmp.le.s32.totalorder %v1779, 13
          %vm1794 = vcmp.le.s32.totalorder %v1779, 14
          %vm1795 = vcmp.le.s32.totalorder %v1779, 15
          %v1796 = vstv %s1778
          %vm1797 = vcmp.gt.s32.totalorder %v1796, 0
          %vm1798 = vcmp.gt.s32.totalorder %v1796, 1
          %vm1799 = vcmp.gt.s32.totalorder %v1796, 2
          %vm1800 = vcmp.gt.s32.totalorder %v1796, 3
          %vm1801 = vcmp.gt.s32.totalorder %v1796, 4
          %vm1802 = vcmp.gt.s32.totalorder %v1796, 5
          %vm1803 = vcmp.gt.s32.totalorder %v1796, 6
          %vm1804 = vcmp.gt.s32.totalorder %v1796, 7
          %vm1805 = vcmp.gt.s32.totalorder %v1796, 8
          %vm1806 = vcmp.gt.s32.totalorder %v1796, 9
          %vm1807 = vcmp.gt.s32.totalorder %v1796, 10
          %vm1808 = vcmp.gt.s32.totalorder %v1796, 11
          %vm1809 = vcmp.gt.s32.totalorder %v1796, 12
          %vm1810 = vcmp.gt.s32.totalorder %v1796, 13
          %vm1811 = vcmp.gt.s32.totalorder %v1796, 14
          %vm1812 = vcmp.gt.s32.totalorder %v1796, 15
          %vm1813 = vmand %vm1780, %vm1797
          %vm1814 = vmand %vm1781, %vm1798
          %vm1815 = vmand %vm1782, %vm1799
          %vm1816 = vmand %vm1783, %vm1800
          %vm1817 = vmand %vm1784, %vm1801
          %vm1818 = vmand %vm1785, %vm1802
          %vm1819 = vmand %vm1786, %vm1803
          %vm1820 = vmand %vm1787, %vm1804
          %vm1821 = vmand %vm1788, %vm1805
          %vm1822 = vmand %vm1789, %vm1806
          %vm1823 = vmand %vm1790, %vm1807
          %vm1824 = vmand %vm1791, %vm1808
          %vm1825 = vmand %vm1792, %vm1809
          %vm1826 = vmand %vm1793, %vm1810
          %vm1827 = vmand %vm1794, %vm1811
          %vm1828 = vmand %vm1795, %vm1812
          %v1829 = vsel %vm1813, 1, 0
          %v1830 = vsel %vm1814, 1, 0
          %v1831 = vsel %vm1815, 1, 0
          %v1832 = vsel %vm1816, 1, 0
          %v1833 = vsel %vm1817, 1, 0
          %v1834 = vsel %vm1818, 1, 0
          %v1835 = vsel %vm1819, 1, 0
          %v1836 = vsel %vm1820, 1, 0
          %v1837 = vsel %vm1821, 1, 0
          %v1838 = vsel %vm1822, 1, 0
          %v1839 = vsel %vm1823, 1, 0
          %v1840 = vsel %vm1824, 1, 0
          %v1841 = vsel %vm1825, 1, 0
          %v1842 = vsel %vm1826, 1, 0
          %v1843 = vsel %vm1827, 1, 0
          %v1844 = vsel %vm1828, 1, 0
          %vm1845 = vcmp.eq.s32.totalorder %v1829, 1
          %vm1846 = vcmp.eq.s32.totalorder %v1830, 1
          %vm1847 = vcmp.eq.s32.totalorder %v1831, 1
          %vm1848 = vcmp.eq.s32.totalorder %v1832, 1
          %vm1849 = vcmp.eq.s32.totalorder %v1833, 1
          %vm1850 = vcmp.eq.s32.totalorder %v1834, 1
          %vm1851 = vcmp.eq.s32.totalorder %v1835, 1
          %vm1852 = vcmp.eq.s32.totalorder %v1836, 1
          %vm1853 = vcmp.eq.s32.totalorder %v1837, 1
          %vm1854 = vcmp.eq.s32.totalorder %v1838, 1
          %vm1855 = vcmp.eq.s32.totalorder %v1839, 1
          %vm1856 = vcmp.eq.s32.totalorder %v1840, 1
          %vm1857 = vcmp.eq.s32.totalorder %v1841, 1
          %vm1858 = vcmp.eq.s32.totalorder %v1842, 1
          %vm1859 = vcmp.eq.s32.totalorder %v1843, 1
          %vm1860 = vcmp.eq.s32.totalorder %v1844, 1
          %v1861 = vsel %vm1845, %v1498, -3.4028235e+38
          %v1862 = vsel %vm1846, %v1499, -3.4028235e+38
          %v1863 = vsel %vm1847, %v1500, -3.4028235e+38
          %v1864 = vsel %vm1848, %v1501, -3.4028235e+38
          %v1865 = vsel %vm1849, %v1502, -3.4028235e+38
          %v1866 = vsel %vm1850, %v1503, -3.4028235e+38
          %v1867 = vsel %vm1851, %v1504, -3.4028235e+38
          %v1868 = vsel %vm1852, %v1505, -3.4028235e+38
          %v1869 = vsel %vm1853, %v1506, -3.4028235e+38
          %v1870 = vsel %vm1854, %v1507, -3.4028235e+38
          %v1871 = vsel %vm1855, %v1508, -3.4028235e+38
          %v1872 = vsel %vm1856, %v1509, -3.4028235e+38
          %v1873 = vsel %vm1857, %v1510, -3.4028235e+38
          %v1874 = vsel %vm1858, %v1511, -3.4028235e+38
          %v1875 = vsel %vm1859, %v1512, -3.4028235e+38
          %v1876 = vsel %vm1860, %v1513, -3.4028235e+38
          %v1877 = vsel %vm1614, %v1861, -inf
          %v1878 = vsel %vm1614, %v1862, -inf
          %v1879 = vsel %vm1614, %v1863, -inf
          %v1880 = vsel %vm1614, %v1864, -inf
          %v1881 = vsel %vm1614, %v1865, -inf
          %v1882 = vmax.f32 %v1877, %v1881
          %v1883 = vsel %vm1614, %v1866, -inf
          %v1884 = vmax.f32 %v1878, %v1883
          %v1885 = vsel %vm1614, %v1867, -inf
          %v1886 = vmax.f32 %v1879, %v1885
          %v1887 = vsel %vm1614, %v1868, -inf
          %v1888 = vmax.f32 %v1880, %v1887
          %v1889 = vsel %vm1614, %v1869, -inf
          %v1890 = vmax.f32 %v1882, %v1889
          %v1891 = vsel %vm1614, %v1870, -inf
          %v1892 = vmax.f32 %v1884, %v1891
          %v1893 = vsel %vm1614, %v1871, -inf
          %v1894 = vmax.f32 %v1886, %v1893
          %v1895 = vsel %vm1614, %v1872, -inf
          %v1896 = vmax.f32 %v1888, %v1895
          %v1897 = vsel %vm1614, %v1873, -inf
          %v1898 = vmax.f32 %v1890, %v1897
          %v1899 = vsel %vm1614, %v1874, -inf
          %v1900 = vmax.f32 %v1892, %v1899
          %v1901 = vsel %vm1614, %v1875, -inf
          %v1902 = vmax.f32 %v1894, %v1901
          %v1903 = vsel %vm1614, %v1876, -inf
          %v1904 = vmax.f32 %v1896, %v1903
          %v1905 = vmax.f32 %v1898, %v1900
          %v1906 = vmax.f32 %v1902, %v1904
          %v1907 = vmax.f32 %v1905, %v1906
          %s1908 = sld [smem:[#allocation4 + %s776]]
          %s1909 = sld [smem:[#allocation5 + %s776]]
          %v1910 = vstv %s1908
          %vm1911 = vcmp.le.s32.totalorder %v1910, 0
          %vm1912 = vcmp.le.s32.totalorder %v1910, 1
          %vm1913 = vcmp.le.s32.totalorder %v1910, 2
          %vm1914 = vcmp.le.s32.totalorder %v1910, 3
          %vm1915 = vcmp.le.s32.totalorder %v1910, 4
          %vm1916 = vcmp.le.s32.totalorder %v1910, 5
          %vm1917 = vcmp.le.s32.totalorder %v1910, 6
          %vm1918 = vcmp.le.s32.totalorder %v1910, 7
          %vm1919 = vcmp.le.s32.totalorder %v1910, 8
          %vm1920 = vcmp.le.s32.totalorder %v1910, 9
          %vm1921 = vcmp.le.s32.totalorder %v1910, 10
          %vm1922 = vcmp.le.s32.totalorder %v1910, 11
          %vm1923 = vcmp.le.s32.totalorder %v1910, 12
          %vm1924 = vcmp.le.s32.totalorder %v1910, 13
          %vm1925 = vcmp.le.s32.totalorder %v1910, 14
          %vm1926 = vcmp.le.s32.totalorder %v1910, 15
          %v1927 = vstv %s1909
          %vm1928 = vcmp.gt.s32.totalorder %v1927, 0
          %vm1929 = vcmp.gt.s32.totalorder %v1927, 1
          %vm1930 = vcmp.gt.s32.totalorder %v1927, 2
          %vm1931 = vcmp.gt.s32.totalorder %v1927, 3
          %vm1932 = vcmp.gt.s32.totalorder %v1927, 4
          %vm1933 = vcmp.gt.s32.totalorder %v1927, 5
          %vm1934 = vcmp.gt.s32.totalorder %v1927, 6
          %vm1935 = vcmp.gt.s32.totalorder %v1927, 7
          %vm1936 = vcmp.gt.s32.totalorder %v1927, 8
          %vm1937 = vcmp.gt.s32.totalorder %v1927, 9
          %vm1938 = vcmp.gt.s32.totalorder %v1927, 10
          %vm1939 = vcmp.gt.s32.totalorder %v1927, 11
          %vm1940 = vcmp.gt.s32.totalorder %v1927, 12
          %vm1941 = vcmp.gt.s32.totalorder %v1927, 13
          %vm1942 = vcmp.gt.s32.totalorder %v1927, 14
          %vm1943 = vcmp.gt.s32.totalorder %v1927, 15
          %vm1944 = vmand %vm1911, %vm1928
          %vm1945 = vmand %vm1912, %vm1929
          %vm1946 = vmand %vm1913, %vm1930
          %vm1947 = vmand %vm1914, %vm1931
          %vm1948 = vmand %vm1915, %vm1932
          %vm1949 = vmand %vm1916, %vm1933
          %vm1950 = vmand %vm1917, %vm1934
          %vm1951 = vmand %vm1918, %vm1935
          %vm1952 = vmand %vm1919, %vm1936
          %vm1953 = vmand %vm1920, %vm1937
          %vm1954 = vmand %vm1921, %vm1938
          %vm1955 = vmand %vm1922, %vm1939
          %vm1956 = vmand %vm1923, %vm1940
          %vm1957 = vmand %vm1924, %vm1941
          %vm1958 = vmand %vm1925, %vm1942
          %vm1959 = vmand %vm1926, %vm1943
          %v1960 = vsel %vm1944, 1, 0
          %v1961 = vsel %vm1945, 1, 0
          %v1962 = vsel %vm1946, 1, 0
          %v1963 = vsel %vm1947, 1, 0
          %v1964 = vsel %vm1948, 1, 0
          %v1965 = vsel %vm1949, 1, 0
          %v1966 = vsel %vm1950, 1, 0
          %v1967 = vsel %vm1951, 1, 0
          %v1968 = vsel %vm1952, 1, 0
          %v1969 = vsel %vm1953, 1, 0
          %v1970 = vsel %vm1954, 1, 0
          %v1971 = vsel %vm1955, 1, 0
          %v1972 = vsel %vm1956, 1, 0
          %v1973 = vsel %vm1957, 1, 0
          %v1974 = vsel %vm1958, 1, 0
          %v1975 = vsel %vm1959, 1, 0
          %vm1976 = vcmp.eq.s32.totalorder %v1960, 1
          %vm1977 = vcmp.eq.s32.totalorder %v1961, 1
          %vm1978 = vcmp.eq.s32.totalorder %v1962, 1
          %vm1979 = vcmp.eq.s32.totalorder %v1963, 1
          %vm1980 = vcmp.eq.s32.totalorder %v1964, 1
          %vm1981 = vcmp.eq.s32.totalorder %v1965, 1
          %vm1982 = vcmp.eq.s32.totalorder %v1966, 1
          %vm1983 = vcmp.eq.s32.totalorder %v1967, 1
          %vm1984 = vcmp.eq.s32.totalorder %v1968, 1
          %vm1985 = vcmp.eq.s32.totalorder %v1969, 1
          %vm1986 = vcmp.eq.s32.totalorder %v1970, 1
          %vm1987 = vcmp.eq.s32.totalorder %v1971, 1
          %vm1988 = vcmp.eq.s32.totalorder %v1972, 1
          %vm1989 = vcmp.eq.s32.totalorder %v1973, 1
          %vm1990 = vcmp.eq.s32.totalorder %v1974, 1
          %vm1991 = vcmp.eq.s32.totalorder %v1975, 1
          %v1992 = vsel %vm1976, %v1498, -3.4028235e+38
          %v1993 = vsel %vm1977, %v1499, -3.4028235e+38
          %v1994 = vsel %vm1978, %v1500, -3.4028235e+38
          %v1995 = vsel %vm1979, %v1501, -3.4028235e+38
          %v1996 = vsel %vm1980, %v1502, -3.4028235e+38
          %v1997 = vsel %vm1981, %v1503, -3.4028235e+38
          %v1998 = vsel %vm1982, %v1504, -3.4028235e+38
          %v1999 = vsel %vm1983, %v1505, -3.4028235e+38
          %v2000 = vsel %vm1984, %v1506, -3.4028235e+38
          %v2001 = vsel %vm1985, %v1507, -3.4028235e+38
          %v2002 = vsel %vm1986, %v1508, -3.4028235e+38
          %v2003 = vsel %vm1987, %v1509, -3.4028235e+38
          %v2004 = vsel %vm1988, %v1510, -3.4028235e+38
          %v2005 = vsel %vm1989, %v1511, -3.4028235e+38
          %v2006 = vsel %vm1990, %v1512, -3.4028235e+38
          %v2007 = vsel %vm1991, %v1513, -3.4028235e+38
          %v2008 = vsel %vm1614, %v1992, -inf
          %v2009 = vsel %vm1614, %v1993, -inf
          %v2010 = vsel %vm1614, %v1994, -inf
          %v2011 = vsel %vm1614, %v1995, -inf
          %v2012 = vsel %vm1614, %v1996, -inf
          %v2013 = vmax.f32 %v2008, %v2012
          %v2014 = vsel %vm1614, %v1997, -inf
          %v2015 = vmax.f32 %v2009, %v2014
          %v2016 = vsel %vm1614, %v1998, -inf
          %v2017 = vmax.f32 %v2010, %v2016
          %v2018 = vsel %vm1614, %v1999, -inf
          %v2019 = vmax.f32 %v2011, %v2018
          %v2020 = vsel %vm1614, %v2000, -inf
          %v2021 = vmax.f32 %v2013, %v2020
          %v2022 = vsel %vm1614, %v2001, -inf
          %v2023 = vmax.f32 %v2015, %v2022
          %v2024 = vsel %vm1614, %v2002, -inf
          %v2025 = vmax.f32 %v2017, %v2024
          %v2026 = vsel %vm1614, %v2003, -inf
          %v2027 = vmax.f32 %v2019, %v2026
          %v2028 = vsel %vm1614, %v2004, -inf
          %v2029 = vmax.f32 %v2021, %v2028
          %v2030 = vsel %vm1614, %v2005, -inf
          %v2031 = vmax.f32 %v2023, %v2030
          %v2032 = vsel %vm1614, %v2006, -inf
          %v2033 = vmax.f32 %v2025, %v2032
          %v2034 = vsel %vm1614, %v2007, -inf
          %v2035 = vmax.f32 %v2027, %v2034
          %v2036 = vmax.f32 %v2029, %v2031
          %v2037 = vmax.f32 %v2033, %v2035
          %v2038 = vmax.f32 %v2036, %v2037
          %s2039 = sld [smem:[#allocation4 + %s935]]
          %s2040 = sld [smem:[#allocation5 + %s935]]
          %v2041 = vstv %s2039
          %vm2042 = vcmp.le.s32.totalorder %v2041, 0
          %vm2043 = vcmp.le.s32.totalorder %v2041, 1
          %vm2044 = vcmp.le.s32.totalorder %v2041, 2
          %vm2045 = vcmp.le.s32.totalorder %v2041, 3
          %vm2046 = vcmp.le.s32.totalorder %v2041, 4
          %vm2047 = vcmp.le.s32.totalorder %v2041, 5
          %vm2048 = vcmp.le.s32.totalorder %v2041, 6
          %vm2049 = vcmp.le.s32.totalorder %v2041, 7
          %vm2050 = vcmp.le.s32.totalorder %v2041, 8
          %vm2051 = vcmp.le.s32.totalorder %v2041, 9
          %vm2052 = vcmp.le.s32.totalorder %v2041, 10
          %vm2053 = vcmp.le.s32.totalorder %v2041, 11
          %vm2054 = vcmp.le.s32.totalorder %v2041, 12
          %vm2055 = vcmp.le.s32.totalorder %v2041, 13
          %vm2056 = vcmp.le.s32.totalorder %v2041, 14
          %vm2057 = vcmp.le.s32.totalorder %v2041, 15
          %v2058 = vstv %s2040
          %vm2059 = vcmp.gt.s32.totalorder %v2058, 0
          %vm2060 = vcmp.gt.s32.totalorder %v2058, 1
          %vm2061 = vcmp.gt.s32.totalorder %v2058, 2
          %vm2062 = vcmp.gt.s32.totalorder %v2058, 3
          %vm2063 = vcmp.gt.s32.totalorder %v2058, 4
          %vm2064 = vcmp.gt.s32.totalorder %v2058, 5
          %vm2065 = vcmp.gt.s32.totalorder %v2058, 6
          %vm2066 = vcmp.gt.s32.totalorder %v2058, 7
          %vm2067 = vcmp.gt.s32.totalorder %v2058, 8
          %vm2068 = vcmp.gt.s32.totalorder %v2058, 9
          %vm2069 = vcmp.gt.s32.totalorder %v2058, 10
          %vm2070 = vcmp.gt.s32.totalorder %v2058, 11
          %vm2071 = vcmp.gt.s32.totalorder %v2058, 12
          %vm2072 = vcmp.gt.s32.totalorder %v2058, 13
          %vm2073 = vcmp.gt.s32.totalorder %v2058, 14
          %vm2074 = vcmp.gt.s32.totalorder %v2058, 15
          %vm2075 = vmand %vm2042, %vm2059
          %vm2076 = vmand %vm2043, %vm2060
          %vm2077 = vmand %vm2044, %vm2061
          %vm2078 = vmand %vm2045, %vm2062
          %vm2079 = vmand %vm2046, %vm2063
          %vm2080 = vmand %vm2047, %vm2064
          %vm2081 = vmand %vm2048, %vm2065
          %vm2082 = vmand %vm2049, %vm2066
          %vm2083 = vmand %vm2050, %vm2067
          %vm2084 = vmand %vm2051, %vm2068
          %vm2085 = vmand %vm2052, %vm2069
          %vm2086 = vmand %vm2053, %vm2070
          %vm2087 = vmand %vm2054, %vm2071
          %vm2088 = vmand %vm2055, %vm2072
          %vm2089 = vmand %vm2056, %vm2073
          %vm2090 = vmand %vm2057, %vm2074
          %v2091 = vsel %vm2075, 1, 0
          %v2092 = vsel %vm2076, 1, 0
          %v2093 = vsel %vm2077, 1, 0
          %v2094 = vsel %vm2078, 1, 0
          %v2095 = vsel %vm2079, 1, 0
          %v2096 = vsel %vm2080, 1, 0
          %v2097 = vsel %vm2081, 1, 0
          %v2098 = vsel %vm2082, 1, 0
          %v2099 = vsel %vm2083, 1, 0
          %v2100 = vsel %vm2084, 1, 0
          %v2101 = vsel %vm2085, 1, 0
          %v2102 = vsel %vm2086, 1, 0
          %v2103 = vsel %vm2087, 1, 0
          %v2104 = vsel %vm2088, 1, 0
          %v2105 = vsel %vm2089, 1, 0
          %v2106 = vsel %vm2090, 1, 0
          %vm2107 = vcmp.eq.s32.totalorder %v2091, 1
          %vm2108 = vcmp.eq.s32.totalorder %v2092, 1
          %vm2109 = vcmp.eq.s32.totalorder %v2093, 1
          %vm2110 = vcmp.eq.s32.totalorder %v2094, 1
          %vm2111 = vcmp.eq.s32.totalorder %v2095, 1
          %vm2112 = vcmp.eq.s32.totalorder %v2096, 1
          %vm2113 = vcmp.eq.s32.totalorder %v2097, 1
          %vm2114 = vcmp.eq.s32.totalorder %v2098, 1
          %vm2115 = vcmp.eq.s32.totalorder %v2099, 1
          %vm2116 = vcmp.eq.s32.totalorder %v2100, 1
          %vm2117 = vcmp.eq.s32.totalorder %v2101, 1
          %vm2118 = vcmp.eq.s32.totalorder %v2102, 1
          %vm2119 = vcmp.eq.s32.totalorder %v2103, 1
          %vm2120 = vcmp.eq.s32.totalorder %v2104, 1
          %vm2121 = vcmp.eq.s32.totalorder %v2105, 1
          %vm2122 = vcmp.eq.s32.totalorder %v2106, 1
          %v2123 = vsel %vm2107, %v1498, -3.4028235e+38
          %v2124 = vsel %vm2108, %v1499, -3.4028235e+38
          %v2125 = vsel %vm2109, %v1500, -3.4028235e+38
          %v2126 = vsel %vm2110, %v1501, -3.4028235e+38
          %v2127 = vsel %vm2111, %v1502, -3.4028235e+38
          %v2128 = vsel %vm2112, %v1503, -3.4028235e+38
          %v2129 = vsel %vm2113, %v1504, -3.4028235e+38
          %v2130 = vsel %vm2114, %v1505, -3.4028235e+38
          %v2131 = vsel %vm2115, %v1506, -3.4028235e+38
          %v2132 = vsel %vm2116, %v1507, -3.4028235e+38
          %v2133 = vsel %vm2117, %v1508, -3.4028235e+38
          %v2134 = vsel %vm2118, %v1509, -3.4028235e+38
          %v2135 = vsel %vm2119, %v1510, -3.4028235e+38
          %v2136 = vsel %vm2120, %v1511, -3.4028235e+38
          %v2137 = vsel %vm2121, %v1512, -3.4028235e+38
          %v2138 = vsel %vm2122, %v1513, -3.4028235e+38
          %v2139 = vsel %vm1614, %v2123, -inf
          %v2140 = vsel %vm1614, %v2124, -inf
          %v2141 = vsel %vm1614, %v2125, -inf
          %v2142 = vsel %vm1614, %v2126, -inf
          %v2143 = vsel %vm1614, %v2127, -inf
          %v2144 = vmax.f32 %v2139, %v2143
          %v2145 = vsel %vm1614, %v2128, -inf
          %v2146 = vmax.f32 %v2140, %v2145
          %v2147 = vsel %vm1614, %v2129, -inf
          %v2148 = vmax.f32 %v2141, %v2147
          %v2149 = vsel %vm1614, %v2130, -inf
          %v2150 = vmax.f32 %v2142, %v2149
          %v2151 = vsel %vm1614, %v2131, -inf
          %v2152 = vmax.f32 %v2144, %v2151
          %v2153 = vsel %vm1614, %v2132, -inf
          %v2154 = vmax.f32 %v2146, %v2153
          %v2155 = vsel %vm1614, %v2133, -inf
          %v2156 = vmax.f32 %v2148, %v2155
          %v2157 = vsel %vm1614, %v2134, -inf
          %v2158 = vmax.f32 %v2150, %v2157
          %v2159 = vsel %vm1614, %v2135, -inf
          %v2160 = vmax.f32 %v2152, %v2159
          %v2161 = vsel %vm1614, %v2136, -inf
          %v2162 = vmax.f32 %v2154, %v2161
          %v2163 = vsel %vm1614, %v2137, -inf
          %v2164 = vmax.f32 %v2156, %v2163
          %v2165 = vsel %vm1614, %v2138, -inf
          %v2166 = vmax.f32 %v2158, %v2165
          %v2167 = vmax.f32 %v2160, %v2162
          %v2168 = vmax.f32 %v2164, %v2166
          %v2169 = vmax.f32 %v2167, %v2168
          %s2170 = sld [smem:[#allocation4 + %s1094]]
          %s2171 = sld [smem:[#allocation5 + %s1094]]
          %v2172 = vstv %s2170
          %vm2173 = vcmp.le.s32.totalorder %v2172, 0
          %vm2174 = vcmp.le.s32.totalorder %v2172, 1
          %vm2175 = vcmp.le.s32.totalorder %v2172, 2
          %vm2176 = vcmp.le.s32.totalorder %v2172, 3
          %vm2177 = vcmp.le.s32.totalorder %v2172, 4
          %vm2178 = vcmp.le.s32.totalorder %v2172, 5
          %vm2179 = vcmp.le.s32.totalorder %v2172, 6
          %vm2180 = vcmp.le.s32.totalorder %v2172, 7
          %vm2181 = vcmp.le.s32.totalorder %v2172, 8
          %vm2182 = vcmp.le.s32.totalorder %v2172, 9
          %vm2183 = vcmp.le.s32.totalorder %v2172, 10
          %vm2184 = vcmp.le.s32.totalorder %v2172, 11
          %vm2185 = vcmp.le.s32.totalorder %v2172, 12
          %vm2186 = vcmp.le.s32.totalorder %v2172, 13
          %vm2187 = vcmp.le.s32.totalorder %v2172, 14
          %vm2188 = vcmp.le.s32.totalorder %v2172, 15
          %v2189 = vstv %s2171
          %vm2190 = vcmp.gt.s32.totalorder %v2189, 0
          %vm2191 = vcmp.gt.s32.totalorder %v2189, 1
          %vm2192 = vcmp.gt.s32.totalorder %v2189, 2
          %vm2193 = vcmp.gt.s32.totalorder %v2189, 3
          %vm2194 = vcmp.gt.s32.totalorder %v2189, 4
          %vm2195 = vcmp.gt.s32.totalorder %v2189, 5
          %vm2196 = vcmp.gt.s32.totalorder %v2189, 6
          %vm2197 = vcmp.gt.s32.totalorder %v2189, 7
          %vm2198 = vcmp.gt.s32.totalorder %v2189, 8
          %vm2199 = vcmp.gt.s32.totalorder %v2189, 9
          %vm2200 = vcmp.gt.s32.totalorder %v2189, 10
          %vm2201 = vcmp.gt.s32.totalorder %v2189, 11
          %vm2202 = vcmp.gt.s32.totalorder %v2189, 12
          %vm2203 = vcmp.gt.s32.totalorder %v2189, 13
          %vm2204 = vcmp.gt.s32.totalorder %v2189, 14
          %vm2205 = vcmp.gt.s32.totalorder %v2189, 15
          %vm2206 = vmand %vm2173, %vm2190
          %vm2207 = vmand %vm2174, %vm2191
          %vm2208 = vmand %vm2175, %vm2192
          %vm2209 = vmand %vm2176, %vm2193
          %vm2210 = vmand %vm2177, %vm2194
          %vm2211 = vmand %vm2178, %vm2195
          %vm2212 = vmand %vm2179, %vm2196
          %vm2213 = vmand %vm2180, %vm2197
          %vm2214 = vmand %vm2181, %vm2198
          %vm2215 = vmand %vm2182, %vm2199
          %vm2216 = vmand %vm2183, %vm2200
          %vm2217 = vmand %vm2184, %vm2201
          %vm2218 = vmand %vm2185, %vm2202
          %vm2219 = vmand %vm2186, %vm2203
          %vm2220 = vmand %vm2187, %vm2204
          %vm2221 = vmand %vm2188, %vm2205
          %v2222 = vsel %vm2206, 1, 0
          %v2223 = vsel %vm2207, 1, 0
          %v2224 = vsel %vm2208, 1, 0
          %v2225 = vsel %vm2209, 1, 0
          %v2226 = vsel %vm2210, 1, 0
          %v2227 = vsel %vm2211, 1, 0
          %v2228 = vsel %vm2212, 1, 0
          %v2229 = vsel %vm2213, 1, 0
          %v2230 = vsel %vm2214, 1, 0
          %v2231 = vsel %vm2215, 1, 0
          %v2232 = vsel %vm2216, 1, 0
          %v2233 = vsel %vm2217, 1, 0
          %v2234 = vsel %vm2218, 1, 0
          %v2235 = vsel %vm2219, 1, 0
          %v2236 = vsel %vm2220, 1, 0
          %v2237 = vsel %vm2221, 1, 0
          %vm2238 = vcmp.eq.s32.totalorder %v2222, 1
          %vm2239 = vcmp.eq.s32.totalorder %v2223, 1
          %vm2240 = vcmp.eq.s32.totalorder %v2224, 1
          %vm2241 = vcmp.eq.s32.totalorder %v2225, 1
          %vm2242 = vcmp.eq.s32.totalorder %v2226, 1
          %vm2243 = vcmp.eq.s32.totalorder %v2227, 1
          %vm2244 = vcmp.eq.s32.totalorder %v2228, 1
          %vm2245 = vcmp.eq.s32.totalorder %v2229, 1
          %vm2246 = vcmp.eq.s32.totalorder %v2230, 1
          %vm2247 = vcmp.eq.s32.totalorder %v2231, 1
          %vm2248 = vcmp.eq.s32.totalorder %v2232, 1
          %vm2249 = vcmp.eq.s32.totalorder %v2233, 1
          %vm2250 = vcmp.eq.s32.totalorder %v2234, 1
          %vm2251 = vcmp.eq.s32.totalorder %v2235, 1
          %vm2252 = vcmp.eq.s32.totalorder %v2236, 1
          %vm2253 = vcmp.eq.s32.totalorder %v2237, 1
          %v2254 = vsel %vm2238, %v1498, -3.4028235e+38
          %v2255 = vsel %vm2239, %v1499, -3.4028235e+38
          %v2256 = vsel %vm2240, %v1500, -3.4028235e+38
          %v2257 = vsel %vm2241, %v1501, -3.4028235e+38
          %v2258 = vsel %vm2242, %v1502, -3.4028235e+38
          %v2259 = vsel %vm2243, %v1503, -3.4028235e+38
          %v2260 = vsel %vm2244, %v1504, -3.4028235e+38
          %v2261 = vsel %vm2245, %v1505, -3.4028235e+38
          %v2262 = vsel %vm2246, %v1506, -3.4028235e+38
          %v2263 = vsel %vm2247, %v1507, -3.4028235e+38
          %v2264 = vsel %vm2248, %v1508, -3.4028235e+38
          %v2265 = vsel %vm2249, %v1509, -3.4028235e+38
          %v2266 = vsel %vm2250, %v1510, -3.4028235e+38
          %v2267 = vsel %vm2251, %v1511, -3.4028235e+38
          %v2268 = vsel %vm2252, %v1512, -3.4028235e+38
          %v2269 = vsel %vm2253, %v1513, -3.4028235e+38
          %v2270 = vsel %vm1614, %v2254, -inf
          %v2271 = vsel %vm1614, %v2255, -inf
          %v2272 = vsel %vm1614, %v2256, -inf
          %v2273 = vsel %vm1614, %v2257, -inf
          %v2274 = vsel %vm1614, %v2258, -inf
          %v2275 = vmax.f32 %v2270, %v2274
          %v2276 = vsel %vm1614, %v2259, -inf
          %v2277 = vmax.f32 %v2271, %v2276
          %v2278 = vsel %vm1614, %v2260, -inf
          %v2279 = vmax.f32 %v2272, %v2278
          %v2280 = vsel %vm1614, %v2261, -inf
          %v2281 = vmax.f32 %v2273, %v2280
          %v2282 = vsel %vm1614, %v2262, -inf
          %v2283 = vmax.f32 %v2275, %v2282
          %v2284 = vsel %vm1614, %v2263, -inf
          %v2285 = vmax.f32 %v2277, %v2284
          %v2286 = vsel %vm1614, %v2264, -inf
          %v2287 = vmax.f32 %v2279, %v2286
          %v2288 = vsel %vm1614, %v2265, -inf
          %v2289 = vmax.f32 %v2281, %v2288
          %v2290 = vsel %vm1614, %v2266, -inf
          %v2291 = vmax.f32 %v2283, %v2290
          %v2292 = vsel %vm1614, %v2267, -inf
          %v2293 = vmax.f32 %v2285, %v2292
          %v2294 = vsel %vm1614, %v2268, -inf
          %v2295 = vmax.f32 %v2287, %v2294
          %v2296 = vsel %vm1614, %v2269, -inf
          %v2297 = vmax.f32 %v2289, %v2296
          %v2298 = vmax.f32 %v2291, %v2293
          %v2299 = vmax.f32 %v2295, %v2297
          %v2300 = vmax.f32 %v2298, %v2299
          %s2301 = sld [smem:[#allocation4 + %s1253]]
          %s2302 = sld [smem:[#allocation5 + %s1253]]
          %v2303 = vstv %s2301
          %vm2304 = vcmp.le.s32.totalorder %v2303, 0
          %vm2305 = vcmp.le.s32.totalorder %v2303, 1
          %vm2306 = vcmp.le.s32.totalorder %v2303, 2
          %vm2307 = vcmp.le.s32.totalorder %v2303, 3
          %vm2308 = vcmp.le.s32.totalorder %v2303, 4
          %vm2309 = vcmp.le.s32.totalorder %v2303, 5
          %vm2310 = vcmp.le.s32.totalorder %v2303, 6
          %vm2311 = vcmp.le.s32.totalorder %v2303, 7
          %vm2312 = vcmp.le.s32.totalorder %v2303, 8
          %vm2313 = vcmp.le.s32.totalorder %v2303, 9
          %vm2314 = vcmp.le.s32.totalorder %v2303, 10
          %vm2315 = vcmp.le.s32.totalorder %v2303, 11
          %vm2316 = vcmp.le.s32.totalorder %v2303, 12
          %vm2317 = vcmp.le.s32.totalorder %v2303, 13
          %vm2318 = vcmp.le.s32.totalorder %v2303, 14
          %vm2319 = vcmp.le.s32.totalorder %v2303, 15
          %v2320 = vstv %s2302
          %vm2321 = vcmp.gt.s32.totalorder %v2320, 0
          %vm2322 = vcmp.gt.s32.totalorder %v2320, 1
          %vm2323 = vcmp.gt.s32.totalorder %v2320, 2
          %vm2324 = vcmp.gt.s32.totalorder %v2320, 3
          %vm2325 = vcmp.gt.s32.totalorder %v2320, 4
          %vm2326 = vcmp.gt.s32.totalorder %v2320, 5
          %vm2327 = vcmp.gt.s32.totalorder %v2320, 6
          %vm2328 = vcmp.gt.s32.totalorder %v2320, 7
          %vm2329 = vcmp.gt.s32.totalorder %v2320, 8
          %vm2330 = vcmp.gt.s32.totalorder %v2320, 9
          %vm2331 = vcmp.gt.s32.totalorder %v2320, 10
          %vm2332 = vcmp.gt.s32.totalorder %v2320, 11
          %vm2333 = vcmp.gt.s32.totalorder %v2320, 12
          %vm2334 = vcmp.gt.s32.totalorder %v2320, 13
          %vm2335 = vcmp.gt.s32.totalorder %v2320, 14
          %vm2336 = vcmp.gt.s32.totalorder %v2320, 15
          %vm2337 = vmand %vm2304, %vm2321
          %vm2338 = vmand %vm2305, %vm2322
          %vm2339 = vmand %vm2306, %vm2323
          %vm2340 = vmand %vm2307, %vm2324
          %vm2341 = vmand %vm2308, %vm2325
          %vm2342 = vmand %vm2309, %vm2326
          %vm2343 = vmand %vm2310, %vm2327
          %vm2344 = vmand %vm2311, %vm2328
          %vm2345 = vmand %vm2312, %vm2329
          %vm2346 = vmand %vm2313, %vm2330
          %vm2347 = vmand %vm2314, %vm2331
          %vm2348 = vmand %vm2315, %vm2332
          %vm2349 = vmand %vm2316, %vm2333
          %vm2350 = vmand %vm2317, %vm2334
          %vm2351 = vmand %vm2318, %vm2335
          %vm2352 = vmand %vm2319, %vm2336
          %v2353 = vsel %vm2337, 1, 0
          %v2354 = vsel %vm2338, 1, 0
          %v2355 = vsel %vm2339, 1, 0
          %v2356 = vsel %vm2340, 1, 0
          %v2357 = vsel %vm2341, 1, 0
          %v2358 = vsel %vm2342, 1, 0
          %v2359 = vsel %vm2343, 1, 0
          %v2360 = vsel %vm2344, 1, 0
          %v2361 = vsel %vm2345, 1, 0
          %v2362 = vsel %vm2346, 1, 0
          %v2363 = vsel %vm2347, 1, 0
          %v2364 = vsel %vm2348, 1, 0
          %v2365 = vsel %vm2349, 1, 0
          %v2366 = vsel %vm2350, 1, 0
          %v2367 = vsel %vm2351, 1, 0
          %v2368 = vsel %vm2352, 1, 0
          %vm2369 = vcmp.eq.s32.totalorder %v2353, 1
          %vm2370 = vcmp.eq.s32.totalorder %v2354, 1
          %vm2371 = vcmp.eq.s32.totalorder %v2355, 1
          %vm2372 = vcmp.eq.s32.totalorder %v2356, 1
          %vm2373 = vcmp.eq.s32.totalorder %v2357, 1
          %vm2374 = vcmp.eq.s32.totalorder %v2358, 1
          %vm2375 = vcmp.eq.s32.totalorder %v2359, 1
          %vm2376 = vcmp.eq.s32.totalorder %v2360, 1
          %vm2377 = vcmp.eq.s32.totalorder %v2361, 1
          %vm2378 = vcmp.eq.s32.totalorder %v2362, 1
          %vm2379 = vcmp.eq.s32.totalorder %v2363, 1
          %vm2380 = vcmp.eq.s32.totalorder %v2364, 1
          %vm2381 = vcmp.eq.s32.totalorder %v2365, 1
          %vm2382 = vcmp.eq.s32.totalorder %v2366, 1
          %vm2383 = vcmp.eq.s32.totalorder %v2367, 1
          %vm2384 = vcmp.eq.s32.totalorder %v2368, 1
          %v2385 = vsel %vm2369, %v1498, -3.4028235e+38
          %v2386 = vsel %vm2370, %v1499, -3.4028235e+38
          %v2387 = vsel %vm2371, %v1500, -3.4028235e+38
          %v2388 = vsel %vm2372, %v1501, -3.4028235e+38
          %v2389 = vsel %vm2373, %v1502, -3.4028235e+38
          %v2390 = vsel %vm2374, %v1503, -3.4028235e+38
          %v2391 = vsel %vm2375, %v1504, -3.4028235e+38
          %v2392 = vsel %vm2376, %v1505, -3.4028235e+38
          %v2393 = vsel %vm2377, %v1506, -3.4028235e+38
          %v2394 = vsel %vm2378, %v1507, -3.4028235e+38
          %v2395 = vsel %vm2379, %v1508, -3.4028235e+38
          %v2396 = vsel %vm2380, %v1509, -3.4028235e+38
          %v2397 = vsel %vm2381, %v1510, -3.4028235e+38
          %v2398 = vsel %vm2382, %v1511, -3.4028235e+38
          %v2399 = vsel %vm2383, %v1512, -3.4028235e+38
          %v2400 = vsel %vm2384, %v1513, -3.4028235e+38
          %v2401 = vsel %vm1614, %v2385, -inf
          %v2402 = vsel %vm1614, %v2386, -inf
          %v2403 = vsel %vm1614, %v2387, -inf
          %v2404 = vsel %vm1614, %v2388, -inf
          %v2405 = vsel %vm1614, %v2389, -inf
          %v2406 = vmax.f32 %v2401, %v2405
          %v2407 = vsel %vm1614, %v2390, -inf
          %v2408 = vmax.f32 %v2402, %v2407
          %v2409 = vsel %vm1614, %v2391, -inf
          %v2410 = vmax.f32 %v2403, %v2409
          %v2411 = vsel %vm1614, %v2392, -inf
          %v2412 = vmax.f32 %v2404, %v2411
          %v2413 = vsel %vm1614, %v2393, -inf
          %v2414 = vmax.f32 %v2406, %v2413
          %v2415 = vsel %vm1614, %v2394, -inf
          %v2416 = vmax.f32 %v2408, %v2415
          %v2417 = vsel %vm1614, %v2395, -inf
          %v2418 = vmax.f32 %v2410, %v2417
          %v2419 = vsel %vm1614, %v2396, -inf
          %v2420 = vmax.f32 %v2412, %v2419
          %v2421 = vsel %vm1614, %v2397, -inf
          %v2422 = vmax.f32 %v2414, %v2421
          %v2423 = vsel %vm1614, %v2398, -inf
          %v2424 = vmax.f32 %v2416, %v2423
          %v2425 = vsel %vm1614, %v2399, -inf
          %v2426 = vmax.f32 %v2418, %v2425
          %v2427 = vsel %vm1614, %v2400, -inf
          %v2428 = vmax.f32 %v2420, %v2427
          %v2429 = vmax.f32 %v2422, %v2424
          %v2430 = vmax.f32 %v2426, %v2428
          %v2431 = vmax.f32 %v2429, %v2430
          %p2432 = scmp.gt.s32.totalorder %s1515, %s1514
          %s2433 = scalar_select %p2432, 1, 0
          %v2434 = vstv %s2433
          %vm2435 = vcmp.eq.s32.totalorder %v2434, 1
          %vm2436 = vcmp.eq.s32.totalorder %v298, 0
          %p2437 = scmp.gt.s32.totalorder %s301, %s300
          %s2438 = scalar_select %p2437, 1, 0
          %v2439 = vstv %s2438
          %vm2440 = vcmp.eq.s32.totalorder %v2439, 1
          %vm2441 = vmand %vm2436, %vm2440
          %p2442 = scmp.gt.s32.totalorder %s1647, %s1646
          %s2443 = scalar_select %p2442, 1, 0
          %v2444 = vstv %s2443
          %vm2445 = vcmp.eq.s32.totalorder %v2444, 1
          %vm2446 = vcmp.eq.s32.totalorder %v298, 1
          %p2447 = scmp.gt.s32.totalorder %s460, %s459
          %s2448 = scalar_select %p2447, 1, 0
          %v2449 = vstv %s2448
          %vm2450 = vcmp.eq.s32.totalorder %v2449, 1
          %vm2451 = vmand %vm2446, %vm2450
          %vm2452 = vmor %vm2441, %vm2451
          %p2453 = scmp.gt.s32.totalorder %s1778, %s1777
          %s2454 = scalar_select %p2453, 1, 0
          %v2455 = vstv %s2454
          %vm2456 = vcmp.eq.s32.totalorder %v2455, 1
          %vm2457 = vcmp.eq.s32.totalorder %v298, 2
          %p2458 = scmp.gt.s32.totalorder %s619, %s618
          %s2459 = scalar_select %p2458, 1, 0
          %v2460 = vstv %s2459
          %vm2461 = vcmp.eq.s32.totalorder %v2460, 1
          %vm2462 = vmand %vm2457, %vm2461
          %vm2463 = vmor %vm2452, %vm2462
          %p2464 = scmp.gt.s32.totalorder %s1909, %s1908
          %s2465 = scalar_select %p2464, 1, 0
          %v2466 = vstv %s2465
          %vm2467 = vcmp.eq.s32.totalorder %v2466, 1
          %vm2468 = vcmp.eq.s32.totalorder %v298, 3
          %p2469 = scmp.gt.s32.totalorder %s778, %s777
          %s2470 = scalar_select %p2469, 1, 0
          %v2471 = vstv %s2470
          %vm2472 = vcmp.eq.s32.totalorder %v2471, 1
          %vm2473 = vmand %vm2468, %vm2472
          %vm2474 = vmor %vm2463, %vm2473
          %p2475 = scmp.gt.s32.totalorder %s2040, %s2039
          %s2476 = scalar_select %p2475, 1, 0
          %v2477 = vstv %s2476
          %vm2478 = vcmp.eq.s32.totalorder %v2477, 1
          %vm2479 = vcmp.eq.s32.totalorder %v298, 4
          %p2480 = scmp.gt.s32.totalorder %s937, %s936
          %s2481 = scalar_select %p2480, 1, 0
          %v2482 = vstv %s2481
          %vm2483 = vcmp.eq.s32.totalorder %v2482, 1
          %vm2484 = vmand %vm2479, %vm2483
          %vm2485 = vmor %vm2474, %vm2484
          %p2486 = scmp.gt.s32.totalorder %s2171, %s2170
          %s2487 = scalar_select %p2486, 1, 0
          %v2488 = vstv %s2487
          %vm2489 = vcmp.eq.s32.totalorder %v2488, 1
          %vm2490 = vcmp.eq.s32.totalorder %v298, 5
          %p2491 = scmp.gt.s32.totalorder %s1096, %s1095
          %s2492 = scalar_select %p2491, 1, 0
          %v2493 = vstv %s2492
          %vm2494 = vcmp.eq.s32.totalorder %v2493, 1
          %vm2495 = vmand %vm2490, %vm2494
          %vm2496 = vmor %vm2485, %vm2495
          %p2497 = scmp.gt.s32.totalorder %s2302, %s2301
          %s2498 = scalar_select %p2497, 1, 0
          %v2499 = vstv %s2498
          %vm2500 = vcmp.eq.s32.totalorder %v2499, 1
          %vm2501 = vcmp.eq.s32.totalorder %v298, 6
          %p2502 = scmp.gt.s32.totalorder %s1255, %s1254
          %s2503 = scalar_select %p2502, 1, 0
          %v2504 = vstv %s2503
          %vm2505 = vcmp.eq.s32.totalorder %v2504, 1
          %vm2506 = vmand %vm2501, %vm2505
          %vm2507 = vmor %vm2496, %vm2506
          %v2508 = vsel %vm2435, 1, 0
          %v2509 = vsel %vm2445, 1, 0
          %v2510 = vsel %vm2456, 1, 0
          %v2511 = vsel %vm2467, 1, 0
          %v2512 = vsel %vm2478, 1, 0
          %v2513 = vsel %vm2489, 1, 0
          %v2514 = vsel %vm2500, 1, 0
          %vm2515 = vcmp.eq.s32.totalorder %v2508, 1
          %vm2516 = vcmp.eq.s32.totalorder %v2509, 1
          %vm2517 = vcmp.eq.s32.totalorder %v2510, 1
          %vm2518 = vcmp.eq.s32.totalorder %v2511, 1
          %vm2519 = vcmp.eq.s32.totalorder %v2512, 1
          %vm2520 = vcmp.eq.s32.totalorder %v2513, 1
          %vm2521 = vcmp.eq.s32.totalorder %v2514, 1
          %v2522 = vsel %vm2507, 1, 0
          %vm2523 = vcmp.eq.s32.totalorder %v2522, 1
          %vm2524 = vmand %vm2515, %vm2523
          %vm2525 = vmand %vm2516, %vm2523
          %vm2526 = vmand %vm2517, %vm2523
          %vm2527 = vmand %vm2518, %vm2523
          %vm2528 = vmand %vm2519, %vm2523
          %vm2529 = vmand %vm2520, %vm2523
          %vm2530 = vmand %vm2521, %vm2523
          %v2531 = vsel %vm2524, 1, 0
          %v2532 = vsel %vm2525, 1, 0
          %v2533 = vsel %vm2526, 1, 0
          %v2534 = vsel %vm2527, 1, 0
          %v2535 = vsel %vm2528, 1, 0
          %v2536 = vsel %vm2529, 1, 0
          %v2537 = vsel %vm2530, 1, 0
          %vm2538 = vcmp.eq.s32.totalorder %v2531, 1
          %vm2539 = vcmp.eq.s32.totalorder %v2532, 1
          %vm2540 = vcmp.eq.s32.totalorder %v2533, 1
          %vm2541 = vcmp.eq.s32.totalorder %v2534, 1
          %vm2542 = vcmp.eq.s32.totalorder %v2535, 1
          %vm2543 = vcmp.eq.s32.totalorder %v2536, 1
          %vm2544 = vcmp.eq.s32.totalorder %v2537, 1
          %v2545 = vsel %vm2538, %v1645, 0.0
          %v2546 = vsel %vm2539, %v1776, 0.0
          %v2547 = vsel %vm2540, %v1907, 0.0
          %v2548 = vsel %vm2541, %v2038, 0.0
          %v2549 = vsel %vm2542, %v2169, 0.0
          %v2550 = vsel %vm2543, %v2300, 0.0
          %v2551 = vsel %vm2544, %v2431, 0.0
          %v2552 = vpack.c.bf16 %v2545, %v2545
          %v2553 = vpack.c.bf16 %v2546, %v2546
          %v2554 = vpack.c.bf16 %v2547, %v2547
          %v2555 = vpack.c.bf16 %v2548, %v2548
          %v2556 = vpack.c.bf16 %v2549, %v2549
          %v2557 = vpack.c.bf16 %v2550, %v2550
          %v2558 = vpack.c.bf16 %v2551, %v2551
          %vm2559 = vcmask 1043456
          %vm2560 = vsmask.f32 3328
          %vm2561 = vmand %vm2559, %vm2560
          %v2562 = vld [vmem:[%s198] sm:$0xf]
          %v2563 = vsel %vm2561, %v2552, %v2562
          %2564 = vst [vmem:[%s198] sm:$0xf] %v2563
          %v2565 = vld [vmem:[%s198 + $0x4] sm:$0xf]
          %v2566 = vsel %vm2561, %v2553, %v2565
          %2567 = vst [vmem:[%s198 + $0x4] sm:$0xf] %v2566
          %v2568 = vld [vmem:[%s198 + $0x8] sm:$0xf]
          %v2569 = vsel %vm2561, %v2554, %v2568
          %2570 = vst [vmem:[%s198 + $0x8] sm:$0xf] %v2569
          %v2571 = vld [vmem:[%s198 + $0xc] sm:$0xf]
          %v2572 = vsel %vm2561, %v2555, %v2571
          %2573 = vst [vmem:[%s198 + $0xc] sm:$0xf] %v2572
          %v2574 = vld [vmem:[%s198 + $0x10] sm:$0xf]
          %v2575 = vsel %vm2561, %v2556, %v2574
          %2576 = vst [vmem:[%s198 + $0x10] sm:$0xf] %v2575
          %v2577 = vld [vmem:[%s198 + $0x14] sm:$0xf]
          %v2578 = vsel %vm2561, %v2557, %v2577
          %2579 = vst [vmem:[%s198 + $0x14] sm:$0xf] %v2578
          %v2580 = vld [vmem:[%s198 + $0x18] sm:$0xf]
          %v2581 = vsel %vm2561, %v2558, %v2580
          %2582 = vst [vmem:[%s198 + $0x18] sm:$0xf] %v2581
        $region36: #{tpu_custom_call.1} parent=23 // pred_fallthru
          _
        %p2583 = scmp.lt.s32.totalorder %s53, 127
        %s2584 = scalar_select %p2583, %s53, 127
        %p2585 = scmp.lt.s32.totalorder %s52, 0
        %s2586 = scalar_select %p2585, %s52, 0
        %s2587 = smul.addr %s2584, 7
        %s2588 = sadd.s32 %s2586, %s2587
        %s2589 = smul.addr %s2588, 4
        %s2590 = scalar_lea.vmem %s6, %s2589
        // Predicated region
        $region37: #{tpu_custom_call.1} parent=23 // pred_check
          %p2591 = pneg %p110
        $region38: #{tpu_custom_call.1} parent=23 // pred_check_branch
          %2593 = sbr.rel (%p2591) target = $region40
        $region39: #{tpu_custom_call.1} parent=23 // pred_region
          _
        $region40: #{tpu_custom_call.1} parent=23 // pred_fallthru
          _
      $region24: #{tpu_custom_call.1} parent=5 // pred_fallthru
        _
      %p2594 = scmp.le.s32.totalorder 2, %s43
      // Predicated region
      $region41: #{tpu_custom_call.1} parent=5 // pred_check
        %p2595 = pneg %p2594
      $region42: #{tpu_custom_call.1} parent=5 // pred_check_branch
        %2597 = sbr.rel (%p2595) target = $region44
      $region43: #{tpu_custom_call.1} parent=5 // pred_region
        %s2598 = ssub.s32 %s43, 2
        // Predicated region
        $region45: #{tpu_custom_call.1} parent=43 // pred_check
          %p2599 = pneg %p116
        $region46: #{tpu_custom_call.1} parent=43 // pred_check_branch
          %2601 = sbr.rel (%p2599) target = $region48
        $region47: #{tpu_custom_call.1} parent=43 // pred_region
          %p2602 = scmp.lt.s32.totalorder %s55, 127
          %s2603 = scalar_select %p2602, %s55, 127
          %p2604 = scmp.lt.s32.totalorder %s54, 0
          %s2605 = scalar_select %p2604, %s54, 0
          %s2606 = smul.addr %s2603, 7
          %s2607 = sadd.s32 %s2605, %s2606
          %s2608 = smul.addr %s2607, 4
          %s2609 = scalar_lea.vmem %s6, %s2608
        $region48: #{tpu_custom_call.1} parent=43 // pred_fallthru
          _
      $region44: #{tpu_custom_call.1} parent=5 // pred_fallthru
        _
    $region6: #{tpu_custom_call.1} parent=1 // loop_footer
      %s47 = sadd.s32 1, %s43
    $region7: #{tpu_custom_call.1} parent=1 // loop_footer_branch
      %42 = sbr.rel target = $region3
    $region8: #{tpu_custom_call.1} parent=1 // loop_exit
      _
    %2610 = vsyncpa [#allocation9], 1
    %s2611 = scalar_lea.sflag [#allocation9], 1
    %2612 = vsyncpa %s2611, 1

</llo_original>
